<compile_context>
chip_gen: v6e
topology: v6e:2x2x1
jax: 0.10.0
libtpu: 0.0.40
codegen_flags: <defaults>
</compile_context>

<pallas_src>
import functools

import numpy as np
import jax
import jax.numpy as jnp
from jax import lax
from jax.experimental import pallas as pl
from jax.experimental.pallas import tpu as pltpu


def _resblock_fused_kernel(x_ref, w1_ref, b1_ref, w2_ref, b2_ref, ws_ref, bs_ref,
                           phw_ref, o_ref, cols_ref, z_ref, *,
                           H, W, Cin, L1, L2, D3, mm_dtype):
    """One batch element per grid step.

    x_ref    : (1, Cin, L)          flattened input volume (L = D*H*W)
    w1_ref   : (Cin, 27*Cin)        conv1 weights, rows=out chan, cols=(tap, in chan)
    w2_ref   : (Cout, 27*Cin)       conv2 weights
    ws_ref   : (Cout, Cin)          1x1 skip weights
    b*_ref   : (C, 1)               biases
    phw_ref  : (H*W, H3*W3)         per-plane 2x2 mean decimation matrix (x 0.125)
    o_ref    : (1, Cout, L3)        pooled output, L3 = D3*H3*W3
    cols_ref : (27*Cin, L1) f32     VMEM scratch for im2col
    z_ref    : (Cout, (D-4)*H*W)    VMEM scratch for the residual sum (depth padded)
    """
    HW = H * W
    H3 = (H - 4) // 2
    W3 = (W - 4) // 2
    H3W3 = H3 * W3
    offs = [kd * HW + kh * W + kw
            for kd in range(3) for kh in range(3) for kw in range(3)]
    OFF = 2 * HW + 2 * W + 2          # flat offset of narrow_by(x, 2)

    x = x_ref[0]                                            # (Cin, L) f32

    # ---- conv1: Conv3d(Cin, Cin, 3) valid  ->  im2col + one MXU matmul ------
    for t in range(27):
        cols_ref[t * Cin:(t + 1) * Cin, :] = x[:, offs[t]:offs[t] + L1]
    y1 = jnp.dot(w1_ref[...].astype(mm_dtype),
                 cols_ref[...].astype(mm_dtype),
                 preferred_element_type=jnp.float32) + b1_ref[...]
    y1 = jnp.maximum(y1, 0.2 * y1)                          # LeakyReLU(0.2), (Cin, L1)

    # ---- conv2: Conv3d(Cin, Cout, 3) valid --------------------------------
    for t in range(27):
        cols_ref[t * Cin:(t + 1) * Cin, 0:L2] = y1[:, offs[t]:offs[t] + L2]
    y2 = jnp.dot(w2_ref[...].astype(mm_dtype),
                 cols_ref[:, 0:L2].astype(mm_dtype),
                 preferred_element_type=jnp.float32) + b2_ref[...]
    y2 = jnp.maximum(y2, 0.2 * y2)                          # (Cout, L2)

    # ---- skip: Conv3d(Cin, Cout, 1), already aligned to narrow_by(x, 2) ----
    s = jnp.dot(ws_ref[...].astype(mm_dtype),
                x[:, OFF:OFF + L2].astype(mm_dtype),
                preferred_element_type=jnp.float32) + bs_ref[...]

    # ---- residual sum, staged in a depth-padded VMEM scratch ---------------
    Cout = z_ref.shape[0]
    Lzp = z_ref.shape[1]                                    # (D-4)*HW
    z_ref[:, 0:L2] = y2 + s
    # Pad the ragged tail of the last depth slab so pooled reads stay finite.
    z_ref[:, L2:Lzp] = jnp.zeros((Cout, Lzp - L2), jnp.float32)

    # ---- fused downsample: 2x2x2 mean pool == trilinear x0.5 (even sizes) --
    # Depth pairs are summed on the VPU (two contiguous HW slabs); the (h, w)
    # plane decimation is one small matmul per output depth against phw
    # (4 nonzeros of 0.125 per column).  Invalid (padding) lanes inside each
    # slab are finite and only hit zero rows of phw.
    phw = phw_ref[...]                                      # (HW, H3*W3)
    for d3 in range(D3):
        a = 2 * d3 * HW
        slab = z_ref[:, a:a + HW] + z_ref[:, a + HW:a + 2 * HW]   # (Cout, HW)
        o_ref[0, :, d3 * H3W3:(d3 + 1) * H3W3] = jnp.dot(
            slab, phw, preferred_element_type=jnp.float32)


def _plane_pool_matrix(H, W):
    """(H*W, H3*W3) matrix: for a depth-pair-summed plane (flat h*W+w layout),
    right-multiplying gives the 2x2x2 mean pool of the valid (H-4, W-4) region."""
    H3, W3 = (H - 4) // 2, (W - 4) // 2
    P = np.zeros((H * W, H3 * W3), np.float32)
    for h3 in range(H3):
        for w3 in range(W3):
            q = h3 * W3 + w3
            for b in range(2):
                for c in range(2):
                    P[(2 * h3 + b) * W + (2 * w3 + c), q] = 0.125
    return jnp.asarray(P)


def resblock_forward(x_ncdhw, params, *, mm_dtype=jnp.float32):
    """Pallas ResBlock forward. x_ncdhw: (N, Cin, D, H, W) f32 (PyTorch layout).

    mm_dtype: operand dtype fed to the MXU for the convolutions (f32, or bf16 for
              full-rate v5e/v6e MXU; accumulation is always f32).
    """
    N, Cin, D, H, W = x_ncdhw.shape
    Cout = params["w2"].shape[0]

    if min(D, H, W) < 6:
        raise ValueError("spatial size must be >= 6")
    if (D - 4) % 2 or (H - 4) % 2 or (W - 4) % 2:
        # trilinear(scale=0.5) == 2x2x2 mean only holds for even cropped sizes.
        raise ValueError("cropped spatial sizes (D-4, H-4, W-4) must be even")

    HW = H * W
    L = D * HW
    OFF = 2 * HW + 2 * W + 2
    L1 = L - OFF            # lanes carrying all valid conv1 outputs
    L2 = L - 2 * OFF        # lanes carrying all valid conv2 / skip / z outputs
    D3, H3, W3 = (D - 4) // 2, (H - 4) // 2, (W - 4) // 2
    L3 = D3 * H3 * W3
    Lzp = (D - 4) * HW      # depth-padded z scratch length

    # ---- layout / parameter plumbing (plain JAX glue, no transposes of x) ----
    x = x_ncdhw.reshape(N, Cin, L)
    w1m = jnp.transpose(params["w1"], (0, 2, 3, 4, 1)).reshape(Cin, 27 * Cin)
    w2m = jnp.transpose(params["w2"], (0, 2, 3, 4, 1)).reshape(Cout, 27 * Cin)
    wsm = params["ws"][:, :, 0, 0, 0]                       # (Cout, Cin)
    b1 = params["b1"].reshape(Cin, 1)
    b2 = params["b2"].reshape(Cout, 1)
    bs = params["bs"].reshape(Cout, 1)
    Phw = _plane_pool_matrix(H, W)                          # (HW, H3*W3)

    kern = functools.partial(_resblock_fused_kernel, H=H, W=W, Cin=Cin,
                             L1=L1, L2=L2, D3=D3, mm_dtype=mm_dtype)

    out_flat = pl.pallas_call(
        kern,
        out_shape=jax.ShapeDtypeStruct((N, Cout, L3), jnp.float32),
        grid_spec=pltpu.PrefetchScalarGridSpec(
            num_scalar_prefetch=0,
            grid=(N,),
            in_specs=[
                pl.BlockSpec((1, Cin, L), lambda n: (n, 0, 0)),        # x
                pl.BlockSpec((Cin, 27 * Cin), lambda n: (0, 0)),       # w1m
                pl.BlockSpec((Cin, 1), lambda n: (0, 0)),              # b1
                pl.BlockSpec((Cout, 27 * Cin), lambda n: (0, 0)),      # w2m
                pl.BlockSpec((Cout, 1), lambda n: (0, 0)),             # b2
                pl.BlockSpec((Cout, Cin), lambda n: (0, 0)),           # wsm
                pl.BlockSpec((Cout, 1), lambda n: (0, 0)),             # bs
                pl.BlockSpec((HW, H3 * W3), lambda n: (0, 0)),         # plane pool mat
            ],
            out_specs=pl.BlockSpec((1, Cout, L3), lambda n: (n, 0, 0)),
            scratch_shapes=[pltpu.VMEM((27 * Cin, L1), jnp.float32),   # im2col
                            pltpu.VMEM((Cout, Lzp), jnp.float32)],     # residual z
        ),
        compiler_params=pltpu.CompilerParams(
            dimension_semantics=("parallel",),
            vmem_limit_bytes=64 * 1024 * 1024,
        ),
    )(x, w1m, b1, w2m, b2, wsm, bs, Phw)

    return out_flat.reshape(N, Cout, D3, H3, W3)            # NCDHW, no transpose


def resblock_ref(x, params):
    """Pure-JAX reference (mirrors the PyTorch module) for validation."""
    def conv(v, w, b):
        y = lax.conv_general_dilated(
            v, w, window_strides=(1, 1, 1), padding="VALID",
            dimension_numbers=("NCDHW", "OIDHW", "NCDHW"),
            precision=lax.Precision.HIGHEST)
        return y + b[None, :, None, None, None]

    def lrelu(v):
        return jnp.where(v > 0, v, 0.2 * v)

    y = lrelu(conv(x, params["w1"], params["b1"]))
    y = lrelu(conv(y, params["w2"], params["b2"]))
    s = conv(x, params["ws"], params["bs"])[:, :, 2:-2, 2:-2, 2:-2]   # narrow_by(x, 2)
    z = s + y
    N, C, D2, H2, W2 = z.shape
    # trilinear downsample by 0.5 (align_corners=False) == 2x2x2 mean on even sizes
    return z.reshape(N, C, D2 // 2, 2, H2 // 2, 2, W2 // 2, 2).mean(axis=(3, 5, 7))


if __name__ == "__main__":
    N, Cin, Cout, S = 2, 4, 8, 12          # next_size = (S - 4) // 2 = 4
    key = jax.random.PRNGKey(0)
    ks = jax.random.split(key, 7)
    params = {
        "w1": 0.1 * jax.random.normal(ks[0], (Cin, Cin, 3, 3, 3), jnp.float32),
        "b1": 0.1 * jax.random.normal(ks[1], (Cin,), jnp.float32),
        "w2": 0.1 * jax.random.normal(ks[2], (Cout, Cin, 3, 3, 3), jnp.float32),
        "b2": 0.1 * jax.random.normal(ks[3], (Cout,), jnp.float32),
        "ws": 0.1 * jax.random.normal(ks[4], (Cout, Cin, 1, 1, 1), jnp.float32),
        "bs": 0.1 * jax.random.normal(ks[5], (Cout,), jnp.float32),
    }
    x = jax.random.normal(ks[6], (N, Cin, S, S, S), jnp.float32)

    ref = jax.block_until_ready(resblock_ref(x, params))

    # f32 MXU path (typically agrees to ~1e-5; tolerance kept loose vs HW matmul modes)
    out = jax.block_until_ready(resblock_forward(x, params))
    assert out.shape == (N, Cout, (S - 4) // 2, (S - 4) // 2, (S - 4) // 2), out.shape
    err = float(jnp.max(jnp.abs(out - ref)))
    assert err < 2e-2, f"f32 path max abs error {err}"

    # bf16-operand MXU path (v5e/v6e full-rate), f32 accumulation
    out_bf16 = jax.block_until_ready(
        resblock_forward(x, params, mm_dtype=jnp.bfloat16))
    err_bf16 = float(jnp.max(jnp.abs(out_bf16 - ref)))
    assert err_bf16 < 6e-2, f"bf16 path max abs error {err_bf16}"

    print("KERNEL_OK")
</pallas_src>

<mosaic_0001>
module attributes {stable_mosaic.version = 11 : i64} {
  func.func @_resblock_fused_kernel(%arg0: i32, %arg1: memref<1x4x1728xf32, #tpu.memory_space<vmem>>, %arg2: memref<4x108xf32, #tpu.memory_space<vmem>>, %arg3: memref<4x1xf32, #tpu.memory_space<vmem>>, %arg4: memref<8x108xf32, #tpu.memory_space<vmem>>, %arg5: memref<8x1xf32, #tpu.memory_space<vmem>>, %arg6: memref<8x4xf32, #tpu.memory_space<vmem>>, %arg7: memref<8x1xf32, #tpu.memory_space<vmem>>, %arg8: memref<144x16xf32, #tpu.memory_space<vmem>>, %arg9: memref<1x8x64xf32, #tpu.memory_space<vmem>>, %arg10: memref<108x1414xf32, #tpu.memory_space<vmem>>, %arg11: memref<8x1152xf32, #tpu.memory_space<vmem>>) attributes {dimension_semantics = [#tpu.dimension_semantics<parallel>], iteration_bounds = array<i64: 2>, scalar_prefetch = 0 : i64, scratch_operands = 2 : i64, tpu.core_type = #tpu.core_type<tc>, window_params = [{transform_indices = @transform_0, window_bounds = array<i64: 1, 4, 1728>}, {pipeline_mode = #tpu.pipeline_mode<synchronous>, transform_indices = @transform_1, window_bounds = array<i64: 4, 108>}, {pipeline_mode = #tpu.pipeline_mode<synchronous>, transform_indices = @transform_2, window_bounds = array<i64: 4, 1>}, {pipeline_mode = #tpu.pipeline_mode<synchronous>, transform_indices = @transform_3, window_bounds = array<i64: 8, 108>}, {pipeline_mode = #tpu.pipeline_mode<synchronous>, transform_indices = @transform_4, window_bounds = array<i64: 8, 1>}, {pipeline_mode = #tpu.pipeline_mode<synchronous>, transform_indices = @transform_5, window_bounds = array<i64: 8, 4>}, {pipeline_mode = #tpu.pipeline_mode<synchronous>, transform_indices = @transform_6, window_bounds = array<i64: 8, 1>}, {pipeline_mode = #tpu.pipeline_mode<synchronous>, transform_indices = @transform_7, window_bounds = array<i64: 144, 16>}, {transform_indices = @transform_8, window_bounds = array<i64: 1, 8, 64>}]} {
    %c0 = arith.constant 0 : index
    %c0_0 = arith.constant 0 : index
    %c0_1 = arith.constant 0 : index
    %0 = vector.load %arg1[%c0, %c0_0, %c0_1] : memref<1x4x1728xf32, #tpu.memory_space<vmem>>, vector<1x4x1728xf32>
    %1 = vector.shape_cast %0 : vector<1x4x1728xf32> to vector<4x1728xf32>
    %2 = vector.extract_strided_slice %1 {offsets = [0, 0], sizes = [4, 1414], strides = [1, 1]} : vector<4x1728xf32> to vector<4x1414xf32>
    %c0_2 = arith.constant 0 : index
    %c0_3 = arith.constant 0 : index
    %3 = vector.load %arg10[%c0_2, %c0_3] : memref<108x1414xf32, #tpu.memory_space<vmem>>, vector<4x1414xf32>
    tpu.vector_store %arg10[%c0_2, %c0_3], %2 {strides = array<i32>} : memref<108x1414xf32, #tpu.memory_space<vmem>>, vector<4x1414xf32>,
    %4 = vector.extract_strided_slice %1 {offsets = [0, 1], sizes = [4, 1414], strides = [1, 1]} : vector<4x1728xf32> to vector<4x1414xf32>
    %c4 = arith.constant 4 : index
    %c0_4 = arith.constant 0 : index
    %5 = vector.load %arg10[%c4, %c0_4] : memref<108x1414xf32, #tpu.memory_space<vmem>>, vector<4x1414xf32>
    tpu.vector_store %arg10[%c4, %c0_4], %4 {strides = array<i32>} : memref<108x1414xf32, #tpu.memory_space<vmem>>, vector<4x1414xf32>,
    %6 = vector.extract_strided_slice %1 {offsets = [0, 2], sizes = [4, 1414], strides = [1, 1]} : vector<4x1728xf32> to vector<4x1414xf32>
    %c8 = arith.constant 8 : index
    %c0_5 = arith.constant 0 : index
    %7 = vector.load %arg10[%c8, %c0_5] : memref<108x1414xf32, #tpu.memory_space<vmem>>, vector<4x1414xf32>
    tpu.vector_store %arg10[%c8, %c0_5], %6 {strides = array<i32>} : memref<108x1414xf32, #tpu.memory_space<vmem>>, vector<4x1414xf32>,
    %8 = vector.extract_strided_slice %1 {offsets = [0, 12], sizes = [4, 1414], strides = [1, 1]} : vector<4x1728xf32> to vector<4x1414xf32>
    %c12 = arith.constant 12 : index
    %c0_6 = arith.constant 0 : index
    %9 = vector.load %arg10[%c12, %c0_6] : memref<108x1414xf32, #tpu.memory_space<vmem>>, vector<4x1414xf32>
    tpu.vector_store %arg10[%c12, %c0_6], %8 {strides = array<i32>} : memref<108x1414xf32, #tpu.memory_space<vmem>>, vector<4x1414xf32>,
    %10 = vector.extract_strided_slice %1 {offsets = [0, 13], sizes = [4, 1414], strides = [1, 1]} : vector<4x1728xf32> to vector<4x1414xf32>
    %c16 = arith.constant 16 : index
    %c0_7 = arith.constant 0 : index
    %11 = vector.load %arg10[%c16, %c0_7] : memref<108x1414xf32, #tpu.memory_space<vmem>>, vector<4x1414xf32>
    tpu.vector_store %arg10[%c16, %c0_7], %10 {strides = array<i32>} : memref<108x1414xf32, #tpu.memory_space<vmem>>, vector<4x1414xf32>,
    %12 = vector.extract_strided_slice %1 {offsets = [0, 14], sizes = [4, 1414], strides = [1, 1]} : vector<4x1728xf32> to vector<4x1414xf32>
    %c20 = arith.constant 20 : index
    %c0_8 = arith.constant 0 : index
    %13 = vector.load %arg10[%c20, %c0_8] : memref<108x1414xf32, #tpu.memory_space<vmem>>, vector<4x1414xf32>
    tpu.vector_store %arg10[%c20, %c0_8], %12 {strides = array<i32>} : memref<108x1414xf32, #tpu.memory_space<vmem>>, vector<4x1414xf32>,
    %14 = vector.extract_strided_slice %1 {offsets = [0, 24], sizes = [4, 1414], strides = [1, 1]} : vector<4x1728xf32> to vector<4x1414xf32>
    %c24 = arith.constant 24 : index
    %c0_9 = arith.constant 0 : index
    %15 = vector.load %arg10[%c24, %c0_9] : memref<108x1414xf32, #tpu.memory_space<vmem>>, vector<4x1414xf32>
    tpu.vector_store %arg10[%c24, %c0_9], %14 {strides = array<i32>} : memref<108x1414xf32, #tpu.memory_space<vmem>>, vector<4x1414xf32>,
    %16 = vector.extract_strided_slice %1 {offsets = [0, 25], sizes = [4, 1414], strides = [1, 1]} : vector<4x1728xf32> to vector<4x1414xf32>
    %c28 = arith.constant 28 : index
    %c0_10 = arith.constant 0 : index
    %17 = vector.load %arg10[%c28, %c0_10] : memref<108x1414xf32, #tpu.memory_space<vmem>>, vector<4x1414xf32>
    tpu.vector_store %arg10[%c28, %c0_10], %16 {strides = array<i32>} : memref<108x1414xf32, #tpu.memory_space<vmem>>, vector<4x1414xf32>,
    %18 = vector.extract_strided_slice %1 {offsets = [0, 26], sizes = [4, 1414], strides = [1, 1]} : vector<4x1728xf32> to vector<4x1414xf32>
    %c32 = arith.constant 32 : index
    %c0_11 = arith.constant 0 : index
    %19 = vector.load %arg10[%c32, %c0_11] : memref<108x1414xf32, #tpu.memory_space<vmem>>, vector<4x1414xf32>
    tpu.vector_store %arg10[%c32, %c0_11], %18 {strides = array<i32>} : memref<108x1414xf32, #tpu.memory_space<vmem>>, vector<4x1414xf32>,
    %20 = vector.extract_strided_slice %1 {offsets = [0, 144], sizes = [4, 1414], strides = [1, 1]} : vector<4x1728xf32> to vector<4x1414xf32>
    %c36 = arith.constant 36 : index
    %c0_12 = arith.constant 0 : index
    %21 = vector.load %arg10[%c36, %c0_12] : memref<108x1414xf32, #tpu.memory_space<vmem>>, vector<4x1414xf32>
    tpu.vector_store %arg10[%c36, %c0_12], %20 {strides = array<i32>} : memref<108x1414xf32, #tpu.memory_space<vmem>>, vector<4x1414xf32>,
    %22 = vector.extract_strided_slice %1 {offsets = [0, 145], sizes = [4, 1414], strides = [1, 1]} : vector<4x1728xf32> to vector<4x1414xf32>
    %c40 = arith.constant 40 : index
    %c0_13 = arith.constant 0 : index
    %23 = vector.load %arg10[%c40, %c0_13] : memref<108x1414xf32, #tpu.memory_space<vmem>>, vector<4x1414xf32>
    tpu.vector_store %arg10[%c40, %c0_13], %22 {strides = array<i32>} : memref<108x1414xf32, #tpu.memory_space<vmem>>, vector<4x1414xf32>,
    %24 = vector.extract_strided_slice %1 {offsets = [0, 146], sizes = [4, 1414], strides = [1, 1]} : vector<4x1728xf32> to vector<4x1414xf32>
    %c44 = arith.constant 44 : index
    %c0_14 = arith.constant 0 : index
    %25 = vector.load %arg10[%c44, %c0_14] : memref<108x1414xf32, #tpu.memory_space<vmem>>, vector<4x1414xf32>
    tpu.vector_store %arg10[%c44, %c0_14], %24 {strides = array<i32>} : memref<108x1414xf32, #tpu.memory_space<vmem>>, vector<4x1414xf32>,
    %26 = vector.extract_strided_slice %1 {offsets = [0, 156], sizes = [4, 1414], strides = [1, 1]} : vector<4x1728xf32> to vector<4x1414xf32>
    %c48 = arith.constant 48 : index
    %c0_15 = arith.constant 0 : index
    %27 = vector.load %arg10[%c48, %c0_15] : memref<108x1414xf32, #tpu.memory_space<vmem>>, vector<4x1414xf32>
    tpu.vector_store %arg10[%c48, %c0_15], %26 {strides = array<i32>} : memref<108x1414xf32, #tpu.memory_space<vmem>>, vector<4x1414xf32>,
    %28 = vector.extract_strided_slice %1 {offsets = [0, 157], sizes = [4, 1414], strides = [1, 1]} : vector<4x1728xf32> to vector<4x1414xf32>
    %c52 = arith.constant 52 : index
    %c0_16 = arith.constant 0 : index
    %29 = vector.load %arg10[%c52, %c0_16] : memref<108x1414xf32, #tpu.memory_space<vmem>>, vector<4x1414xf32>
    tpu.vector_store %arg10[%c52, %c0_16], %28 {strides = array<i32>} : memref<108x1414xf32, #tpu.memory_space<vmem>>, vector<4x1414xf32>,
    %30 = vector.extract_strided_slice %1 {offsets = [0, 158], sizes = [4, 1414], strides = [1, 1]} : vector<4x1728xf32> to vector<4x1414xf32>
    %c56 = arith.constant 56 : index
    %c0_17 = arith.constant 0 : index
    %31 = vector.load %arg10[%c56, %c0_17] : memref<108x1414xf32, #tpu.memory_space<vmem>>, vector<4x1414xf32>
    tpu.vector_store %arg10[%c56, %c0_17], %30 {strides = array<i32>} : memref<108x1414xf32, #tpu.memory_space<vmem>>, vector<4x1414xf32>,
    %32 = vector.extract_strided_slice %1 {offsets = [0, 168], sizes = [4, 1414], strides = [1, 1]} : vector<4x1728xf32> to vector<4x1414xf32>
    %c60 = arith.constant 60 : index
    %c0_18 = arith.constant 0 : index
    %33 = vector.load %arg10[%c60, %c0_18] : memref<108x1414xf32, #tpu.memory_space<vmem>>, vector<4x1414xf32>
    tpu.vector_store %arg10[%c60, %c0_18], %32 {strides = array<i32>} : memref<108x1414xf32, #tpu.memory_space<vmem>>, vector<4x1414xf32>,
    %34 = vector.extract_strided_slice %1 {offsets = [0, 169], sizes = [4, 1414], strides = [1, 1]} : vector<4x1728xf32> to vector<4x1414xf32>
    %c64 = arith.constant 64 : index
    %c0_19 = arith.constant 0 : index
    %35 = vector.load %arg10[%c64, %c0_19] : memref<108x1414xf32, #tpu.memory_space<vmem>>, vector<4x1414xf32>
    tpu.vector_store %arg10[%c64, %c0_19], %34 {strides = array<i32>} : memref<108x1414xf32, #tpu.memory_space<vmem>>, vector<4x1414xf32>,
    %36 = vector.extract_strided_slice %1 {offsets = [0, 170], sizes = [4, 1414], strides = [1, 1]} : vector<4x1728xf32> to vector<4x1414xf32>
    %c68 = arith.constant 68 : index
    %c0_20 = arith.constant 0 : index
    %37 = vector.load %arg10[%c68, %c0_20] : memref<108x1414xf32, #tpu.memory_space<vmem>>, vector<4x1414xf32>
    tpu.vector_store %arg10[%c68, %c0_20], %36 {strides = array<i32>} : memref<108x1414xf32, #tpu.memory_space<vmem>>, vector<4x1414xf32>,
    %38 = vector.extract_strided_slice %1 {offsets = [0, 288], sizes = [4, 1414], strides = [1, 1]} : vector<4x1728xf32> to vector<4x1414xf32>
    %c72 = arith.constant 72 : index
    %c0_21 = arith.constant 0 : index
    %39 = vector.load %arg10[%c72, %c0_21] : memref<108x1414xf32, #tpu.memory_space<vmem>>, vector<4x1414xf32>
    tpu.vector_store %arg10[%c72, %c0_21], %38 {strides = array<i32>} : memref<108x1414xf32, #tpu.memory_space<vmem>>, vector<4x1414xf32>,
    %40 = vector.extract_strided_slice %1 {offsets = [0, 289], sizes = [4, 1414], strides = [1, 1]} : vector<4x1728xf32> to vector<4x1414xf32>
    %c76 = arith.constant 76 : index
    %c0_22 = arith.constant 0 : index
    %41 = vector.load %arg10[%c76, %c0_22] : memref<108x1414xf32, #tpu.memory_space<vmem>>, vector<4x1414xf32>
    tpu.vector_store %arg10[%c76, %c0_22], %40 {strides = array<i32>} : memref<108x1414xf32, #tpu.memory_space<vmem>>, vector<4x1414xf32>,
    %42 = vector.extract_strided_slice %1 {offsets = [0, 290], sizes = [4, 1414], strides = [1, 1]} : vector<4x1728xf32> to vector<4x1414xf32>
    %c80 = arith.constant 80 : index
    %c0_23 = arith.constant 0 : index
    %43 = vector.load %arg10[%c80, %c0_23] : memref<108x1414xf32, #tpu.memory_space<vmem>>, vector<4x1414xf32>
    tpu.vector_store %arg10[%c80, %c0_23], %42 {strides = array<i32>} : memref<108x1414xf32, #tpu.memory_space<vmem>>, vector<4x1414xf32>,
    %44 = vector.extract_strided_slice %1 {offsets = [0, 300], sizes = [4, 1414], strides = [1, 1]} : vector<4x1728xf32> to vector<4x1414xf32>
    %c84 = arith.constant 84 : index
    %c0_24 = arith.constant 0 : index
    %45 = vector.load %arg10[%c84, %c0_24] : memref<108x1414xf32, #tpu.memory_space<vmem>>, vector<4x1414xf32>
    tpu.vector_store %arg10[%c84, %c0_24], %44 {strides = array<i32>} : memref<108x1414xf32, #tpu.memory_space<vmem>>, vector<4x1414xf32>,
    %46 = vector.extract_strided_slice %1 {offsets = [0, 301], sizes = [4, 1414], strides = [1, 1]} : vector<4x1728xf32> to vector<4x1414xf32>
    %c88 = arith.constant 88 : index
    %c0_25 = arith.constant 0 : index
    %47 = vector.load %arg10[%c88, %c0_25] : memref<108x1414xf32, #tpu.memory_space<vmem>>, vector<4x1414xf32>
    tpu.vector_store %arg10[%c88, %c0_25], %46 {strides = array<i32>} : memref<108x1414xf32, #tpu.memory_space<vmem>>, vector<4x1414xf32>,
    %48 = vector.extract_strided_slice %1 {offsets = [0, 302], sizes = [4, 1414], strides = [1, 1]} : vector<4x1728xf32> to vector<4x1414xf32>
    %c92 = arith.constant 92 : index
    %c0_26 = arith.constant 0 : index
    %49 = vector.load %arg10[%c92, %c0_26] : memref<108x1414xf32, #tpu.memory_space<vmem>>, vector<4x1414xf32>
    tpu.vector_store %arg10[%c92, %c0_26], %48 {strides = array<i32>} : memref<108x1414xf32, #tpu.memory_space<vmem>>, vector<4x1414xf32>,
    %50 = vector.extract_strided_slice %1 {offsets = [0, 312], sizes = [4, 1414], strides = [1, 1]} : vector<4x1728xf32> to vector<4x1414xf32>
    %c96 = arith.constant 96 : index
    %c0_27 = arith.constant 0 : index
    %51 = vector.load %arg10[%c96, %c0_27] : memref<108x1414xf32, #tpu.memory_space<vmem>>, vector<4x1414xf32>
    tpu.vector_store %arg10[%c96, %c0_27], %50 {strides = array<i32>} : memref<108x1414xf32, #tpu.memory_space<vmem>>, vector<4x1414xf32>,
    %52 = vector.extract_strided_slice %1 {offsets = [0, 313], sizes = [4, 1414], strides = [1, 1]} : vector<4x1728xf32> to vector<4x1414xf32>
    %c100 = arith.constant 100 : index
    %c0_28 = arith.constant 0 : index
    %53 = vector.load %arg10[%c100, %c0_28] : memref<108x1414xf32, #tpu.memory_space<vmem>>, vector<4x1414xf32>
    tpu.vector_store %arg10[%c100, %c0_28], %52 {strides = array<i32>} : memref<108x1414xf32, #tpu.memory_space<vmem>>, vector<4x1414xf32>,
    %54 = vector.extract_strided_slice %1 {offsets = [0, 314], sizes = [4, 1414], strides = [1, 1]} : vector<4x1728xf32> to vector<4x1414xf32>
    %c104 = arith.constant 104 : index
    %c0_29 = arith.constant 0 : index
    %55 = vector.load %arg10[%c104, %c0_29] : memref<108x1414xf32, #tpu.memory_space<vmem>>, vector<4x1414xf32>
    tpu.vector_store %arg10[%c104, %c0_29], %54 {strides = array<i32>} : memref<108x1414xf32, #tpu.memory_space<vmem>>, vector<4x1414xf32>,
    %c0_30 = arith.constant 0 : index
    %c0_31 = arith.constant 0 : index
    %56 = vector.load %arg2[%c0_30, %c0_31] : memref<4x108xf32, #tpu.memory_space<vmem>>, vector<4x108xf32>
    %c0_32 = arith.constant 0 : index
    %c0_33 = arith.constant 0 : index
    %57 = vector.load %arg10[%c0_32, %c0_33] : memref<108x1414xf32, #tpu.memory_space<vmem>>, vector<108x1414xf32>
    %cst = arith.constant dense<0.000000e+00> : vector<4x1414xf32>
    %58 = tpu.matmul %56, %57, %cst {dimension_numbers = #tpu.dot_dimension_numbers<[1], [0], [0], [1], [0, 0, 1, 1], [], []>} : vector<4x108xf32>, vector<108x1414xf32>, vector<4x1414xf32> -> vector<4x1414xf32>
    %c0_34 = arith.constant 0 : index
    %c0_35 = arith.constant 0 : index
    %59 = vector.load %arg3[%c0_34, %c0_35] : memref<4x1xf32, #tpu.memory_space<vmem>>, vector<4x1xf32>
    %60 = vector.broadcast %59 : vector<4x1xf32> to vector<4x1414xf32>
    %61 = arith.addf %58, %60 : vector<4x1414xf32>
    %cst_36 = arith.constant 2.000000e-01 : f32
    %62 = vector.broadcast %cst_36 : f32 to vector<4x1414xf32>
    %63 = arith.mulf %62, %61 : vector<4x1414xf32>
    %64 = arith.maximumf %61, %63 : vector<4x1414xf32>
    %65 = vector.extract_strided_slice %64 {offsets = [0, 0], sizes = [4, 1100], strides = [1, 1]} : vector<4x1414xf32> to vector<4x1100xf32>
    %c0_37 = arith.constant 0 : index
    %c0_38 = arith.constant 0 : index
    %66 = vector.load %arg10[%c0_37, %c0_38] : memref<108x1414xf32, #tpu.memory_space<vmem>>, vector<4x1100xf32>
    tpu.vector_store %arg10[%c0_37, %c0_38], %65 {strides = array<i32>} : memref<108x1414xf32, #tpu.memory_space<vmem>>, vector<4x1100xf32>,
    %67 = vector.extract_strided_slice %64 {offsets = [0, 1], sizes = [4, 1100], strides = [1, 1]} : vector<4x1414xf32> to vector<4x1100xf32>
    %c4_39 = arith.constant 4 : index
    %c0_40 = arith.constant 0 : index
    %68 = vector.load %arg10[%c4_39, %c0_40] : memref<108x1414xf32, #tpu.memory_space<vmem>>, vector<4x1100xf32>
    tpu.vector_store %arg10[%c4_39, %c0_40], %67 {strides = array<i32>} : memref<108x1414xf32, #tpu.memory_space<vmem>>, vector<4x1100xf32>,
    %69 = vector.extract_strided_slice %64 {offsets = [0, 2], sizes = [4, 1100], strides = [1, 1]} : vector<4x1414xf32> to vector<4x1100xf32>
    %c8_41 = arith.constant 8 : index
    %c0_42 = arith.constant 0 : index
    %70 = vector.load %arg10[%c8_41, %c0_42] : memref<108x1414xf32, #tpu.memory_space<vmem>>, vector<4x1100xf32>
    tpu.vector_store %arg10[%c8_41, %c0_42], %69 {strides = array<i32>} : memref<108x1414xf32, #tpu.memory_space<vmem>>, vector<4x1100xf32>,
    %71 = vector.extract_strided_slice %64 {offsets = [0, 12], sizes = [4, 1100], strides = [1, 1]} : vector<4x1414xf32> to vector<4x1100xf32>
    %c12_43 = arith.constant 12 : index
    %c0_44 = arith.constant 0 : index
    %72 = vector.load %arg10[%c12_43, %c0_44] : memref<108x1414xf32, #tpu.memory_space<vmem>>, vector<4x1100xf32>
    tpu.vector_store %arg10[%c12_43, %c0_44], %71 {strides = array<i32>} : memref<108x1414xf32, #tpu.memory_space<vmem>>, vector<4x1100xf32>,
    %73 = vector.extract_strided_slice %64 {offsets = [0, 13], sizes = [4, 1100], strides = [1, 1]} : vector<4x1414xf32> to vector<4x1100xf32>
    %c16_45 = arith.constant 16 : index
    %c0_46 = arith.constant 0 : index
    %74 = vector.load %arg10[%c16_45, %c0_46] : memref<108x1414xf32, #tpu.memory_space<vmem>>, vector<4x1100xf32>
    tpu.vector_store %arg10[%c16_45, %c0_46], %73 {strides = array<i32>} : memref<108x1414xf32, #tpu.memory_space<vmem>>, vector<4x1100xf32>,
    %75 = vector.extract_strided_slice %64 {offsets = [0, 14], sizes = [4, 1100], strides = [1, 1]} : vector<4x1414xf32> to vector<4x1100xf32>
    %c20_47 = arith.constant 20 : index
    %c0_48 = arith.constant 0 : index
    %76 = vector.load %arg10[%c20_47, %c0_48] : memref<108x1414xf32, #tpu.memory_space<vmem>>, vector<4x1100xf32>
    tpu.vector_store %arg10[%c20_47, %c0_48], %75 {strides = array<i32>} : memref<108x1414xf32, #tpu.memory_space<vmem>>, vector<4x1100xf32>,
    %77 = vector.extract_strided_slice %64 {offsets = [0, 24], sizes = [4, 1100], strides = [1, 1]} : vector<4x1414xf32> to vector<4x1100xf32>
    %c24_49 = arith.constant 24 : index
    %c0_50 = arith.constant 0 : index
    %78 = vector.load %arg10[%c24_49, %c0_50] : memref<108x1414xf32, #tpu.memory_space<vmem>>, vector<4x1100xf32>
    tpu.vector_store %arg10[%c24_49, %c0_50], %77 {strides = array<i32>} : memref<108x1414xf32, #tpu.memory_space<vmem>>, vector<4x1100xf32>,
    %79 = vector.extract_strided_slice %64 {offsets = [0, 25], sizes = [4, 1100], strides = [1, 1]} : vector<4x1414xf32> to vector<4x1100xf32>
    %c28_51 = arith.constant 28 : index
    %c0_52 = arith.constant 0 : index
    %80 = vector.load %arg10[%c28_51, %c0_52] : memref<108x1414xf32, #tpu.memory_space<vmem>>, vector<4x1100xf32>
    tpu.vector_store %arg10[%c28_51, %c0_52], %79 {strides = array<i32>} : memref<108x1414xf32, #tpu.memory_space<vmem>>, vector<4x1100xf32>,
    %81 = vector.extract_strided_slice %64 {offsets = [0, 26], sizes = [4, 1100], strides = [1, 1]} : vector<4x1414xf32> to vector<4x1100xf32>
    %c32_53 = arith.constant 32 : index
    %c0_54 = arith.constant 0 : index
    %82 = vector.load %arg10[%c32_53, %c0_54] : memref<108x1414xf32, #tpu.memory_space<vmem>>, vector<4x1100xf32>
    tpu.vector_store %arg10[%c32_53, %c0_54], %81 {strides = array<i32>} : memref<108x1414xf32, #tpu.memory_space<vmem>>, vector<4x1100xf32>,
    %83 = vector.extract_strided_slice %64 {offsets = [0, 144], sizes = [4, 1100], strides = [1, 1]} : vector<4x1414xf32> to vector<4x1100xf32>
    %c36_55 = arith.constant 36 : index
    %c0_56 = arith.constant 0 : index
    %84 = vector.load %arg10[%c36_55, %c0_56] : memref<108x1414xf32, #tpu.memory_space<vmem>>, vector<4x1100xf32>
    tpu.vector_store %arg10[%c36_55, %c0_56], %83 {strides = array<i32>} : memref<108x1414xf32, #tpu.memory_space<vmem>>, vector<4x1100xf32>,
    %85 = vector.extract_strided_slice %64 {offsets = [0, 145], sizes = [4, 1100], strides = [1, 1]} : vector<4x1414xf32> to vector<4x1100xf32>
    %c40_57 = arith.constant 40 : index
    %c0_58 = arith.constant 0 : index
    %86 = vector.load %arg10[%c40_57, %c0_58] : memref<108x1414xf32, #tpu.memory_space<vmem>>, vector<4x1100xf32>
    tpu.vector_store %arg10[%c40_57, %c0_58], %85 {strides = array<i32>} : memref<108x1414xf32, #tpu.memory_space<vmem>>, vector<4x1100xf32>,
    %87 = vector.extract_strided_slice %64 {offsets = [0, 146], sizes = [4, 1100], strides = [1, 1]} : vector<4x1414xf32> to vector<4x1100xf32>
    %c44_59 = arith.constant 44 : index
    %c0_60 = arith.constant 0 : index
    %88 = vector.load %arg10[%c44_59, %c0_60] : memref<108x1414xf32, #tpu.memory_space<vmem>>, vector<4x1100xf32>
    tpu.vector_store %arg10[%c44_59, %c0_60], %87 {strides = array<i32>} : memref<108x1414xf32, #tpu.memory_space<vmem>>, vector<4x1100xf32>,
    %89 = vector.extract_strided_slice %64 {offsets = [0, 156], sizes = [4, 1100], strides = [1, 1]} : vector<4x1414xf32> to vector<4x1100xf32>
    %c48_61 = arith.constant 48 : index
    %c0_62 = arith.constant 0 : index
    %90 = vector.load %arg10[%c48_61, %c0_62] : memref<108x1414xf32, #tpu.memory_space<vmem>>, vector<4x1100xf32>
    tpu.vector_store %arg10[%c48_61, %c0_62], %89 {strides = array<i32>} : memref<108x1414xf32, #tpu.memory_space<vmem>>, vector<4x1100xf32>,
    %91 = vector.extract_strided_slice %64 {offsets = [0, 157], sizes = [4, 1100], strides = [1, 1]} : vector<4x1414xf32> to vector<4x1100xf32>
    %c52_63 = arith.constant 52 : index
    %c0_64 = arith.constant 0 : index
    %92 = vector.load %arg10[%c52_63, %c0_64] : memref<108x1414xf32, #tpu.memory_space<vmem>>, vector<4x1100xf32>
    tpu.vector_store %arg10[%c52_63, %c0_64], %91 {strides = array<i32>} : memref<108x1414xf32, #tpu.memory_space<vmem>>, vector<4x1100xf32>,
    %93 = vector.extract_strided_slice %64 {offsets = [0, 158], sizes = [4, 1100], strides = [1, 1]} : vector<4x1414xf32> to vector<4x1100xf32>
    %c56_65 = arith.constant 56 : index
    %c0_66 = arith.constant 0 : index
    %94 = vector.load %arg10[%c56_65, %c0_66] : memref<108x1414xf32, #tpu.memory_space<vmem>>, vector<4x1100xf32>
    tpu.vector_store %arg10[%c56_65, %c0_66], %93 {strides = array<i32>} : memref<108x1414xf32, #tpu.memory_space<vmem>>, vector<4x1100xf32>,
    %95 = vector.extract_strided_slice %64 {offsets = [0, 168], sizes = [4, 1100], strides = [1, 1]} : vector<4x1414xf32> to vector<4x1100xf32>
    %c60_67 = arith.constant 60 : index
    %c0_68 = arith.constant 0 : index
    %96 = vector.load %arg10[%c60_67, %c0_68] : memref<108x1414xf32, #tpu.memory_space<vmem>>, vector<4x1100xf32>
    tpu.vector_store %arg10[%c60_67, %c0_68], %95 {strides = array<i32>} : memref<108x1414xf32, #tpu.memory_space<vmem>>, vector<4x1100xf32>,
    %97 = vector.extract_strided_slice %64 {offsets = [0, 169], sizes = [4, 1100], strides = [1, 1]} : vector<4x1414xf32> to vector<4x1100xf32>
    %c64_69 = arith.constant 64 : index
    %c0_70 = arith.constant 0 : index
    %98 = vector.load %arg10[%c64_69, %c0_70] : memref<108x1414xf32, #tpu.memory_space<vmem>>, vector<4x1100xf32>
    tpu.vector_store %arg10[%c64_69, %c0_70], %97 {strides = array<i32>} : memref<108x1414xf32, #tpu.memory_space<vmem>>, vector<4x1100xf32>,
    %99 = vector.extract_strided_slice %64 {offsets = [0, 170], sizes = [4, 1100], strides = [1, 1]} : vector<4x1414xf32> to vector<4x1100xf32>
    %c68_71 = arith.constant 68 : index
    %c0_72 = arith.constant 0 : index
    %100 = vector.load %arg10[%c68_71, %c0_72] : memref<108x1414xf32, #tpu.memory_space<vmem>>, vector<4x1100xf32>
    tpu.vector_store %arg10[%c68_71, %c0_72], %99 {strides = array<i32>} : memref<108x1414xf32, #tpu.memory_space<vmem>>, vector<4x1100xf32>,
    %101 = vector.extract_strided_slice %64 {offsets = [0, 288], sizes = [4, 1100], strides = [1, 1]} : vector<4x1414xf32> to vector<4x1100xf32>
    %c72_73 = arith.constant 72 : index
    %c0_74 = arith.constant 0 : index
    %102 = vector.load %arg10[%c72_73, %c0_74] : memref<108x1414xf32, #tpu.memory_space<vmem>>, vector<4x1100xf32>
    tpu.vector_store %arg10[%c72_73, %c0_74], %101 {strides = array<i32>} : memref<108x1414xf32, #tpu.memory_space<vmem>>, vector<4x1100xf32>,
    %103 = vector.extract_strided_slice %64 {offsets = [0, 289], sizes = [4, 1100], strides = [1, 1]} : vector<4x1414xf32> to vector<4x1100xf32>
    %c76_75 = arith.constant 76 : index
    %c0_76 = arith.constant 0 : index
    %104 = vector.load %arg10[%c76_75, %c0_76] : memref<108x1414xf32, #tpu.memory_space<vmem>>, vector<4x1100xf32>
    tpu.vector_store %arg10[%c76_75, %c0_76], %103 {strides = array<i32>} : memref<108x1414xf32, #tpu.memory_space<vmem>>, vector<4x1100xf32>,
    %105 = vector.extract_strided_slice %64 {offsets = [0, 290], sizes = [4, 1100], strides = [1, 1]} : vector<4x1414xf32> to vector<4x1100xf32>
    %c80_77 = arith.constant 80 : index
    %c0_78 = arith.constant 0 : index
    %106 = vector.load %arg10[%c80_77, %c0_78] : memref<108x1414xf32, #tpu.memory_space<vmem>>, vector<4x1100xf32>
    tpu.vector_store %arg10[%c80_77, %c0_78], %105 {strides = array<i32>} : memref<108x1414xf32, #tpu.memory_space<vmem>>, vector<4x1100xf32>,
    %107 = vector.extract_strided_slice %64 {offsets = [0, 300], sizes = [4, 1100], strides = [1, 1]} : vector<4x1414xf32> to vector<4x1100xf32>
    %c84_79 = arith.constant 84 : index
    %c0_80 = arith.constant 0 : index
    %108 = vector.load %arg10[%c84_79, %c0_80] : memref<108x1414xf32, #tpu.memory_space<vmem>>, vector<4x1100xf32>
    tpu.vector_store %arg10[%c84_79, %c0_80], %107 {strides = array<i32>} : memref<108x1414xf32, #tpu.memory_space<vmem>>, vector<4x1100xf32>,
    %109 = vector.extract_strided_slice %64 {offsets = [0, 301], sizes = [4, 1100], strides = [1, 1]} : vector<4x1414xf32> to vector<4x1100xf32>
    %c88_81 = arith.constant 88 : index
    %c0_82 = arith.constant 0 : index
    %110 = vector.load %arg10[%c88_81, %c0_82] : memref<108x1414xf32, #tpu.memory_space<vmem>>, vector<4x1100xf32>
    tpu.vector_store %arg10[%c88_81, %c0_82], %109 {strides = array<i32>} : memref<108x1414xf32, #tpu.memory_space<vmem>>, vector<4x1100xf32>,
    %111 = vector.extract_strided_slice %64 {offsets = [0, 302], sizes = [4, 1100], strides = [1, 1]} : vector<4x1414xf32> to vector<4x1100xf32>
    %c92_83 = arith.constant 92 : index
    %c0_84 = arith.constant 0 : index
    %112 = vector.load %arg10[%c92_83, %c0_84] : memref<108x1414xf32, #tpu.memory_space<vmem>>, vector<4x1100xf32>
    tpu.vector_store %arg10[%c92_83, %c0_84], %111 {strides = array<i32>} : memref<108x1414xf32, #tpu.memory_space<vmem>>, vector<4x1100xf32>,
    %113 = vector.extract_strided_slice %64 {offsets = [0, 312], sizes = [4, 1100], strides = [1, 1]} : vector<4x1414xf32> to vector<4x1100xf32>
    %c96_85 = arith.constant 96 : index
    %c0_86 = arith.constant 0 : index
    %114 = vector.load %arg10[%c96_85, %c0_86] : memref<108x1414xf32, #tpu.memory_space<vmem>>, vector<4x1100xf32>
    tpu.vector_store %arg10[%c96_85, %c0_86], %113 {strides = array<i32>} : memref<108x1414xf32, #tpu.memory_space<vmem>>, vector<4x1100xf32>,
    %115 = vector.extract_strided_slice %64 {offsets = [0, 313], sizes = [4, 1100], strides = [1, 1]} : vector<4x1414xf32> to vector<4x1100xf32>
    %c100_87 = arith.constant 100 : index
    %c0_88 = arith.constant 0 : index
    %116 = vector.load %arg10[%c100_87, %c0_88] : memref<108x1414xf32, #tpu.memory_space<vmem>>, vector<4x1100xf32>
    tpu.vector_store %arg10[%c100_87, %c0_88], %115 {strides = array<i32>} : memref<108x1414xf32, #tpu.memory_space<vmem>>, vector<4x1100xf32>,
    %117 = vector.extract_strided_slice %64 {offsets = [0, 314], sizes = [4, 1100], strides = [1, 1]} : vector<4x1414xf32> to vector<4x1100xf32>
    %c104_89 = arith.constant 104 : index
    %c0_90 = arith.constant 0 : index
    %118 = vector.load %arg10[%c104_89, %c0_90] : memref<108x1414xf32, #tpu.memory_space<vmem>>, vector<4x1100xf32>
    tpu.vector_store %arg10[%c104_89, %c0_90], %117 {strides = array<i32>} : memref<108x1414xf32, #tpu.memory_space<vmem>>, vector<4x1100xf32>,
    %c0_91 = arith.constant 0 : index
    %c0_92 = arith.constant 0 : index
    %119 = vector.load %arg4[%c0_91, %c0_92] : memref<8x108xf32, #tpu.memory_space<vmem>>, vector<8x108xf32>
    %c0_93 = arith.constant 0 : index
    %c0_94 = arith.constant 0 : index
    %120 = vector.load %arg10[%c0_93, %c0_94] : memref<108x1414xf32, #tpu.memory_space<vmem>>, vector<108x1100xf32>
    %cst_95 = arith.constant dense<0.000000e+00> : vector<8x1100xf32>
    %121 = tpu.matmul %119, %120, %cst_95 {dimension_numbers = #tpu.dot_dimension_numbers<[1], [0], [0], [1], [0, 0, 1, 1], [], []>} : vector<8x108xf32>, vector<108x1100xf32>, vector<8x1100xf32> -> vector<8x1100xf32>
    %c0_96 = arith.constant 0 : index
    %c0_97 = arith.constant 0 : index
    %122 = vector.load %arg5[%c0_96, %c0_97] : memref<8x1xf32, #tpu.memory_space<vmem>>, vector<8x1xf32>
    %123 = vector.broadcast %122 : vector<8x1xf32> to vector<8x1100xf32>
    %124 = arith.addf %121, %123 : vector<8x1100xf32>
    %cst_98 = arith.constant 2.000000e-01 : f32
    %125 = vector.broadcast %cst_98 : f32 to vector<8x1100xf32>
    %126 = arith.mulf %125, %124 : vector<8x1100xf32>
    %127 = arith.maximumf %124, %126 : vector<8x1100xf32>
    %c0_99 = arith.constant 0 : index
    %c0_100 = arith.constant 0 : index
    %128 = vector.load %arg6[%c0_99, %c0_100] : memref<8x4xf32, #tpu.memory_space<vmem>>, vector<8x4xf32>
    %129 = vector.extract_strided_slice %1 {offsets = [0, 314], sizes = [4, 1100], strides = [1, 1]} : vector<4x1728xf32> to vector<4x1100xf32>
    %cst_101 = arith.constant dense<0.000000e+00> : vector<8x1100xf32>
    %130 = tpu.matmul %128, %129, %cst_101 {dimension_numbers = #tpu.dot_dimension_numbers<[1], [0], [0], [1], [0, 0, 1, 1], [], []>} : vector<8x4xf32>, vector<4x1100xf32>, vector<8x1100xf32> -> vector<8x1100xf32>
    %c0_102 = arith.constant 0 : index
    %c0_103 = arith.constant 0 : index
    %131 = vector.load %arg7[%c0_102, %c0_103] : memref<8x1xf32, #tpu.memory_space<vmem>>, vector<8x1xf32>
    %132 = vector.broadcast %131 : vector<8x1xf32> to vector<8x1100xf32>
    %133 = arith.addf %130, %132 : vector<8x1100xf32>
    %134 = arith.addf %127, %133 : vector<8x1100xf32>
    %c0_104 = arith.constant 0 : index
    %c0_105 = arith.constant 0 : index
    %135 = vector.load %arg11[%c0_104, %c0_105] : memref<8x1152xf32, #tpu.memory_space<vmem>>, vector<8x1100xf32>
    tpu.vector_store %arg11[%c0_104, %c0_105], %134 {strides = array<i32>} : memref<8x1152xf32, #tpu.memory_space<vmem>>, vector<8x1100xf32>,
    %cst_106 = arith.constant 0.000000e+00 : f32
    %136 = vector.broadcast %cst_106 : f32 to vector<8x52xf32>
    %c0_107 = arith.constant 0 : index
    %c1100 = arith.constant 1100 : index
    %137 = vector.load %arg11[%c0_107, %c1100] : memref<8x1152xf32, #tpu.memory_space<vmem>>, vector<8x52xf32>
    tpu.vector_store %arg11[%c0_107, %c1100], %136 {strides = array<i32>} : memref<8x1152xf32, #tpu.memory_space<vmem>>, vector<8x52xf32>,
    %c0_108 = arith.constant 0 : index
    %c0_109 = arith.constant 0 : index
    %138 = vector.load %arg8[%c0_108, %c0_109] : memref<144x16xf32, #tpu.memory_space<vmem>>, vector<144x16xf32>
    %c0_110 = arith.constant 0 : index
    %c0_111 = arith.constant 0 : index
    %139 = vector.load %arg11[%c0_110, %c0_111] : memref<8x1152xf32, #tpu.memory_space<vmem>>, vector<8x144xf32>
    %c0_112 = arith.constant 0 : index
    %c144 = arith.constant 144 : index
    %140 = vector.load %arg11[%c0_112, %c144] : memref<8x1152xf32, #tpu.memory_space<vmem>>, vector<8x144xf32>
    %141 = arith.addf %139, %140 : vector<8x144xf32>
    %cst_113 = arith.constant dense<0.000000e+00> : vector<8x16xf32>
    %142 = tpu.matmul %141, %138, %cst_113 {dimension_numbers = #tpu.dot_dimension_numbers<[1], [0], [0], [1], [0, 0, 1, 1], [], []>} : vector<8x144xf32>, vector<144x16xf32>, vector<8x16xf32> -> vector<8x16xf32>
    %c0_114 = arith.constant 0 : index
    %c0_115 = arith.constant 0 : index
    %c0_116 = arith.constant 0 : index
    %143 = vector.load %arg9[%c0_114, %c0_115, %c0_116] : memref<1x8x64xf32, #tpu.memory_space<vmem>>, vector<1x8x16xf32>
    %144 = vector.shape_cast %143 : vector<1x8x16xf32> to vector<8x16xf32>
    %145 = vector.shape_cast %142 : vector<8x16xf32> to vector<1x8x16xf32>
    tpu.vector_store %arg9[%c0_114, %c0_115, %c0_116], %145 {strides = array<i32>} : memref<1x8x64xf32, #tpu.memory_space<vmem>>, vector<1x8x16xf32>,
    %c0_117 = arith.constant 0 : index
    %c288 = arith.constant 288 : index
    %146 = vector.load %arg11[%c0_117, %c288] : memref<8x1152xf32, #tpu.memory_space<vmem>>, vector<8x144xf32>
    %c0_118 = arith.constant 0 : index
    %c432 = arith.constant 432 : index
    %147 = vector.load %arg11[%c0_118, %c432] : memref<8x1152xf32, #tpu.memory_space<vmem>>, vector<8x144xf32>
    %148 = arith.addf %146, %147 : vector<8x144xf32>
    %cst_119 = arith.constant dense<0.000000e+00> : vector<8x16xf32>
    %149 = tpu.matmul %148, %138, %cst_119 {dimension_numbers = #tpu.dot_dimension_numbers<[1], [0], [0], [1], [0, 0, 1, 1], [], []>} : vector<8x144xf32>, vector<144x16xf32>, vector<8x16xf32> -> vector<8x16xf32>
    %c0_120 = arith.constant 0 : index
    %c0_121 = arith.constant 0 : index
    %c16_122 = arith.constant 16 : index
    %150 = vector.load %arg9[%c0_120, %c0_121, %c16_122] : memref<1x8x64xf32, #tpu.memory_space<vmem>>, vector<1x8x16xf32>
    %151 = vector.shape_cast %150 : vector<1x8x16xf32> to vector<8x16xf32>
    %152 = vector.shape_cast %149 : vector<8x16xf32> to vector<1x8x16xf32>
    tpu.vector_store %arg9[%c0_120, %c0_121, %c16_122], %152 {strides = array<i32>} : memref<1x8x64xf32, #tpu.memory_space<vmem>>, vector<1x8x16xf32>,
    %c0_123 = arith.constant 0 : index
    %c576 = arith.constant 576 : index
    %153 = vector.load %arg11[%c0_123, %c576] : memref<8x1152xf32, #tpu.memory_space<vmem>>, vector<8x144xf32>
    %c0_124 = arith.constant 0 : index
    %c720 = arith.constant 720 : index
    %154 = vector.load %arg11[%c0_124, %c720] : memref<8x1152xf32, #tpu.memory_space<vmem>>, vector<8x144xf32>
    %155 = arith.addf %153, %154 : vector<8x144xf32>
    %cst_125 = arith.constant dense<0.000000e+00> : vector<8x16xf32>
    %156 = tpu.matmul %155, %138, %cst_125 {dimension_numbers = #tpu.dot_dimension_numbers<[1], [0], [0], [1], [0, 0, 1, 1], [], []>} : vector<8x144xf32>, vector<144x16xf32>, vector<8x16xf32> -> vector<8x16xf32>
    %c0_126 = arith.constant 0 : index
    %c0_127 = arith.constant 0 : index
    %c32_128 = arith.constant 32 : index
    %157 = vector.load %arg9[%c0_126, %c0_127, %c32_128] : memref<1x8x64xf32, #tpu.memory_space<vmem>>, vector<1x8x16xf32>
    %158 = vector.shape_cast %157 : vector<1x8x16xf32> to vector<8x16xf32>
    %159 = vector.shape_cast %156 : vector<8x16xf32> to vector<1x8x16xf32>
    tpu.vector_store %arg9[%c0_126, %c0_127, %c32_128], %159 {strides = array<i32>} : memref<1x8x64xf32, #tpu.memory_space<vmem>>, vector<1x8x16xf32>,
    %c0_129 = arith.constant 0 : index
    %c864 = arith.constant 864 : index
    %160 = vector.load %arg11[%c0_129, %c864] : memref<8x1152xf32, #tpu.memory_space<vmem>>, vector<8x144xf32>
    %c0_130 = arith.constant 0 : index
    %c1008 = arith.constant 1008 : index
    %161 = vector.load %arg11[%c0_130, %c1008] : memref<8x1152xf32, #tpu.memory_space<vmem>>, vector<8x144xf32>
    %162 = arith.addf %160, %161 : vector<8x144xf32>
    %cst_131 = arith.constant dense<0.000000e+00> : vector<8x16xf32>
    %163 = tpu.matmul %162, %138, %cst_131 {dimension_numbers = #tpu.dot_dimension_numbers<[1], [0], [0], [1], [0, 0, 1, 1], [], []>} : vector<8x144xf32>, vector<144x16xf32>, vector<8x16xf32> -> vector<8x16xf32>
    %c0_132 = arith.constant 0 : index
    %c0_133 = arith.constant 0 : index
    %c48_134 = arith.constant 48 : index
    %164 = vector.load %arg9[%c0_132, %c0_133, %c48_134] : memref<1x8x64xf32, #tpu.memory_space<vmem>>, vector<1x8x16xf32>
    %165 = vector.shape_cast %164 : vector<1x8x16xf32> to vector<8x16xf32>
    %166 = vector.shape_cast %163 : vector<8x16xf32> to vector<1x8x16xf32>
    tpu.vector_store %arg9[%c0_132, %c0_133, %c48_134], %166 {strides = array<i32>} : memref<1x8x64xf32, #tpu.memory_space<vmem>>, vector<1x8x16xf32>,
    return
  }
  func.func @transform_0(%arg0: i32) -> (i32, i32, i32) {
    %c0_i32 = arith.constant 0 : i32
    %c0_i32_0 = arith.constant 0 : i32
    %c0_i32_1 = arith.constant 0 : i32
    return %arg0, %c0_i32, %c0_i32_0 : i32, i32, i32
  }
  func.func @transform_1(%arg0: i32) -> (i32, i32) {
    %c0_i32 = arith.constant 0 : i32
    %c0_i32_0 = arith.constant 0 : i32
    %c0_i32_1 = arith.constant 0 : i32
    return %c0_i32, %c0_i32_0 : i32, i32
  }
  func.func @transform_2(%arg0: i32) -> (i32, i32) {
    %c0_i32 = arith.constant 0 : i32
    %c0_i32_0 = arith.constant 0 : i32
    %c0_i32_1 = arith.constant 0 : i32
    return %c0_i32, %c0_i32_0 : i32, i32
  }
  func.func @transform_3(%arg0: i32) -> (i32, i32) {
    %c0_i32 = arith.constant 0 : i32
    %c0_i32_0 = arith.constant 0 : i32
    %c0_i32_1 = arith.constant 0 : i32
    return %c0_i32, %c0_i32_0 : i32, i32
  }
  func.func @transform_4(%arg0: i32) -> (i32, i32) {
    %c0_i32 = arith.constant 0 : i32
    %c0_i32_0 = arith.constant 0 : i32
    %c0_i32_1 = arith.constant 0 : i32
    return %c0_i32, %c0_i32_0 : i32, i32
  }
  func.func @transform_5(%arg0: i32) -> (i32, i32) {
    %c0_i32 = arith.constant 0 : i32
    %c0_i32_0 = arith.constant 0 : i32
    %c0_i32_1 = arith.constant 0 : i32
    return %c0_i32, %c0_i32_0 : i32, i32
  }
  func.func @transform_6(%arg0: i32) -> (i32, i32) {
    %c0_i32 = arith.constant 0 : i32
    %c0_i32_0 = arith.constant 0 : i32
    %c0_i32_1 = arith.constant 0 : i32
    return %c0_i32, %c0_i32_0 : i32, i32
  }
  func.func @transform_7(%arg0: i32) -> (i32, i32) {
    %c0_i32 = arith.constant 0 : i32
    %c0_i32_0 = arith.constant 0 : i32
    %c0_i32_1 = arith.constant 0 : i32
    return %c0_i32, %c0_i32_0 : i32, i32
  }
  func.func @transform_8(%arg0: i32) -> (i32, i32, i32) {
    %c0_i32 = arith.constant 0 : i32
    %c0_i32_0 = arith.constant 0 : i32
    %c0_i32_1 = arith.constant 0 : i32
    return %arg0, %c0_i32, %c0_i32_0 : i32, i32, i32
  }
}

</mosaic_0001>

<llo_original>
// kernel: tpu_custom_call.1
$region0: #{tpu_custom_call.1}
  #allocation0 [shape = 'u32[]', space=smem, size = 0x4, offset = 0x4, fixed_abs, tag = 'smem constant byte address 0x4 - core index']
  #allocation1 [shape = 'u32[144,128]{1,0:T(1,128)}', space=vmem, size = 0x12000, scoped, tag = 'internal scratch']
  #allocation2 [shape = 'f32[108,1414]{1,0:T(8,128)}', space=vmem, size = 0xa8000, scoped, tag = 'scratch operand']
  #allocation3 [shape = 'f32[8,1152]{1,0:T(8,128)}', space=vmem, size = 0x9000, scoped, tag = 'scratch operand']
  %s0 = inlined_call_operand.vmem [shape: f32[2,4,1728], index: 0, kind: input, shape index: {}]
  %s1 = inlined_call_operand.vmem [shape: f32[4,108], index: 1, kind: input, shape index: {}]
  %s2 = inlined_call_operand.vmem [shape: f32[4,1], index: 2, kind: input, shape index: {}]
  %s3 = inlined_call_operand.vmem [shape: f32[8,108], index: 3, kind: input, shape index: {}]
  %s4 = inlined_call_operand.vmem [shape: f32[8,1], index: 4, kind: input, shape index: {}]
  %s5 = inlined_call_operand.vmem [shape: f32[8,4], index: 5, kind: input, shape index: {}]
  %s6 = inlined_call_operand.vmem [shape: f32[8,1], index: 6, kind: input, shape index: {}]
  %s7 = inlined_call_operand.vmem [shape: f32[144,16], index: 7, kind: input, shape index: {}]
  %s8 = inlined_call_operand.hbm [shape: f32[2,8,64], index: 8, kind: output, shape index: {}]
  %s9 = sld [smem:[#allocation0]]
  $region65: #{tpu_custom_call.1} parent=0
    _
  %s11 = ssub.s32 1, %s9
  %s12 = scalar_select 0, %s11, %s9
  $region1: #{tpu_custom_call.1} parent=0
    #allocation4 [shape = 'u8[8192]{0}', space=vmem, size = 0x2000, scoped, tag = 'output window, operand 0']
    #allocation5 [shape = 's32[2]{0}', space=sflag, size = 0x8, scoped, tag = 'scoped memory for tpu_custom_call.1']
    %13 = vsyncpa [#allocation5], 0
    %s14 = scalar_lea.sflag [#allocation5], 1
    %15 = vsyncpa %s14, 0
    loop: start=0, step=1, limit=4
    $region2: #{tpu_custom_call.1} parent=1 // loop_pre_header
      _
    $region3: #{tpu_custom_call.1} parent=1 // loop_header
      %s17 = sphi 0, %s21
      %p18 = scmp.ge.s32.totalorder %s17, 4
      %s27 = sphi 0, %s29
      %s30 = sphi 0, %s27
      %s31 = sphi 0, %s30
      %s47 = sphi 0, %s31
      %s51 = sphi 0, %s51
      %s53 = sphi 0, %s51
      %s54 = sphi 0, %s53
      %s68 = sphi 0, %s54
      %s72 = sphi 0, %s72
      %s74 = sphi 0, %s72
      %s75 = sphi 0, %s74
      %s89 = sphi 0, %s75
      %s93 = sphi 0, %s93
      %s95 = sphi 0, %s93
      %s96 = sphi 0, %s95
      %s110 = sphi 0, %s96
      %s114 = sphi 0, %s114
      %s116 = sphi 0, %s114
      %s117 = sphi 0, %s116
      %s131 = sphi 0, %s117
      %s135 = sphi 0, %s135
      %s137 = sphi 0, %s135
      %s138 = sphi 0, %s137
      %s152 = sphi 0, %s138
      %s156 = sphi 0, %s156
      %s158 = sphi 0, %s156
      %s159 = sphi 0, %s158
      %s173 = sphi 0, %s159
      %s177 = sphi 0, %s177
      %s179 = sphi 0, %s177
      %s180 = sphi 0, %s179
      %s194 = sphi 0, %s180
      %s200 = sphi 0, %s202
      %s203 = sphi 0, %s200
      %s204 = sphi 0, %s203
      %s220 = sphi 0, %s204
    $region4: #{tpu_custom_call.1} parent=1 // loop_header_branch
      %20 = sbr.rel (%p18) target = $region8
    $region5: #{tpu_custom_call.1} parent=1 // loop_body
      %s22 = ssub.s32 %s17, 1
      %s23 = ssub.s32 %s17, 2
      %s24 = sadd.s32 %s17, 1
      %s25 = ssub.s32 %s17, %s24
      %p26 = scmp.eq.s32.totalorder %s25, 0
      %s28 = sadd.s32 %s27, 1
      %s29 = scalar_select %p26, %s27, %s28
      %p32 = pneg %p26
      %p33 = scmp.eq.s32.totalorder %s17, 1
      %p34 = por %p32, %p33
      %p35 = scmp.ne.s32.totalorder %s27, %s30
      %p36 = scmp.eq.s32.totalorder %s17, 0
      %p37 = por %p35, %p36
      %p38 = scmp.ne.s32.totalorder %s27, %s30
      %p39 = scmp.eq.s32.totalorder %s22, 1
      %p40 = por %p38, %p39
      %p41 = scmp.ne.s32.totalorder %s30, %s31
      %p42 = scmp.eq.s32.totalorder %s22, 0
      %p43 = por %p41, %p42
      %p44 = scmp.ne.s32.totalorder %s30, %s31
      %p45 = scmp.eq.s32.totalorder %s23, 1
      %p46 = por %p44, %p45
      %p48 = scmp.ne.s32.totalorder %s31, %s47
      %p49 = scmp.eq.s32.totalorder %s23, 0
      %p50 = por %p48, %p49
      %s52 = sadd.s32 %s51, 1
      %p55 = scmp.eq.s32.totalorder %s17, 1
      %p56 = scmp.ne.s32.totalorder %s51, %s53
      %p57 = scmp.eq.s32.totalorder %s17, 0
      %p58 = por %p56, %p57
      %p59 = scmp.ne.s32.totalorder %s51, %s53
      %p60 = scmp.eq.s32.totalorder %s22, 1
      %p61 = por %p59, %p60
      %p62 = scmp.ne.s32.totalorder %s53, %s54
      %p63 = scmp.eq.s32.totalorder %s22, 0
      %p64 = por %p62, %p63
      %p65 = scmp.ne.s32.totalorder %s53, %s54
      %p66 = scmp.eq.s32.totalorder %s23, 1
      %p67 = por %p65, %p66
      %p69 = scmp.ne.s32.totalorder %s54, %s68
      %p70 = scmp.eq.s32.totalorder %s23, 0
      %p71 = por %p69, %p70
      %s73 = sadd.s32 %s72, 1
      %p76 = scmp.eq.s32.totalorder %s17, 1
      %p77 = scmp.ne.s32.totalorder %s72, %s74
      %p78 = scmp.eq.s32.totalorder %s17, 0
      %p79 = por %p77, %p78
      %p80 = scmp.ne.s32.totalorder %s72, %s74
      %p81 = scmp.eq.s32.totalorder %s22, 1
      %p82 = por %p80, %p81
      %p83 = scmp.ne.s32.totalorder %s74, %s75
      %p84 = scmp.eq.s32.totalorder %s22, 0
      %p85 = por %p83, %p84
      %p86 = scmp.ne.s32.totalorder %s74, %s75
      %p87 = scmp.eq.s32.totalorder %s23, 1
      %p88 = por %p86, %p87
      %p90 = scmp.ne.s32.totalorder %s75, %s89
      %p91 = scmp.eq.s32.totalorder %s23, 0
      %p92 = por %p90, %p91
      %s94 = sadd.s32 %s93, 1
      %p97 = scmp.eq.s32.totalorder %s17, 1
      %p98 = scmp.ne.s32.totalorder %s93, %s95
      %p99 = scmp.eq.s32.totalorder %s17, 0
      %p100 = por %p98, %p99
      %p101 = scmp.ne.s32.totalorder %s93, %s95
      %p102 = scmp.eq.s32.totalorder %s22, 1
      %p103 = por %p101, %p102
      %p104 = scmp.ne.s32.totalorder %s95, %s96
      %p105 = scmp.eq.s32.totalorder %s22, 0
      %p106 = por %p104, %p105
      %p107 = scmp.ne.s32.totalorder %s95, %s96
      %p108 = scmp.eq.s32.totalorder %s23, 1
      %p109 = por %p107, %p108
      %p111 = scmp.ne.s32.totalorder %s96, %s110
      %p112 = scmp.eq.s32.totalorder %s23, 0
      %p113 = por %p111, %p112
      %s115 = sadd.s32 %s114, 1
      %p118 = scmp.eq.s32.totalorder %s17, 1
      %p119 = scmp.ne.s32.totalorder %s114, %s116
      %p120 = scmp.eq.s32.totalorder %s17, 0
      %p121 = por %p119, %p120
      %p122 = scmp.ne.s32.totalorder %s114, %s116
      %p123 = scmp.eq.s32.totalorder %s22, 1
      %p124 = por %p122, %p123
      %p125 = scmp.ne.s32.totalorder %s116, %s117
      %p126 = scmp.eq.s32.totalorder %s22, 0
      %p127 = por %p125, %p126
      %p128 = scmp.ne.s32.totalorder %s116, %s117
      %p129 = scmp.eq.s32.totalorder %s23, 1
      %p130 = por %p128, %p129
      %p132 = scmp.ne.s32.totalorder %s117, %s131
      %p133 = scmp.eq.s32.totalorder %s23, 0
      %p134 = por %p132, %p133
      %s136 = sadd.s32 %s135, 1
      %p139 = scmp.eq.s32.totalorder %s17, 1
      %p140 = scmp.ne.s32.totalorder %s135, %s137
      %p141 = scmp.eq.s32.totalorder %s17, 0
      %p142 = por %p140, %p141
      %p143 = scmp.ne.s32.totalorder %s135, %s137
      %p144 = scmp.eq.s32.totalorder %s22, 1
      %p145 = por %p143, %p144
      %p146 = scmp.ne.s32.totalorder %s137, %s138
      %p147 = scmp.eq.s32.totalorder %s22, 0
      %p148 = por %p146, %p147
      %p149 = scmp.ne.s32.totalorder %s137, %s138
      %p150 = scmp.eq.s32.totalorder %s23, 1
      %p151 = por %p149, %p150
      %p153 = scmp.ne.s32.totalorder %s138, %s152
      %p154 = scmp.eq.s32.totalorder %s23, 0
      %p155 = por %p153, %p154
      %s157 = sadd.s32 %s156, 1
      %p160 = scmp.eq.s32.totalorder %s17, 1
      %p161 = scmp.ne.s32.totalorder %s156, %s158
      %p162 = scmp.eq.s32.totalorder %s17, 0
      %p163 = por %p161, %p162
      %p164 = scmp.ne.s32.totalorder %s156, %s158
      %p165 = scmp.eq.s32.totalorder %s22, 1
      %p166 = por %p164, %p165
      %p167 = scmp.ne.s32.totalorder %s158, %s159
      %p168 = scmp.eq.s32.totalorder %s22, 0
      %p169 = por %p167, %p168
      %p170 = scmp.ne.s32.totalorder %s158, %s159
      %p171 = scmp.eq.s32.totalorder %s23, 1
      %p172 = por %p170, %p171
      %p174 = scmp.ne.s32.totalorder %s159, %s173
      %p175 = scmp.eq.s32.totalorder %s23, 0
      %p176 = por %p174, %p175
      %s178 = sadd.s32 %s177, 1
      %p181 = scmp.eq.s32.totalorder %s17, 1
      %p182 = scmp.ne.s32.totalorder %s177, %s179
      %p183 = scmp.eq.s32.totalorder %s17, 0
      %p184 = por %p182, %p183
      %p185 = scmp.ne.s32.totalorder %s177, %s179
      %p186 = scmp.eq.s32.totalorder %s22, 1
      %p187 = por %p185, %p186
      %p188 = scmp.ne.s32.totalorder %s179, %s180
      %p189 = scmp.eq.s32.totalorder %s22, 0
      %p190 = por %p188, %p189
      %p191 = scmp.ne.s32.totalorder %s179, %s180
      %p192 = scmp.eq.s32.totalorder %s23, 1
      %p193 = por %p191, %p192
      %p195 = scmp.ne.s32.totalorder %s180, %s194
      %p196 = scmp.eq.s32.totalorder %s23, 0
      %p197 = por %p195, %p196
      %s198 = ssub.s32 %s17, %s24
      %p199 = scmp.eq.s32.totalorder %s198, 0
      %s201 = sadd.s32 %s200, 1
      %s202 = scalar_select %p199, %s200, %s201
      %p205 = pneg %p199
      %p206 = scmp.eq.s32.totalorder %s17, 1
      %p207 = por %p205, %p206
      %p208 = scmp.ne.s32.totalorder %s200, %s203
      %p209 = scmp.eq.s32.totalorder %s17, 0
      %p210 = por %p208, %p209
      %p211 = scmp.ne.s32.totalorder %s200, %s203
      %p212 = scmp.eq.s32.totalorder %s22, 1
      %p213 = por %p211, %p212
      %p214 = scmp.ne.s32.totalorder %s203, %s204
      %p215 = scmp.eq.s32.totalorder %s22, 0
      %p216 = por %p214, %p215
      %p217 = scmp.ne.s32.totalorder %s203, %s204
      %p218 = scmp.eq.s32.totalorder %s23, 1
      %p219 = por %p217, %p218
      %p221 = scmp.ne.s32.totalorder %s204, %s220
      %p222 = scmp.eq.s32.totalorder %s23, 0
      %p223 = por %p221, %p222
      %p224 = scmp.le.s32.totalorder 1, %s17
      %p225 = scmp.lt.s32.totalorder %s17, 3
      %p226 = pnand %p224, %p225
      %p227 = pneg %p226
      // Predicated region
      $region9: #{tpu_custom_call.1} parent=5 // pred_check
        _
      $region10: #{tpu_custom_call.1} parent=5 // pred_check_branch
        %229 = sbr.rel (%p226) target = $region12
      $region11: #{tpu_custom_call.1} parent=5 // pred_region
        %s230 = ssub.s32 %s17, 1
        // Predicated region
        $region13: #{tpu_custom_call.1} parent=11 // pred_check
          %p231 = pneg %p64
        $region14: #{tpu_custom_call.1} parent=11 // pred_check_branch
          %233 = sbr.rel (%p231) target = $region16
        $region15: #{tpu_custom_call.1} parent=11 // pred_region
          _
        $region16: #{tpu_custom_call.1} parent=11 // pred_fallthru
          _
        // Predicated region
        $region17: #{tpu_custom_call.1} parent=11 // pred_check
          %p234 = pneg %p85
        $region18: #{tpu_custom_call.1} parent=11 // pred_check_branch
          %236 = sbr.rel (%p234) target = $region20
        $region19: #{tpu_custom_call.1} parent=11 // pred_region
          _
        $region20: #{tpu_custom_call.1} parent=11 // pred_fallthru
          _
        // Predicated region
        $region21: #{tpu_custom_call.1} parent=11 // pred_check
          %p237 = pneg %p106
        $region22: #{tpu_custom_call.1} parent=11 // pred_check_branch
          %239 = sbr.rel (%p237) target = $region24
        $region23: #{tpu_custom_call.1} parent=11 // pred_region
          _
        $region24: #{tpu_custom_call.1} parent=11 // pred_fallthru
          _
        // Predicated region
        $region25: #{tpu_custom_call.1} parent=11 // pred_check
          %p240 = pneg %p127
        $region26: #{tpu_custom_call.1} parent=11 // pred_check_branch
          %242 = sbr.rel (%p240) target = $region28
        $region27: #{tpu_custom_call.1} parent=11 // pred_region
          _
        $region28: #{tpu_custom_call.1} parent=11 // pred_fallthru
          _
        // Predicated region
        $region29: #{tpu_custom_call.1} parent=11 // pred_check
          %p243 = pneg %p148
        $region30: #{tpu_custom_call.1} parent=11 // pred_check_branch
          %245 = sbr.rel (%p243) target = $region32
        $region31: #{tpu_custom_call.1} parent=11 // pred_region
          _
        $region32: #{tpu_custom_call.1} parent=11 // pred_fallthru
          _
        // Predicated region
        $region33: #{tpu_custom_call.1} parent=11 // pred_check
          %p246 = pneg %p169
        $region34: #{tpu_custom_call.1} parent=11 // pred_check_branch
          %248 = sbr.rel (%p246) target = $region36
        $region35: #{tpu_custom_call.1} parent=11 // pred_region
          _
        $region36: #{tpu_custom_call.1} parent=11 // pred_fallthru
          _
        // Predicated region
        $region37: #{tpu_custom_call.1} parent=11 // pred_check
          %p249 = pneg %p190
        $region38: #{tpu_custom_call.1} parent=11 // pred_check_branch
          %251 = sbr.rel (%p249) target = $region40
        $region39: #{tpu_custom_call.1} parent=11 // pred_region
          _
        $region40: #{tpu_custom_call.1} parent=11 // pred_fallthru
          _
      $region12: #{tpu_custom_call.1} parent=5 // pred_fallthru
        _
      %p252 = scmp.lt.s32.totalorder %s17, 2
      // Predicated region
      $region41: #{tpu_custom_call.1} parent=5 // pred_check
        %p253 = pneg %p252
      $region42: #{tpu_custom_call.1} parent=5 // pred_check_branch
        %255 = sbr.rel (%p253) target = $region44
      $region43: #{tpu_custom_call.1} parent=5 // pred_region
        // Predicated region
        $region45: #{tpu_custom_call.1} parent=43 // pred_check
          %p256 = pneg %p37
        $region46: #{tpu_custom_call.1} parent=43 // pred_check_branch
          %258 = sbr.rel (%p256) target = $region48
        $region47: #{tpu_custom_call.1} parent=43 // pred_region
          %p259 = scmp.lt.s32.totalorder %s17, 1
          %s260 = scalar_select %p259, %s17, 1
          %s261 = smul.addr %s260, 14
          %s262 = smul.addr %s261, 4
          %s263 = scalar_lea.vmem %s0, %s262
        $region48: #{tpu_custom_call.1} parent=43 // pred_fallthru
          _
      $region44: #{tpu_custom_call.1} parent=5 // pred_fallthru
        _
      %p264 = scmp.le.s32.totalorder 1, %s17
      %p265 = scmp.lt.s32.totalorder %s17, 3
      %p266 = pnand %p264, %p265
      %p267 = pneg %p266
      // Predicated region
      $region49: #{tpu_custom_call.1} parent=5 // pred_check
        _
      $region50: #{tpu_custom_call.1} parent=5 // pred_check_branch
        %269 = sbr.rel (%p266) target = $region52
      $region51: #{tpu_custom_call.1} parent=5 // pred_region
        %s270 = ssub.s32 %s17, 1
        %p271 = scmp.lt.s32.totalorder %s22, 1
        %s272 = scalar_select %p271, %s22, 1
        %s273 = smul.addr %s272, 14
        %s274 = smul.addr %s273, 4
        %s275 = scalar_lea.vmem %s0, %s274
        %p276 = pneg %p43
        %p277 = pneg %p40
        %p278 = pneg %p64
        %p279 = pneg %p61
        %p280 = pneg %p85
        %p281 = pneg %p82
        %p282 = pneg %p106
        %p283 = pneg %p103
        %p284 = pneg %p127
        %p285 = pneg %p124
        %p286 = pneg %p148
        %p287 = pneg %p145
        %p288 = pneg %p169
        %p289 = pneg %p166
        %p290 = pneg %p190
        %p291 = pneg %p187
        %p292 = pneg %p216
        %p293 = pneg %p213
        %s294 = sand.u32 %s203, 1
        %s295 = scalar_lea.sflag [#allocation5], %s294
        %s296 = sand.u32 %s203, 1
        %s297 = smul.addr %s296, 8
        %s298 = scalar_lea.vmem [#allocation4], %s297
        %p299 = scmp.lt.s32.totalorder %s22, 1
        %s300 = scalar_select %p299, %s22, 1
        %s301 = smul.addr %s300, 14
        %s302 = smul.addr %s301, 4
        %s303 = scalar_lea.vmem %s0, %s302
        %v304 = vld [vmem:[%s303] sm:$0xff]
        %v305 = vld [vmem:[%s303 + $0x8] sm:$0xff]
        %v306 = vld [vmem:[%s303 + $0x10] sm:$0xff]
        %v307 = vld [vmem:[%s303 + $0x18] sm:$0xff]
        %v308 = vld [vmem:[%s303 + $0x20] sm:$0xff]
        %v309 = vld [vmem:[%s303 + $0x28] sm:$0xff]
        %v310 = vld [vmem:[%s303 + $0x30] sm:$0xff]
        %v317 = vcombine.high %v304, %v304
        %v318 = vcombine.high %v305, %v305
        %v319 = vcombine.high %v306, %v306
        %v320 = vcombine.high %v307, %v307
        %v321 = vcombine.high %v308, %v308
        %v322 = vcombine.high %v309, %v309
        %329 = vst [vmem:[#allocation2] sm:$0xf] %v304
        %330 = vst [vmem:[#allocation2 + $0x8] sm:$0xf] %v317
        %331 = vst [vmem:[#allocation2 + $0x10] sm:$0xf] %v305
        %332 = vst [vmem:[#allocation2 + $0x18] sm:$0xf] %v318
        %333 = vst [vmem:[#allocation2 + $0x20] sm:$0xf] %v306
        %334 = vst [vmem:[#allocation2 + $0x28] sm:$0xf] %v319
        %335 = vst [vmem:[#allocation2 + $0x30] sm:$0xf] %v307
        %336 = vst [vmem:[#allocation2 + $0x38] sm:$0xf] %v320
        %337 = vst [vmem:[#allocation2 + $0x40] sm:$0xf] %v308
        %338 = vst [vmem:[#allocation2 + $0x48] sm:$0xf] %v321
        %339 = vst [vmem:[#allocation2 + $0x50] sm:$0xf] %v309
        %vm340 = vcmask 44032
        %341 = vst.msk [vmem:[#allocation2 + $0x58] sm:$0xf] %vm340, %v322
        %v342 = vcombine.low %v304, %v304
        %v343 = vcombine.low %v305, %v305
        %v344 = vcombine.low %v306, %v306
        %v345 = vcombine.low %v307, %v307
        %v346 = vcombine.low %v308, %v308
        %v347 = vcombine.low %v309, %v309
        %348 = vrot.lane.b32.xlu0 %v342, 127
        %v349 = vpop.permute.xlu0 %348
        %350 = vrot.lane.b32.xlu0 %v304, 127
        %v351 = vpop.permute.xlu0 %350
        %352 = vrot.lane.b32.xlu0 %v343, 127
        %v353 = vpop.permute.xlu0 %352
        %354 = vrot.lane.b32.xlu0 %v305, 127
        %v355 = vpop.permute.xlu0 %354
        %356 = vrot.lane.b32.xlu0 %v344, 127
        %v357 = vpop.permute.xlu0 %356
        %358 = vrot.lane.b32.xlu0 %v306, 127
        %v359 = vpop.permute.xlu0 %358
        %360 = vrot.lane.b32.xlu0 %v345, 127
        %v361 = vpop.permute.xlu0 %360
        %362 = vrot.lane.b32.xlu0 %v307, 127
        %v363 = vpop.permute.xlu0 %362
        %364 = vrot.lane.b32.xlu0 %v346, 127
        %v365 = vpop.permute.xlu0 %364
        %366 = vrot.lane.b32.xlu0 %v308, 127
        %v367 = vpop.permute.xlu0 %366
        %368 = vrot.lane.b32.xlu0 %v347, 127
        %v369 = vpop.permute.xlu0 %368
        %370 = vrot.lane.b32.xlu0 %v309, 127
        %v371 = vpop.permute.xlu0 %370
        %vm372 = vcmask 1039360
        %v373 = vsel %vm372, %v349, %v351
        %v374 = vsel %vm372, %v351, %v353
        %v375 = vsel %vm372, %v353, %v355
        %v376 = vsel %vm372, %v355, %v357
        %v377 = vsel %vm372, %v357, %v359
        %v378 = vsel %vm372, %v359, %v361
        %v379 = vsel %vm372, %v361, %v363
        %v380 = vsel %vm372, %v363, %v365
        %v381 = vsel %vm372, %v365, %v367
        %v382 = vsel %vm372, %v367, %v369
        %v383 = vsel %vm372, %v369, %v371
        %396 = vst [vmem:[#allocation2] sm:$0xf0] %v373
        %397 = vst [vmem:[#allocation2 + $0x8] sm:$0xf0] %v374
        %398 = vst [vmem:[#allocation2 + $0x10] sm:$0xf0] %v375
        %399 = vst [vmem:[#allocation2 + $0x18] sm:$0xf0] %v376
        %400 = vst [vmem:[#allocation2 + $0x20] sm:$0xf0] %v377
        %401 = vst [vmem:[#allocation2 + $0x28] sm:$0xf0] %v378
        %402 = vst [vmem:[#allocation2 + $0x30] sm:$0xf0] %v379
        %403 = vst [vmem:[#allocation2 + $0x38] sm:$0xf0] %v380
        %404 = vst [vmem:[#allocation2 + $0x40] sm:$0xf0] %v381
        %405 = vst [vmem:[#allocation2 + $0x48] sm:$0xf0] %v382
        %406 = vst [vmem:[#allocation2 + $0x50] sm:$0xf0] %v383
        %vm407 = vcmask 48132
        %408 = vst.msk [vmem:[#allocation2 + $0x58] sm:$0xf0] %vm407, %v371
        %409 = vrot.lane.b32.xlu0 %v304, 126
        %v410 = vpop.permute.xlu0 %409
        %411 = vrot.lane.b32.xlu0 %v317, 126
        %v412 = vpop.permute.xlu0 %411
        %413 = vrot.lane.b32.xlu0 %v305, 126
        %v414 = vpop.permute.xlu0 %413
        %415 = vrot.lane.b32.xlu0 %v318, 126
        %v416 = vpop.permute.xlu0 %415
        %417 = vrot.lane.b32.xlu0 %v306, 126
        %v418 = vpop.permute.xlu0 %417
        %419 = vrot.lane.b32.xlu0 %v319, 126
        %v420 = vpop.permute.xlu0 %419
        %421 = vrot.lane.b32.xlu0 %v307, 126
        %v422 = vpop.permute.xlu0 %421
        %423 = vrot.lane.b32.xlu0 %v320, 126
        %v424 = vpop.permute.xlu0 %423
        %425 = vrot.lane.b32.xlu0 %v308, 126
        %v426 = vpop.permute.xlu0 %425
        %427 = vrot.lane.b32.xlu0 %v321, 126
        %v428 = vpop.permute.xlu0 %427
        %429 = vrot.lane.b32.xlu0 %v309, 126
        %v430 = vpop.permute.xlu0 %429
        %431 = vrot.lane.b32.xlu0 %v322, 126
        %v432 = vpop.permute.xlu0 %431
        %vm433 = vcmask 1031168
        %v434 = vsel %vm433, %v410, %v412
        %v435 = vsel %vm433, %v412, %v414
        %v436 = vsel %vm433, %v414, %v416
        %v437 = vsel %vm433, %v416, %v418
        %v438 = vsel %vm433, %v418, %v420
        %v439 = vsel %vm433, %v420, %v422
        %v440 = vsel %vm433, %v422, %v424
        %v441 = vsel %vm433, %v424, %v426
        %v442 = vsel %vm433, %v426, %v428
        %v443 = vsel %vm433, %v428, %v430
        %v444 = vsel %vm433, %v430, %v432
        %457 = vst [vmem:[#allocation2 + $0x60] sm:$0xf] %v434
        %458 = vst [vmem:[#allocation2 + $0x68] sm:$0xf] %v435
        %459 = vst [vmem:[#allocation2 + $0x70] sm:$0xf] %v436
        %460 = vst [vmem:[#allocation2 + $0x78] sm:$0xf] %v437
        %461 = vst [vmem:[#allocation2 + $0x80] sm:$0xf] %v438
        %462 = vst [vmem:[#allocation2 + $0x88] sm:$0xf] %v439
        %463 = vst [vmem:[#allocation2 + $0x90] sm:$0xf] %v440
        %464 = vst [vmem:[#allocation2 + $0x98] sm:$0xf] %v441
        %465 = vst [vmem:[#allocation2 + $0xa0] sm:$0xf] %v442
        %466 = vst [vmem:[#allocation2 + $0xa8] sm:$0xf] %v443
        %467 = vst [vmem:[#allocation2 + $0xb0] sm:$0xf] %v444
        %468 = vst.msk [vmem:[#allocation2 + $0xb8] sm:$0xf] %vm340, %v432
        %469 = vrot.lane.b32.xlu0 %v342, 116
        %v470 = vpop.permute.xlu0 %469
        %471 = vrot.lane.b32.xlu0 %v304, 116
        %v472 = vpop.permute.xlu0 %471
        %473 = vrot.lane.b32.xlu0 %v343, 116
        %v474 = vpop.permute.xlu0 %473
        %475 = vrot.lane.b32.xlu0 %v305, 116
        %v476 = vpop.permute.xlu0 %475
        %477 = vrot.lane.b32.xlu0 %v344, 116
        %v478 = vpop.permute.xlu0 %477
        %479 = vrot.lane.b32.xlu0 %v306, 116
        %v480 = vpop.permute.xlu0 %479
        %481 = vrot.lane.b32.xlu0 %v345, 116
        %v482 = vpop.permute.xlu0 %481
        %483 = vrot.lane.b32.xlu0 %v307, 116
        %v484 = vpop.permute.xlu0 %483
        %485 = vrot.lane.b32.xlu0 %v346, 116
        %v486 = vpop.permute.xlu0 %485
        %487 = vrot.lane.b32.xlu0 %v308, 116
        %v488 = vpop.permute.xlu0 %487
        %489 = vrot.lane.b32.xlu0 %v347, 116
        %v490 = vpop.permute.xlu0 %489
        %491 = vrot.lane.b32.xlu0 %v309, 116
        %v492 = vpop.permute.xlu0 %491
        %vm493 = vcmask 949248
        %v494 = vsel %vm493, %v470, %v472
        %v495 = vsel %vm493, %v472, %v474
        %v496 = vsel %vm493, %v474, %v476
        %v497 = vsel %vm493, %v476, %v478
        %v498 = vsel %vm493, %v478, %v480
        %v499 = vsel %vm493, %v480, %v482
        %v500 = vsel %vm493, %v482, %v484
        %v501 = vsel %vm493, %v484, %v486
        %v502 = vsel %vm493, %v486, %v488
        %v503 = vsel %vm493, %v488, %v490
        %v504 = vsel %vm493, %v490, %v492
        %517 = vst [vmem:[#allocation2 + $0x60] sm:$0xf0] %v494
        %518 = vst [vmem:[#allocation2 + $0x68] sm:$0xf0] %v495
        %519 = vst [vmem:[#allocation2 + $0x70] sm:$0xf0] %v496
        %520 = vst [vmem:[#allocation2 + $0x78] sm:$0xf0] %v497
        %521 = vst [vmem:[#allocation2 + $0x80] sm:$0xf0] %v498
        %522 = vst [vmem:[#allocation2 + $0x88] sm:$0xf0] %v499
        %523 = vst [vmem:[#allocation2 + $0x90] sm:$0xf0] %v500
        %524 = vst [vmem:[#allocation2 + $0x98] sm:$0xf0] %v501
        %525 = vst [vmem:[#allocation2 + $0xa0] sm:$0xf0] %v502
        %526 = vst [vmem:[#allocation2 + $0xa8] sm:$0xf0] %v503
        %527 = vst [vmem:[#allocation2 + $0xb0] sm:$0xf0] %v504
        %528 = vst.msk [vmem:[#allocation2 + $0xb8] sm:$0xf0] %vm407, %v492
        %529 = vrot.lane.b32.xlu0 %v304, 115
        %v530 = vpop.permute.xlu0 %529
        %531 = vrot.lane.b32.xlu0 %v317, 115
        %v532 = vpop.permute.xlu0 %531
        %533 = vrot.lane.b32.xlu0 %v305, 115
        %v534 = vpop.permute.xlu0 %533
        %535 = vrot.lane.b32.xlu0 %v318, 115
        %v536 = vpop.permute.xlu0 %535
        %537 = vrot.lane.b32.xlu0 %v306, 115
        %v538 = vpop.permute.xlu0 %537
        %539 = vrot.lane.b32.xlu0 %v319, 115
        %v540 = vpop.permute.xlu0 %539
        %541 = vrot.lane.b32.xlu0 %v307, 115
        %v542 = vpop.permute.xlu0 %541
        %543 = vrot.lane.b32.xlu0 %v320, 115
        %v544 = vpop.permute.xlu0 %543
        %545 = vrot.lane.b32.xlu0 %v308, 115
        %v546 = vpop.permute.xlu0 %545
        %547 = vrot.lane.b32.xlu0 %v321, 115
        %v548 = vpop.permute.xlu0 %547
        %549 = vrot.lane.b32.xlu0 %v309, 115
        %v550 = vpop.permute.xlu0 %549
        %551 = vrot.lane.b32.xlu0 %v322, 115
        %v552 = vpop.permute.xlu0 %551
        %vm553 = vcmask 941056
        %v554 = vsel %vm553, %v530, %v532
        %v555 = vsel %vm553, %v532, %v534
        %v556 = vsel %vm553, %v534, %v536
        %v557 = vsel %vm553, %v536, %v538
        %v558 = vsel %vm553, %v538, %v540
        %v559 = vsel %vm553, %v540, %v542
        %v560 = vsel %vm553, %v542, %v544
        %v561 = vsel %vm553, %v544, %v546
        %v562 = vsel %vm553, %v546, %v548
        %v563 = vsel %vm553, %v548, %v550
        %v564 = vsel %vm553, %v550, %v552
        %577 = vst [vmem:[#allocation2 + $0xc0] sm:$0xf] %v554
        %578 = vst [vmem:[#allocation2 + $0xc8] sm:$0xf] %v555
        %579 = vst [vmem:[#allocation2 + $0xd0] sm:$0xf] %v556
        %580 = vst [vmem:[#allocation2 + $0xd8] sm:$0xf] %v557
        %581 = vst [vmem:[#allocation2 + $0xe0] sm:$0xf] %v558
        %582 = vst [vmem:[#allocation2 + $0xe8] sm:$0xf] %v559
        %583 = vst [vmem:[#allocation2 + $0xf0] sm:$0xf] %v560
        %584 = vst [vmem:[#allocation2 + $0xf8] sm:$0xf] %v561
        %585 = vst [vmem:[#allocation2 + $0x100] sm:$0xf] %v562
        %586 = vst [vmem:[#allocation2 + $0x108] sm:$0xf] %v563
        %587 = vst [vmem:[#allocation2 + $0x110] sm:$0xf] %v564
        %588 = vst.msk [vmem:[#allocation2 + $0x118] sm:$0xf] %vm340, %v552
        %589 = vrot.lane.b32.xlu0 %v342, 114
        %v590 = vpop.permute.xlu0 %589
        %591 = vrot.lane.b32.xlu0 %v304, 114
        %v592 = vpop.permute.xlu0 %591
        %593 = vrot.lane.b32.xlu0 %v343, 114
        %v594 = vpop.permute.xlu0 %593
        %595 = vrot.lane.b32.xlu0 %v305, 114
        %v596 = vpop.permute.xlu0 %595
        %597 = vrot.lane.b32.xlu0 %v344, 114
        %v598 = vpop.permute.xlu0 %597
        %599 = vrot.lane.b32.xlu0 %v306, 114
        %v600 = vpop.permute.xlu0 %599
        %601 = vrot.lane.b32.xlu0 %v345, 114
        %v602 = vpop.permute.xlu0 %601
        %603 = vrot.lane.b32.xlu0 %v307, 114
        %v604 = vpop.permute.xlu0 %603
        %605 = vrot.lane.b32.xlu0 %v346, 114
        %v606 = vpop.permute.xlu0 %605
        %607 = vrot.lane.b32.xlu0 %v308, 114
        %v608 = vpop.permute.xlu0 %607
        %609 = vrot.lane.b32.xlu0 %v347, 114
        %v610 = vpop.permute.xlu0 %609
        %611 = vrot.lane.b32.xlu0 %v309, 114
        %v612 = vpop.permute.xlu0 %611
        %vm613 = vcmask 932864
        %v614 = vsel %vm613, %v590, %v592
        %v615 = vsel %vm613, %v592, %v594
        %v616 = vsel %vm613, %v594, %v596
        %v617 = vsel %vm613, %v596, %v598
        %v618 = vsel %vm613, %v598, %v600
        %v619 = vsel %vm613, %v600, %v602
        %v620 = vsel %vm613, %v602, %v604
        %v621 = vsel %vm613, %v604, %v606
        %v622 = vsel %vm613, %v606, %v608
        %v623 = vsel %vm613, %v608, %v610
        %v624 = vsel %vm613, %v610, %v612
        %637 = vst [vmem:[#allocation2 + $0xc0] sm:$0xf0] %v614
        %638 = vst [vmem:[#allocation2 + $0xc8] sm:$0xf0] %v615
        %639 = vst [vmem:[#allocation2 + $0xd0] sm:$0xf0] %v616
        %640 = vst [vmem:[#allocation2 + $0xd8] sm:$0xf0] %v617
        %641 = vst [vmem:[#allocation2 + $0xe0] sm:$0xf0] %v618
        %642 = vst [vmem:[#allocation2 + $0xe8] sm:$0xf0] %v619
        %643 = vst [vmem:[#allocation2 + $0xf0] sm:$0xf0] %v620
        %644 = vst [vmem:[#allocation2 + $0xf8] sm:$0xf0] %v621
        %645 = vst [vmem:[#allocation2 + $0x100] sm:$0xf0] %v622
        %646 = vst [vmem:[#allocation2 + $0x108] sm:$0xf0] %v623
        %647 = vst [vmem:[#allocation2 + $0x110] sm:$0xf0] %v624
        %648 = vst.msk [vmem:[#allocation2 + $0x118] sm:$0xf0] %vm407, %v612
        %649 = vrot.lane.b32.xlu0 %v304, 104
        %v650 = vpop.permute.xlu0 %649
        %651 = vrot.lane.b32.xlu0 %v317, 104
        %v652 = vpop.permute.xlu0 %651
        %653 = vrot.lane.b32.xlu0 %v305, 104
        %v654 = vpop.permute.xlu0 %653
        %655 = vrot.lane.b32.xlu0 %v318, 104
        %v656 = vpop.permute.xlu0 %655
        %657 = vrot.lane.b32.xlu0 %v306, 104
        %v658 = vpop.permute.xlu0 %657
        %659 = vrot.lane.b32.xlu0 %v319, 104
        %v660 = vpop.permute.xlu0 %659
        %661 = vrot.lane.b32.xlu0 %v307, 104
        %v662 = vpop.permute.xlu0 %661
        %663 = vrot.lane.b32.xlu0 %v320, 104
        %v664 = vpop.permute.xlu0 %663
        %665 = vrot.lane.b32.xlu0 %v308, 104
        %v666 = vpop.permute.xlu0 %665
        %667 = vrot.lane.b32.xlu0 %v321, 104
        %v668 = vpop.permute.xlu0 %667
        %669 = vrot.lane.b32.xlu0 %v309, 104
        %v670 = vpop.permute.xlu0 %669
        %671 = vrot.lane.b32.xlu0 %v322, 104
        %v672 = vpop.permute.xlu0 %671
        %vm673 = vcmask 850944
        %v674 = vsel %vm673, %v650, %v652
        %v675 = vsel %vm673, %v652, %v654
        %v676 = vsel %vm673, %v654, %v656
        %v677 = vsel %vm673, %v656, %v658
        %v678 = vsel %vm673, %v658, %v660
        %v679 = vsel %vm673, %v660, %v662
        %v680 = vsel %vm673, %v662, %v664
        %v681 = vsel %vm673, %v664, %v666
        %v682 = vsel %vm673, %v666, %v668
        %v683 = vsel %vm673, %v668, %v670
        %v684 = vsel %vm673, %v670, %v672
        %697 = vst [vmem:[#allocation2 + $0x120] sm:$0xf] %v674
        %698 = vst [vmem:[#allocation2 + $0x128] sm:$0xf] %v675
        %699 = vst [vmem:[#allocation2 + $0x130] sm:$0xf] %v676
        %700 = vst [vmem:[#allocation2 + $0x138] sm:$0xf] %v677
        %701 = vst [vmem:[#allocation2 + $0x140] sm:$0xf] %v678
        %702 = vst [vmem:[#allocation2 + $0x148] sm:$0xf] %v679
        %703 = vst [vmem:[#allocation2 + $0x150] sm:$0xf] %v680
        %704 = vst [vmem:[#allocation2 + $0x158] sm:$0xf] %v681
        %705 = vst [vmem:[#allocation2 + $0x160] sm:$0xf] %v682
        %706 = vst [vmem:[#allocation2 + $0x168] sm:$0xf] %v683
        %707 = vst [vmem:[#allocation2 + $0x170] sm:$0xf] %v684
        %708 = vst.msk [vmem:[#allocation2 + $0x178] sm:$0xf] %vm340, %v672
        %709 = vrot.lane.b32.xlu0 %v342, 103
        %v710 = vpop.permute.xlu0 %709
        %711 = vrot.lane.b32.xlu0 %v304, 103
        %v712 = vpop.permute.xlu0 %711
        %713 = vrot.lane.b32.xlu0 %v343, 103
        %v714 = vpop.permute.xlu0 %713
        %715 = vrot.lane.b32.xlu0 %v305, 103
        %v716 = vpop.permute.xlu0 %715
        %717 = vrot.lane.b32.xlu0 %v344, 103
        %v718 = vpop.permute.xlu0 %717
        %719 = vrot.lane.b32.xlu0 %v306, 103
        %v720 = vpop.permute.xlu0 %719
        %721 = vrot.lane.b32.xlu0 %v345, 103
        %v722 = vpop.permute.xlu0 %721
        %723 = vrot.lane.b32.xlu0 %v307, 103
        %v724 = vpop.permute.xlu0 %723
        %725 = vrot.lane.b32.xlu0 %v346, 103
        %v726 = vpop.permute.xlu0 %725
        %727 = vrot.lane.b32.xlu0 %v308, 103
        %v728 = vpop.permute.xlu0 %727
        %729 = vrot.lane.b32.xlu0 %v347, 103
        %v730 = vpop.permute.xlu0 %729
        %731 = vrot.lane.b32.xlu0 %v309, 103
        %v732 = vpop.permute.xlu0 %731
        %vm733 = vcmask 842752
        %v734 = vsel %vm733, %v710, %v712
        %v735 = vsel %vm733, %v712, %v714
        %v736 = vsel %vm733, %v714, %v716
        %v737 = vsel %vm733, %v716, %v718
        %v738 = vsel %vm733, %v718, %v720
        %v739 = vsel %vm733, %v720, %v722
        %v740 = vsel %vm733, %v722, %v724
        %v741 = vsel %vm733, %v724, %v726
        %v742 = vsel %vm733, %v726, %v728
        %v743 = vsel %vm733, %v728, %v730
        %v744 = vsel %vm733, %v730, %v732
        %757 = vst [vmem:[#allocation2 + $0x120] sm:$0xf0] %v734
        %758 = vst [vmem:[#allocation2 + $0x128] sm:$0xf0] %v735
        %759 = vst [vmem:[#allocation2 + $0x130] sm:$0xf0] %v736
        %760 = vst [vmem:[#allocation2 + $0x138] sm:$0xf0] %v737
        %761 = vst [vmem:[#allocation2 + $0x140] sm:$0xf0] %v738
        %762 = vst [vmem:[#allocation2 + $0x148] sm:$0xf0] %v739
        %763 = vst [vmem:[#allocation2 + $0x150] sm:$0xf0] %v740
        %764 = vst [vmem:[#allocation2 + $0x158] sm:$0xf0] %v741
        %765 = vst [vmem:[#allocation2 + $0x160] sm:$0xf0] %v742
        %766 = vst [vmem:[#allocation2 + $0x168] sm:$0xf0] %v743
        %767 = vst [vmem:[#allocation2 + $0x170] sm:$0xf0] %v744
        %768 = vst.msk [vmem:[#allocation2 + $0x178] sm:$0xf0] %vm407, %v732
        %769 = vrot.lane.b32.xlu0 %v304, 102
        %v770 = vpop.permute.xlu0 %769
        %771 = vrot.lane.b32.xlu0 %v317, 102
        %v772 = vpop.permute.xlu0 %771
        %773 = vrot.lane.b32.xlu0 %v305, 102
        %v774 = vpop.permute.xlu0 %773
        %775 = vrot.lane.b32.xlu0 %v318, 102
        %v776 = vpop.permute.xlu0 %775
        %777 = vrot.lane.b32.xlu0 %v306, 102
        %v778 = vpop.permute.xlu0 %777
        %779 = vrot.lane.b32.xlu0 %v319, 102
        %v780 = vpop.permute.xlu0 %779
        %781 = vrot.lane.b32.xlu0 %v307, 102
        %v782 = vpop.permute.xlu0 %781
        %783 = vrot.lane.b32.xlu0 %v320, 102
        %v784 = vpop.permute.xlu0 %783
        %785 = vrot.lane.b32.xlu0 %v308, 102
        %v786 = vpop.permute.xlu0 %785
        %787 = vrot.lane.b32.xlu0 %v321, 102
        %v788 = vpop.permute.xlu0 %787
        %789 = vrot.lane.b32.xlu0 %v309, 102
        %v790 = vpop.permute.xlu0 %789
        %791 = vrot.lane.b32.xlu0 %v322, 102
        %v792 = vpop.permute.xlu0 %791
        %vm793 = vcmask 834560
        %v794 = vsel %vm793, %v770, %v772
        %v795 = vsel %vm793, %v772, %v774
        %v796 = vsel %vm793, %v774, %v776
        %v797 = vsel %vm793, %v776, %v778
        %v798 = vsel %vm793, %v778, %v780
        %v799 = vsel %vm793, %v780, %v782
        %v800 = vsel %vm793, %v782, %v784
        %v801 = vsel %vm793, %v784, %v786
        %v802 = vsel %vm793, %v786, %v788
        %v803 = vsel %vm793, %v788, %v790
        %v804 = vsel %vm793, %v790, %v792
        %817 = vst [vmem:[#allocation2 + $0x180] sm:$0xf] %v794
        %818 = vst [vmem:[#allocation2 + $0x188] sm:$0xf] %v795
        %819 = vst [vmem:[#allocation2 + $0x190] sm:$0xf] %v796
        %820 = vst [vmem:[#allocation2 + $0x198] sm:$0xf] %v797
        %821 = vst [vmem:[#allocation2 + $0x1a0] sm:$0xf] %v798
        %822 = vst [vmem:[#allocation2 + $0x1a8] sm:$0xf] %v799
        %823 = vst [vmem:[#allocation2 + $0x1b0] sm:$0xf] %v800
        %824 = vst [vmem:[#allocation2 + $0x1b8] sm:$0xf] %v801
        %825 = vst [vmem:[#allocation2 + $0x1c0] sm:$0xf] %v802
        %826 = vst [vmem:[#allocation2 + $0x1c8] sm:$0xf] %v803
        %827 = vst [vmem:[#allocation2 + $0x1d0] sm:$0xf] %v804
        %828 = vst.msk [vmem:[#allocation2 + $0x1d8] sm:$0xf] %vm340, %v792
        %v830 = vcombine.low %v310, %v310
        %831 = vrot.lane.b32.xlu0 %v304, 112
        %v832 = vpop.permute.xlu0 %831
        %833 = vrot.lane.b32.xlu0 %v343, 112
        %v834 = vpop.permute.xlu0 %833
        %835 = vrot.lane.b32.xlu0 %v305, 112
        %v836 = vpop.permute.xlu0 %835
        %837 = vrot.lane.b32.xlu0 %v344, 112
        %v838 = vpop.permute.xlu0 %837
        %839 = vrot.lane.b32.xlu0 %v306, 112
        %v840 = vpop.permute.xlu0 %839
        %841 = vrot.lane.b32.xlu0 %v345, 112
        %v842 = vpop.permute.xlu0 %841
        %843 = vrot.lane.b32.xlu0 %v307, 112
        %v844 = vpop.permute.xlu0 %843
        %845 = vrot.lane.b32.xlu0 %v346, 112
        %v846 = vpop.permute.xlu0 %845
        %847 = vrot.lane.b32.xlu0 %v308, 112
        %v848 = vpop.permute.xlu0 %847
        %849 = vrot.lane.b32.xlu0 %v347, 112
        %v850 = vpop.permute.xlu0 %849
        %851 = vrot.lane.b32.xlu0 %v309, 112
        %v852 = vpop.permute.xlu0 %851
        %853 = vrot.lane.b32.xlu0 %v830, 112
        %v854 = vpop.permute.xlu0 %853
        %vm855 = vcmask 916480
        %v856 = vsel %vm855, %v832, %v834
        %v857 = vsel %vm855, %v834, %v836
        %v858 = vsel %vm855, %v836, %v838
        %v859 = vsel %vm855, %v838, %v840
        %v860 = vsel %vm855, %v840, %v842
        %v861 = vsel %vm855, %v842, %v844
        %v862 = vsel %vm855, %v844, %v846
        %v863 = vsel %vm855, %v846, %v848
        %v864 = vsel %vm855, %v848, %v850
        %v865 = vsel %vm855, %v850, %v852
        %v866 = vsel %vm855, %v852, %v854
        %879 = vst [vmem:[#allocation2 + $0x180] sm:$0xf0] %v856
        %880 = vst [vmem:[#allocation2 + $0x188] sm:$0xf0] %v857
        %881 = vst [vmem:[#allocation2 + $0x190] sm:$0xf0] %v858
        %882 = vst [vmem:[#allocation2 + $0x198] sm:$0xf0] %v859
        %883 = vst [vmem:[#allocation2 + $0x1a0] sm:$0xf0] %v860
        %884 = vst [vmem:[#allocation2 + $0x1a8] sm:$0xf0] %v861
        %885 = vst [vmem:[#allocation2 + $0x1b0] sm:$0xf0] %v862
        %886 = vst [vmem:[#allocation2 + $0x1b8] sm:$0xf0] %v863
        %887 = vst [vmem:[#allocation2 + $0x1c0] sm:$0xf0] %v864
        %888 = vst [vmem:[#allocation2 + $0x1c8] sm:$0xf0] %v865
        %889 = vst [vmem:[#allocation2 + $0x1d0] sm:$0xf0] %v866
        %890 = vst.msk [vmem:[#allocation2 + $0x1d8] sm:$0xf0] %vm407, %v854
        %891 = vrot.lane.b32.xlu0 %v317, 111
        %v892 = vpop.permute.xlu0 %891
        %893 = vrot.lane.b32.xlu0 %v305, 111
        %v894 = vpop.permute.xlu0 %893
        %895 = vrot.lane.b32.xlu0 %v318, 111
        %v896 = vpop.permute.xlu0 %895
        %897 = vrot.lane.b32.xlu0 %v306, 111
        %v898 = vpop.permute.xlu0 %897
        %899 = vrot.lane.b32.xlu0 %v319, 111
        %v900 = vpop.permute.xlu0 %899
        %901 = vrot.lane.b32.xlu0 %v307, 111
        %v902 = vpop.permute.xlu0 %901
        %903 = vrot.lane.b32.xlu0 %v320, 111
        %v904 = vpop.permute.xlu0 %903
        %905 = vrot.lane.b32.xlu0 %v308, 111
        %v906 = vpop.permute.xlu0 %905
        %907 = vrot.lane.b32.xlu0 %v321, 111
        %v908 = vpop.permute.xlu0 %907
        %909 = vrot.lane.b32.xlu0 %v309, 111
        %v910 = vpop.permute.xlu0 %909
        %911 = vrot.lane.b32.xlu0 %v322, 111
        %v912 = vpop.permute.xlu0 %911
        %913 = vrot.lane.b32.xlu0 %v310, 111
        %v914 = vpop.permute.xlu0 %913
        %vm915 = vcmask 908288
        %v916 = vsel %vm915, %v892, %v894
        %v917 = vsel %vm915, %v894, %v896
        %v918 = vsel %vm915, %v896, %v898
        %v919 = vsel %vm915, %v898, %v900
        %v920 = vsel %vm915, %v900, %v902
        %v921 = vsel %vm915, %v902, %v904
        %v922 = vsel %vm915, %v904, %v906
        %v923 = vsel %vm915, %v906, %v908
        %v924 = vsel %vm915, %v908, %v910
        %v925 = vsel %vm915, %v910, %v912
        %v926 = vsel %vm915, %v912, %v914
        %939 = vst [vmem:[#allocation2 + $0x1e0] sm:$0xf] %v916
        %940 = vst [vmem:[#allocation2 + $0x1e8] sm:$0xf] %v917
        %941 = vst [vmem:[#allocation2 + $0x1f0] sm:$0xf] %v918
        %942 = vst [vmem:[#allocation2 + $0x1f8] sm:$0xf] %v919
        %943 = vst [vmem:[#allocation2 + $0x200] sm:$0xf] %v920
        %944 = vst [vmem:[#allocation2 + $0x208] sm:$0xf] %v921
        %945 = vst [vmem:[#allocation2 + $0x210] sm:$0xf] %v922
        %946 = vst [vmem:[#allocation2 + $0x218] sm:$0xf] %v923
        %947 = vst [vmem:[#allocation2 + $0x220] sm:$0xf] %v924
        %948 = vst [vmem:[#allocation2 + $0x228] sm:$0xf] %v925
        %949 = vst [vmem:[#allocation2 + $0x230] sm:$0xf] %v926
        %950 = vst.msk [vmem:[#allocation2 + $0x238] sm:$0xf] %vm340, %v914
        %951 = vrot.lane.b32.xlu0 %v304, 110
        %v952 = vpop.permute.xlu0 %951
        %953 = vrot.lane.b32.xlu0 %v343, 110
        %v954 = vpop.permute.xlu0 %953
        %955 = vrot.lane.b32.xlu0 %v305, 110
        %v956 = vpop.permute.xlu0 %955
        %957 = vrot.lane.b32.xlu0 %v344, 110
        %v958 = vpop.permute.xlu0 %957
        %959 = vrot.lane.b32.xlu0 %v306, 110
        %v960 = vpop.permute.xlu0 %959
        %961 = vrot.lane.b32.xlu0 %v345, 110
        %v962 = vpop.permute.xlu0 %961
        %963 = vrot.lane.b32.xlu0 %v307, 110
        %v964 = vpop.permute.xlu0 %963
        %965 = vrot.lane.b32.xlu0 %v346, 110
        %v966 = vpop.permute.xlu0 %965
        %967 = vrot.lane.b32.xlu0 %v308, 110
        %v968 = vpop.permute.xlu0 %967
        %969 = vrot.lane.b32.xlu0 %v347, 110
        %v970 = vpop.permute.xlu0 %969
        %971 = vrot.lane.b32.xlu0 %v309, 110
        %v972 = vpop.permute.xlu0 %971
        %973 = vrot.lane.b32.xlu0 %v830, 110
        %v974 = vpop.permute.xlu0 %973
        %vm975 = vcmask 900096
        %v976 = vsel %vm975, %v952, %v954
        %v977 = vsel %vm975, %v954, %v956
        %v978 = vsel %vm975, %v956, %v958
        %v979 = vsel %vm975, %v958, %v960
        %v980 = vsel %vm975, %v960, %v962
        %v981 = vsel %vm975, %v962, %v964
        %v982 = vsel %vm975, %v964, %v966
        %v983 = vsel %vm975, %v966, %v968
        %v984 = vsel %vm975, %v968, %v970
        %v985 = vsel %vm975, %v970, %v972
        %v986 = vsel %vm975, %v972, %v974
        %999 = vst [vmem:[#allocation2 + $0x1e0] sm:$0xf0] %v976
        %1000 = vst [vmem:[#allocation2 + $0x1e8] sm:$0xf0] %v977
        %1001 = vst [vmem:[#allocation2 + $0x1f0] sm:$0xf0] %v978
        %1002 = vst [vmem:[#allocation2 + $0x1f8] sm:$0xf0] %v979
        %1003 = vst [vmem:[#allocation2 + $0x200] sm:$0xf0] %v980
        %1004 = vst [vmem:[#allocation2 + $0x208] sm:$0xf0] %v981
        %1005 = vst [vmem:[#allocation2 + $0x210] sm:$0xf0] %v982
        %1006 = vst [vmem:[#allocation2 + $0x218] sm:$0xf0] %v983
        %1007 = vst [vmem:[#allocation2 + $0x220] sm:$0xf0] %v984
        %1008 = vst [vmem:[#allocation2 + $0x228] sm:$0xf0] %v985
        %1009 = vst [vmem:[#allocation2 + $0x230] sm:$0xf0] %v986
        %1010 = vst.msk [vmem:[#allocation2 + $0x238] sm:$0xf0] %vm407, %v974
        %1011 = vrot.lane.b32.xlu0 %v317, 100
        %v1012 = vpop.permute.xlu0 %1011
        %1013 = vrot.lane.b32.xlu0 %v305, 100
        %v1014 = vpop.permute.xlu0 %1013
        %1015 = vrot.lane.b32.xlu0 %v318, 100
        %v1016 = vpop.permute.xlu0 %1015
        %1017 = vrot.lane.b32.xlu0 %v306, 100
        %v1018 = vpop.permute.xlu0 %1017
        %1019 = vrot.lane.b32.xlu0 %v319, 100
        %v1020 = vpop.permute.xlu0 %1019
        %1021 = vrot.lane.b32.xlu0 %v307, 100
        %v1022 = vpop.permute.xlu0 %1021
        %1023 = vrot.lane.b32.xlu0 %v320, 100
        %v1024 = vpop.permute.xlu0 %1023
        %1025 = vrot.lane.b32.xlu0 %v308, 100
        %v1026 = vpop.permute.xlu0 %1025
        %1027 = vrot.lane.b32.xlu0 %v321, 100
        %v1028 = vpop.permute.xlu0 %1027
        %1029 = vrot.lane.b32.xlu0 %v309, 100
        %v1030 = vpop.permute.xlu0 %1029
        %1031 = vrot.lane.b32.xlu0 %v322, 100
        %v1032 = vpop.permute.xlu0 %1031
        %1033 = vrot.lane.b32.xlu0 %v310, 100
        %v1034 = vpop.permute.xlu0 %1033
        %vm1035 = vcmask 818176
        %v1036 = vsel %vm1035, %v1012, %v1014
        %v1037 = vsel %vm1035, %v1014, %v1016
        %v1038 = vsel %vm1035, %v1016, %v1018
        %v1039 = vsel %vm1035, %v1018, %v1020
        %v1040 = vsel %vm1035, %v1020, %v1022
        %v1041 = vsel %vm1035, %v1022, %v1024
        %v1042 = vsel %vm1035, %v1024, %v1026
        %v1043 = vsel %vm1035, %v1026, %v1028
        %v1044 = vsel %vm1035, %v1028, %v1030
        %v1045 = vsel %vm1035, %v1030, %v1032
        %v1046 = vsel %vm1035, %v1032, %v1034
        %1059 = vst [vmem:[#allocation2 + $0x240] sm:$0xf] %v1036
        %1060 = vst [vmem:[#allocation2 + $0x248] sm:$0xf] %v1037
        %1061 = vst [vmem:[#allocation2 + $0x250] sm:$0xf] %v1038
        %1062 = vst [vmem:[#allocation2 + $0x258] sm:$0xf] %v1039
        %1063 = vst [vmem:[#allocation2 + $0x260] sm:$0xf] %v1040
        %1064 = vst [vmem:[#allocation2 + $0x268] sm:$0xf] %v1041
        %1065 = vst [vmem:[#allocation2 + $0x270] sm:$0xf] %v1042
        %1066 = vst [vmem:[#allocation2 + $0x278] sm:$0xf] %v1043
        %1067 = vst [vmem:[#allocation2 + $0x280] sm:$0xf] %v1044
        %1068 = vst [vmem:[#allocation2 + $0x288] sm:$0xf] %v1045
        %1069 = vst [vmem:[#allocation2 + $0x290] sm:$0xf] %v1046
        %1070 = vst.msk [vmem:[#allocation2 + $0x298] sm:$0xf] %vm340, %v1034
        %1071 = vrot.lane.b32.xlu0 %v304, 99
        %v1072 = vpop.permute.xlu0 %1071
        %1073 = vrot.lane.b32.xlu0 %v343, 99
        %v1074 = vpop.permute.xlu0 %1073
        %1075 = vrot.lane.b32.xlu0 %v305, 99
        %v1076 = vpop.permute.xlu0 %1075
        %1077 = vrot.lane.b32.xlu0 %v344, 99
        %v1078 = vpop.permute.xlu0 %1077
        %1079 = vrot.lane.b32.xlu0 %v306, 99
        %v1080 = vpop.permute.xlu0 %1079
        %1081 = vrot.lane.b32.xlu0 %v345, 99
        %v1082 = vpop.permute.xlu0 %1081
        %1083 = vrot.lane.b32.xlu0 %v307, 99
        %v1084 = vpop.permute.xlu0 %1083
        %1085 = vrot.lane.b32.xlu0 %v346, 99
        %v1086 = vpop.permute.xlu0 %1085
        %1087 = vrot.lane.b32.xlu0 %v308, 99
        %v1088 = vpop.permute.xlu0 %1087
        %1089 = vrot.lane.b32.xlu0 %v347, 99
        %v1090 = vpop.permute.xlu0 %1089
        %1091 = vrot.lane.b32.xlu0 %v309, 99
        %v1092 = vpop.permute.xlu0 %1091
        %1093 = vrot.lane.b32.xlu0 %v830, 99
        %v1094 = vpop.permute.xlu0 %1093
        %vm1095 = vcmask 809984
        %v1096 = vsel %vm1095, %v1072, %v1074
        %v1097 = vsel %vm1095, %v1074, %v1076
        %v1098 = vsel %vm1095, %v1076, %v1078
        %v1099 = vsel %vm1095, %v1078, %v1080
        %v1100 = vsel %vm1095, %v1080, %v1082
        %v1101 = vsel %vm1095, %v1082, %v1084
        %v1102 = vsel %vm1095, %v1084, %v1086
        %v1103 = vsel %vm1095, %v1086, %v1088
        %v1104 = vsel %vm1095, %v1088, %v1090
        %v1105 = vsel %vm1095, %v1090, %v1092
        %v1106 = vsel %vm1095, %v1092, %v1094
        %1119 = vst [vmem:[#allocation2 + $0x240] sm:$0xf0] %v1096
        %1120 = vst [vmem:[#allocation2 + $0x248] sm:$0xf0] %v1097
        %1121 = vst [vmem:[#allocation2 + $0x250] sm:$0xf0] %v1098
        %1122 = vst [vmem:[#allocation2 + $0x258] sm:$0xf0] %v1099
        %1123 = vst [vmem:[#allocation2 + $0x260] sm:$0xf0] %v1100
        %1124 = vst [vmem:[#allocation2 + $0x268] sm:$0xf0] %v1101
        %1125 = vst [vmem:[#allocation2 + $0x270] sm:$0xf0] %v1102
        %1126 = vst [vmem:[#allocation2 + $0x278] sm:$0xf0] %v1103
        %1127 = vst [vmem:[#allocation2 + $0x280] sm:$0xf0] %v1104
        %1128 = vst [vmem:[#allocation2 + $0x288] sm:$0xf0] %v1105
        %1129 = vst [vmem:[#allocation2 + $0x290] sm:$0xf0] %v1106
        %1130 = vst.msk [vmem:[#allocation2 + $0x298] sm:$0xf0] %vm407, %v1094
        %1131 = vrot.lane.b32.xlu0 %v317, 98
        %v1132 = vpop.permute.xlu0 %1131
        %1133 = vrot.lane.b32.xlu0 %v305, 98
        %v1134 = vpop.permute.xlu0 %1133
        %1135 = vrot.lane.b32.xlu0 %v318, 98
        %v1136 = vpop.permute.xlu0 %1135
        %1137 = vrot.lane.b32.xlu0 %v306, 98
        %v1138 = vpop.permute.xlu0 %1137
        %1139 = vrot.lane.b32.xlu0 %v319, 98
        %v1140 = vpop.permute.xlu0 %1139
        %1141 = vrot.lane.b32.xlu0 %v307, 98
        %v1142 = vpop.permute.xlu0 %1141
        %1143 = vrot.lane.b32.xlu0 %v320, 98
        %v1144 = vpop.permute.xlu0 %1143
        %1145 = vrot.lane.b32.xlu0 %v308, 98
        %v1146 = vpop.permute.xlu0 %1145
        %1147 = vrot.lane.b32.xlu0 %v321, 98
        %v1148 = vpop.permute.xlu0 %1147
        %1149 = vrot.lane.b32.xlu0 %v309, 98
        %v1150 = vpop.permute.xlu0 %1149
        %1151 = vrot.lane.b32.xlu0 %v322, 98
        %v1152 = vpop.permute.xlu0 %1151
        %1153 = vrot.lane.b32.xlu0 %v310, 98
        %v1154 = vpop.permute.xlu0 %1153
        %vm1155 = vcmask 801792
        %v1156 = vsel %vm1155, %v1132, %v1134
        %v1157 = vsel %vm1155, %v1134, %v1136
        %v1158 = vsel %vm1155, %v1136, %v1138
        %v1159 = vsel %vm1155, %v1138, %v1140
        %v1160 = vsel %vm1155, %v1140, %v1142
        %v1161 = vsel %vm1155, %v1142, %v1144
        %v1162 = vsel %vm1155, %v1144, %v1146
        %v1163 = vsel %vm1155, %v1146, %v1148
        %v1164 = vsel %vm1155, %v1148, %v1150
        %v1165 = vsel %vm1155, %v1150, %v1152
        %v1166 = vsel %vm1155, %v1152, %v1154
        %1179 = vst [vmem:[#allocation2 + $0x2a0] sm:$0xf] %v1156
        %1180 = vst [vmem:[#allocation2 + $0x2a8] sm:$0xf] %v1157
        %1181 = vst [vmem:[#allocation2 + $0x2b0] sm:$0xf] %v1158
        %1182 = vst [vmem:[#allocation2 + $0x2b8] sm:$0xf] %v1159
        %1183 = vst [vmem:[#allocation2 + $0x2c0] sm:$0xf] %v1160
        %1184 = vst [vmem:[#allocation2 + $0x2c8] sm:$0xf] %v1161
        %1185 = vst [vmem:[#allocation2 + $0x2d0] sm:$0xf] %v1162
        %1186 = vst [vmem:[#allocation2 + $0x2d8] sm:$0xf] %v1163
        %1187 = vst [vmem:[#allocation2 + $0x2e0] sm:$0xf] %v1164
        %1188 = vst [vmem:[#allocation2 + $0x2e8] sm:$0xf] %v1165
        %1189 = vst [vmem:[#allocation2 + $0x2f0] sm:$0xf] %v1166
        %1190 = vst.msk [vmem:[#allocation2 + $0x2f8] sm:$0xf] %vm340, %v1154
        %1191 = vrot.lane.b32.xlu0 %v304, 88
        %v1192 = vpop.permute.xlu0 %1191
        %1193 = vrot.lane.b32.xlu0 %v343, 88
        %v1194 = vpop.permute.xlu0 %1193
        %1195 = vrot.lane.b32.xlu0 %v305, 88
        %v1196 = vpop.permute.xlu0 %1195
        %1197 = vrot.lane.b32.xlu0 %v344, 88
        %v1198 = vpop.permute.xlu0 %1197
        %1199 = vrot.lane.b32.xlu0 %v306, 88
        %v1200 = vpop.permute.xlu0 %1199
        %1201 = vrot.lane.b32.xlu0 %v345, 88
        %v1202 = vpop.permute.xlu0 %1201
        %1203 = vrot.lane.b32.xlu0 %v307, 88
        %v1204 = vpop.permute.xlu0 %1203
        %1205 = vrot.lane.b32.xlu0 %v346, 88
        %v1206 = vpop.permute.xlu0 %1205
        %1207 = vrot.lane.b32.xlu0 %v308, 88
        %v1208 = vpop.permute.xlu0 %1207
        %1209 = vrot.lane.b32.xlu0 %v347, 88
        %v1210 = vpop.permute.xlu0 %1209
        %1211 = vrot.lane.b32.xlu0 %v309, 88
        %v1212 = vpop.permute.xlu0 %1211
        %1213 = vrot.lane.b32.xlu0 %v830, 88
        %v1214 = vpop.permute.xlu0 %1213
        %vm1215 = vcmask 719872
        %v1216 = vsel %vm1215, %v1192, %v1194
        %v1217 = vsel %vm1215, %v1194, %v1196
        %v1218 = vsel %vm1215, %v1196, %v1198
        %v1219 = vsel %vm1215, %v1198, %v1200
        %v1220 = vsel %vm1215, %v1200, %v1202
        %v1221 = vsel %vm1215, %v1202, %v1204
        %v1222 = vsel %vm1215, %v1204, %v1206
        %v1223 = vsel %vm1215, %v1206, %v1208
        %v1224 = vsel %vm1215, %v1208, %v1210
        %v1225 = vsel %vm1215, %v1210, %v1212
        %v1226 = vsel %vm1215, %v1212, %v1214
        %1239 = vst [vmem:[#allocation2 + $0x2a0] sm:$0xf0] %v1216
        %1240 = vst [vmem:[#allocation2 + $0x2a8] sm:$0xf0] %v1217
        %1241 = vst [vmem:[#allocation2 + $0x2b0] sm:$0xf0] %v1218
        %1242 = vst [vmem:[#allocation2 + $0x2b8] sm:$0xf0] %v1219
        %1243 = vst [vmem:[#allocation2 + $0x2c0] sm:$0xf0] %v1220
        %1244 = vst [vmem:[#allocation2 + $0x2c8] sm:$0xf0] %v1221
        %1245 = vst [vmem:[#allocation2 + $0x2d0] sm:$0xf0] %v1222
        %1246 = vst [vmem:[#allocation2 + $0x2d8] sm:$0xf0] %v1223
        %1247 = vst [vmem:[#allocation2 + $0x2e0] sm:$0xf0] %v1224
        %1248 = vst [vmem:[#allocation2 + $0x2e8] sm:$0xf0] %v1225
        %1249 = vst [vmem:[#allocation2 + $0x2f0] sm:$0xf0] %v1226
        %1250 = vst.msk [vmem:[#allocation2 + $0x2f8] sm:$0xf0] %vm407, %v1214
        %1251 = vrot.lane.b32.xlu0 %v317, 87
        %v1252 = vpop.permute.xlu0 %1251
        %1253 = vrot.lane.b32.xlu0 %v305, 87
        %v1254 = vpop.permute.xlu0 %1253
        %1255 = vrot.lane.b32.xlu0 %v318, 87
        %v1256 = vpop.permute.xlu0 %1255
        %1257 = vrot.lane.b32.xlu0 %v306, 87
        %v1258 = vpop.permute.xlu0 %1257
        %1259 = vrot.lane.b32.xlu0 %v319, 87
        %v1260 = vpop.permute.xlu0 %1259
        %1261 = vrot.lane.b32.xlu0 %v307, 87
        %v1262 = vpop.permute.xlu0 %1261
        %1263 = vrot.lane.b32.xlu0 %v320, 87
        %v1264 = vpop.permute.xlu0 %1263
        %1265 = vrot.lane.b32.xlu0 %v308, 87
        %v1266 = vpop.permute.xlu0 %1265
        %1267 = vrot.lane.b32.xlu0 %v321, 87
        %v1268 = vpop.permute.xlu0 %1267
        %1269 = vrot.lane.b32.xlu0 %v309, 87
        %v1270 = vpop.permute.xlu0 %1269
        %1271 = vrot.lane.b32.xlu0 %v322, 87
        %v1272 = vpop.permute.xlu0 %1271
        %1273 = vrot.lane.b32.xlu0 %v310, 87
        %v1274 = vpop.permute.xlu0 %1273
        %vm1275 = vcmask 711680
        %v1276 = vsel %vm1275, %v1252, %v1254
        %v1277 = vsel %vm1275, %v1254, %v1256
        %v1278 = vsel %vm1275, %v1256, %v1258
        %v1279 = vsel %vm1275, %v1258, %v1260
        %v1280 = vsel %vm1275, %v1260, %v1262
        %v1281 = vsel %vm1275, %v1262, %v1264
        %v1282 = vsel %vm1275, %v1264, %v1266
        %v1283 = vsel %vm1275, %v1266, %v1268
        %v1284 = vsel %vm1275, %v1268, %v1270
        %v1285 = vsel %vm1275, %v1270, %v1272
        %v1286 = vsel %vm1275, %v1272, %v1274
        %1299 = vst [vmem:[#allocation2 + $0x300] sm:$0xf] %v1276
        %1300 = vst [vmem:[#allocation2 + $0x308] sm:$0xf] %v1277
        %1301 = vst [vmem:[#allocation2 + $0x310] sm:$0xf] %v1278
        %1302 = vst [vmem:[#allocation2 + $0x318] sm:$0xf] %v1279
        %1303 = vst [vmem:[#allocation2 + $0x320] sm:$0xf] %v1280
        %1304 = vst [vmem:[#allocation2 + $0x328] sm:$0xf] %v1281
        %1305 = vst [vmem:[#allocation2 + $0x330] sm:$0xf] %v1282
        %1306 = vst [vmem:[#allocation2 + $0x338] sm:$0xf] %v1283
        %1307 = vst [vmem:[#allocation2 + $0x340] sm:$0xf] %v1284
        %1308 = vst [vmem:[#allocation2 + $0x348] sm:$0xf] %v1285
        %1309 = vst [vmem:[#allocation2 + $0x350] sm:$0xf] %v1286
        %1310 = vst.msk [vmem:[#allocation2 + $0x358] sm:$0xf] %vm340, %v1274
        %1311 = vrot.lane.b32.xlu0 %v304, 86
        %v1312 = vpop.permute.xlu0 %1311
        %1313 = vrot.lane.b32.xlu0 %v343, 86
        %v1314 = vpop.permute.xlu0 %1313
        %1315 = vrot.lane.b32.xlu0 %v305, 86
        %v1316 = vpop.permute.xlu0 %1315
        %1317 = vrot.lane.b32.xlu0 %v344, 86
        %v1318 = vpop.permute.xlu0 %1317
        %1319 = vrot.lane.b32.xlu0 %v306, 86
        %v1320 = vpop.permute.xlu0 %1319
        %1321 = vrot.lane.b32.xlu0 %v345, 86
        %v1322 = vpop.permute.xlu0 %1321
        %1323 = vrot.lane.b32.xlu0 %v307, 86
        %v1324 = vpop.permute.xlu0 %1323
        %1325 = vrot.lane.b32.xlu0 %v346, 86
        %v1326 = vpop.permute.xlu0 %1325
        %1327 = vrot.lane.b32.xlu0 %v308, 86
        %v1328 = vpop.permute.xlu0 %1327
        %1329 = vrot.lane.b32.xlu0 %v347, 86
        %v1330 = vpop.permute.xlu0 %1329
        %1331 = vrot.lane.b32.xlu0 %v309, 86
        %v1332 = vpop.permute.xlu0 %1331
        %1333 = vrot.lane.b32.xlu0 %v830, 86
        %v1334 = vpop.permute.xlu0 %1333
        %vm1335 = vcmask 703488
        %v1336 = vsel %vm1335, %v1312, %v1314
        %v1337 = vsel %vm1335, %v1314, %v1316
        %v1338 = vsel %vm1335, %v1316, %v1318
        %v1339 = vsel %vm1335, %v1318, %v1320
        %v1340 = vsel %vm1335, %v1320, %v1322
        %v1341 = vsel %vm1335, %v1322, %v1324
        %v1342 = vsel %vm1335, %v1324, %v1326
        %v1343 = vsel %vm1335, %v1326, %v1328
        %v1344 = vsel %vm1335, %v1328, %v1330
        %v1345 = vsel %vm1335, %v1330, %v1332
        %v1346 = vsel %vm1335, %v1332, %v1334
        %1359 = vst [vmem:[#allocation2 + $0x300] sm:$0xf0] %v1336
        %1360 = vst [vmem:[#allocation2 + $0x308] sm:$0xf0] %v1337
        %1361 = vst [vmem:[#allocation2 + $0x310] sm:$0xf0] %v1338
        %1362 = vst [vmem:[#allocation2 + $0x318] sm:$0xf0] %v1339
        %1363 = vst [vmem:[#allocation2 + $0x320] sm:$0xf0] %v1340
        %1364 = vst [vmem:[#allocation2 + $0x328] sm:$0xf0] %v1341
        %1365 = vst [vmem:[#allocation2 + $0x330] sm:$0xf0] %v1342
        %1366 = vst [vmem:[#allocation2 + $0x338] sm:$0xf0] %v1343
        %1367 = vst [vmem:[#allocation2 + $0x340] sm:$0xf0] %v1344
        %1368 = vst [vmem:[#allocation2 + $0x348] sm:$0xf0] %v1345
        %1369 = vst [vmem:[#allocation2 + $0x350] sm:$0xf0] %v1346
        %1370 = vst.msk [vmem:[#allocation2 + $0x358] sm:$0xf0] %vm407, %v1334
        %v1371 = vcombine.high %v310, %v310
        %1372 = vrot.lane.b32.xlu0 %v305, 96
        %v1373 = vpop.permute.xlu0 %1372
        %1374 = vrot.lane.b32.xlu0 %v318, 96
        %v1375 = vpop.permute.xlu0 %1374
        %1376 = vrot.lane.b32.xlu0 %v306, 96
        %v1377 = vpop.permute.xlu0 %1376
        %1378 = vrot.lane.b32.xlu0 %v319, 96
        %v1379 = vpop.permute.xlu0 %1378
        %1380 = vrot.lane.b32.xlu0 %v307, 96
        %v1381 = vpop.permute.xlu0 %1380
        %1382 = vrot.lane.b32.xlu0 %v320, 96
        %v1383 = vpop.permute.xlu0 %1382
        %1384 = vrot.lane.b32.xlu0 %v308, 96
        %v1385 = vpop.permute.xlu0 %1384
        %1386 = vrot.lane.b32.xlu0 %v321, 96
        %v1387 = vpop.permute.xlu0 %1386
        %1388 = vrot.lane.b32.xlu0 %v309, 96
        %v1389 = vpop.permute.xlu0 %1388
        %1390 = vrot.lane.b32.xlu0 %v322, 96
        %v1391 = vpop.permute.xlu0 %1390
        %1392 = vrot.lane.b32.xlu0 %v310, 96
        %v1393 = vpop.permute.xlu0 %1392
        %1394 = vrot.lane.b32.xlu0 %v1371, 96
        %v1395 = vpop.permute.xlu0 %1394
        %vm1396 = vcmask 785408
        %v1397 = vsel %vm1396, %v1373, %v1375
        %v1398 = vsel %vm1396, %v1375, %v1377
        %v1399 = vsel %vm1396, %v1377, %v1379
        %v1400 = vsel %vm1396, %v1379, %v1381
        %v1401 = vsel %vm1396, %v1381, %v1383
        %v1402 = vsel %vm1396, %v1383, %v1385
        %v1403 = vsel %vm1396, %v1385, %v1387
        %v1404 = vsel %vm1396, %v1387, %v1389
        %v1405 = vsel %vm1396, %v1389, %v1391
        %v1406 = vsel %vm1396, %v1391, %v1393
        %v1407 = vsel %vm1396, %v1393, %v1395
        %1420 = vst [vmem:[#allocation2 + $0x360] sm:$0xf] %v1397
        %1421 = vst [vmem:[#allocation2 + $0x368] sm:$0xf] %v1398
        %1422 = vst [vmem:[#allocation2 + $0x370] sm:$0xf] %v1399
        %1423 = vst [vmem:[#allocation2 + $0x378] sm:$0xf] %v1400
        %1424 = vst [vmem:[#allocation2 + $0x380] sm:$0xf] %v1401
        %1425 = vst [vmem:[#allocation2 + $0x388] sm:$0xf] %v1402
        %1426 = vst [vmem:[#allocation2 + $0x390] sm:$0xf] %v1403
        %1427 = vst [vmem:[#allocation2 + $0x398] sm:$0xf] %v1404
        %1428 = vst [vmem:[#allocation2 + $0x3a0] sm:$0xf] %v1405
        %1429 = vst [vmem:[#allocation2 + $0x3a8] sm:$0xf] %v1406
        %1430 = vst [vmem:[#allocation2 + $0x3b0] sm:$0xf] %v1407
        %1431 = vst.msk [vmem:[#allocation2 + $0x3b8] sm:$0xf] %vm340, %v1395
        %1432 = vrot.lane.b32.xlu0 %v343, 95
        %v1433 = vpop.permute.xlu0 %1432
        %1434 = vrot.lane.b32.xlu0 %v305, 95
        %v1435 = vpop.permute.xlu0 %1434
        %1436 = vrot.lane.b32.xlu0 %v344, 95
        %v1437 = vpop.permute.xlu0 %1436
        %1438 = vrot.lane.b32.xlu0 %v306, 95
        %v1439 = vpop.permute.xlu0 %1438
        %1440 = vrot.lane.b32.xlu0 %v345, 95
        %v1441 = vpop.permute.xlu0 %1440
        %1442 = vrot.lane.b32.xlu0 %v307, 95
        %v1443 = vpop.permute.xlu0 %1442
        %1444 = vrot.lane.b32.xlu0 %v346, 95
        %v1445 = vpop.permute.xlu0 %1444
        %1446 = vrot.lane.b32.xlu0 %v308, 95
        %v1447 = vpop.permute.xlu0 %1446
        %1448 = vrot.lane.b32.xlu0 %v347, 95
        %v1449 = vpop.permute.xlu0 %1448
        %1450 = vrot.lane.b32.xlu0 %v309, 95
        %v1451 = vpop.permute.xlu0 %1450
        %1452 = vrot.lane.b32.xlu0 %v830, 95
        %v1453 = vpop.permute.xlu0 %1452
        %1454 = vrot.lane.b32.xlu0 %v310, 95
        %v1455 = vpop.permute.xlu0 %1454
        %vm1456 = vcmask 777216
        %v1457 = vsel %vm1456, %v1433, %v1435
        %v1458 = vsel %vm1456, %v1435, %v1437
        %v1459 = vsel %vm1456, %v1437, %v1439
        %v1460 = vsel %vm1456, %v1439, %v1441
        %v1461 = vsel %vm1456, %v1441, %v1443
        %v1462 = vsel %vm1456, %v1443, %v1445
        %v1463 = vsel %vm1456, %v1445, %v1447
        %v1464 = vsel %vm1456, %v1447, %v1449
        %v1465 = vsel %vm1456, %v1449, %v1451
        %v1466 = vsel %vm1456, %v1451, %v1453
        %v1467 = vsel %vm1456, %v1453, %v1455
        %1480 = vst [vmem:[#allocation2 + $0x360] sm:$0xf0] %v1457
        %1481 = vst [vmem:[#allocation2 + $0x368] sm:$0xf0] %v1458
        %1482 = vst [vmem:[#allocation2 + $0x370] sm:$0xf0] %v1459
        %1483 = vst [vmem:[#allocation2 + $0x378] sm:$0xf0] %v1460
        %1484 = vst [vmem:[#allocation2 + $0x380] sm:$0xf0] %v1461
        %1485 = vst [vmem:[#allocation2 + $0x388] sm:$0xf0] %v1462
        %1486 = vst [vmem:[#allocation2 + $0x390] sm:$0xf0] %v1463
        %1487 = vst [vmem:[#allocation2 + $0x398] sm:$0xf0] %v1464
        %1488 = vst [vmem:[#allocation2 + $0x3a0] sm:$0xf0] %v1465
        %1489 = vst [vmem:[#allocation2 + $0x3a8] sm:$0xf0] %v1466
        %1490 = vst [vmem:[#allocation2 + $0x3b0] sm:$0xf0] %v1467
        %1491 = vst.msk [vmem:[#allocation2 + $0x3b8] sm:$0xf0] %vm407, %v1455
        %1492 = vrot.lane.b32.xlu0 %v305, 94
        %v1493 = vpop.permute.xlu0 %1492
        %1494 = vrot.lane.b32.xlu0 %v318, 94
        %v1495 = vpop.permute.xlu0 %1494
        %1496 = vrot.lane.b32.xlu0 %v306, 94
        %v1497 = vpop.permute.xlu0 %1496
        %1498 = vrot.lane.b32.xlu0 %v319, 94
        %v1499 = vpop.permute.xlu0 %1498
        %1500 = vrot.lane.b32.xlu0 %v307, 94
        %v1501 = vpop.permute.xlu0 %1500
        %1502 = vrot.lane.b32.xlu0 %v320, 94
        %v1503 = vpop.permute.xlu0 %1502
        %1504 = vrot.lane.b32.xlu0 %v308, 94
        %v1505 = vpop.permute.xlu0 %1504
        %1506 = vrot.lane.b32.xlu0 %v321, 94
        %v1507 = vpop.permute.xlu0 %1506
        %1508 = vrot.lane.b32.xlu0 %v309, 94
        %v1509 = vpop.permute.xlu0 %1508
        %1510 = vrot.lane.b32.xlu0 %v322, 94
        %v1511 = vpop.permute.xlu0 %1510
        %1512 = vrot.lane.b32.xlu0 %v310, 94
        %v1513 = vpop.permute.xlu0 %1512
        %1514 = vrot.lane.b32.xlu0 %v1371, 94
        %v1515 = vpop.permute.xlu0 %1514
        %vm1516 = vcmask 769024
        %v1517 = vsel %vm1516, %v1493, %v1495
        %v1518 = vsel %vm1516, %v1495, %v1497
        %v1519 = vsel %vm1516, %v1497, %v1499
        %v1520 = vsel %vm1516, %v1499, %v1501
        %v1521 = vsel %vm1516, %v1501, %v1503
        %v1522 = vsel %vm1516, %v1503, %v1505
        %v1523 = vsel %vm1516, %v1505, %v1507
        %v1524 = vsel %vm1516, %v1507, %v1509
        %v1525 = vsel %vm1516, %v1509, %v1511
        %v1526 = vsel %vm1516, %v1511, %v1513
        %v1527 = vsel %vm1516, %v1513, %v1515
        %1540 = vst [vmem:[#allocation2 + $0x3c0] sm:$0xf] %v1517
        %1541 = vst [vmem:[#allocation2 + $0x3c8] sm:$0xf] %v1518
        %1542 = vst [vmem:[#allocation2 + $0x3d0] sm:$0xf] %v1519
        %1543 = vst [vmem:[#allocation2 + $0x3d8] sm:$0xf] %v1520
        %1544 = vst [vmem:[#allocation2 + $0x3e0] sm:$0xf] %v1521
        %1545 = vst [vmem:[#allocation2 + $0x3e8] sm:$0xf] %v1522
        %1546 = vst [vmem:[#allocation2 + $0x3f0] sm:$0xf] %v1523
        %1547 = vst [vmem:[#allocation2 + $0x3f8] sm:$0xf] %v1524
        %1548 = vst [vmem:[#allocation2 + $0x400] sm:$0xf] %v1525
        %1549 = vst [vmem:[#allocation2 + $0x408] sm:$0xf] %v1526
        %1550 = vst [vmem:[#allocation2 + $0x410] sm:$0xf] %v1527
        %1551 = vst.msk [vmem:[#allocation2 + $0x418] sm:$0xf] %vm340, %v1515
        %1552 = vrot.lane.b32.xlu0 %v343, 84
        %v1553 = vpop.permute.xlu0 %1552
        %1554 = vrot.lane.b32.xlu0 %v305, 84
        %v1555 = vpop.permute.xlu0 %1554
        %1556 = vrot.lane.b32.xlu0 %v344, 84
        %v1557 = vpop.permute.xlu0 %1556
        %1558 = vrot.lane.b32.xlu0 %v306, 84
        %v1559 = vpop.permute.xlu0 %1558
        %1560 = vrot.lane.b32.xlu0 %v345, 84
        %v1561 = vpop.permute.xlu0 %1560
        %1562 = vrot.lane.b32.xlu0 %v307, 84
        %v1563 = vpop.permute.xlu0 %1562
        %1564 = vrot.lane.b32.xlu0 %v346, 84
        %v1565 = vpop.permute.xlu0 %1564
        %1566 = vrot.lane.b32.xlu0 %v308, 84
        %v1567 = vpop.permute.xlu0 %1566
        %1568 = vrot.lane.b32.xlu0 %v347, 84
        %v1569 = vpop.permute.xlu0 %1568
        %1570 = vrot.lane.b32.xlu0 %v309, 84
        %v1571 = vpop.permute.xlu0 %1570
        %1572 = vrot.lane.b32.xlu0 %v830, 84
        %v1573 = vpop.permute.xlu0 %1572
        %1574 = vrot.lane.b32.xlu0 %v310, 84
        %v1575 = vpop.permute.xlu0 %1574
        %vm1576 = vcmask 687104
        %v1577 = vsel %vm1576, %v1553, %v1555
        %v1578 = vsel %vm1576, %v1555, %v1557
        %v1579 = vsel %vm1576, %v1557, %v1559
        %v1580 = vsel %vm1576, %v1559, %v1561
        %v1581 = vsel %vm1576, %v1561, %v1563
        %v1582 = vsel %vm1576, %v1563, %v1565
        %v1583 = vsel %vm1576, %v1565, %v1567
        %v1584 = vsel %vm1576, %v1567, %v1569
        %v1585 = vsel %vm1576, %v1569, %v1571
        %v1586 = vsel %vm1576, %v1571, %v1573
        %v1587 = vsel %vm1576, %v1573, %v1575
        %1600 = vst [vmem:[#allocation2 + $0x3c0] sm:$0xf0] %v1577
        %1601 = vst [vmem:[#allocation2 + $0x3c8] sm:$0xf0] %v1578
        %1602 = vst [vmem:[#allocation2 + $0x3d0] sm:$0xf0] %v1579
        %1603 = vst [vmem:[#allocation2 + $0x3d8] sm:$0xf0] %v1580
        %1604 = vst [vmem:[#allocation2 + $0x3e0] sm:$0xf0] %v1581
        %1605 = vst [vmem:[#allocation2 + $0x3e8] sm:$0xf0] %v1582
        %1606 = vst [vmem:[#allocation2 + $0x3f0] sm:$0xf0] %v1583
        %1607 = vst [vmem:[#allocation2 + $0x3f8] sm:$0xf0] %v1584
        %1608 = vst [vmem:[#allocation2 + $0x400] sm:$0xf0] %v1585
        %1609 = vst [vmem:[#allocation2 + $0x408] sm:$0xf0] %v1586
        %1610 = vst [vmem:[#allocation2 + $0x410] sm:$0xf0] %v1587
        %1611 = vst.msk [vmem:[#allocation2 + $0x418] sm:$0xf0] %vm407, %v1575
        %1612 = vrot.lane.b32.xlu0 %v305, 83
        %v1613 = vpop.permute.xlu0 %1612
        %1614 = vrot.lane.b32.xlu0 %v318, 83
        %v1615 = vpop.permute.xlu0 %1614
        %1616 = vrot.lane.b32.xlu0 %v306, 83
        %v1617 = vpop.permute.xlu0 %1616
        %1618 = vrot.lane.b32.xlu0 %v319, 83
        %v1619 = vpop.permute.xlu0 %1618
        %1620 = vrot.lane.b32.xlu0 %v307, 83
        %v1621 = vpop.permute.xlu0 %1620
        %1622 = vrot.lane.b32.xlu0 %v320, 83
        %v1623 = vpop.permute.xlu0 %1622
        %1624 = vrot.lane.b32.xlu0 %v308, 83
        %v1625 = vpop.permute.xlu0 %1624
        %1626 = vrot.lane.b32.xlu0 %v321, 83
        %v1627 = vpop.permute.xlu0 %1626
        %1628 = vrot.lane.b32.xlu0 %v309, 83
        %v1629 = vpop.permute.xlu0 %1628
        %1630 = vrot.lane.b32.xlu0 %v322, 83
        %v1631 = vpop.permute.xlu0 %1630
        %1632 = vrot.lane.b32.xlu0 %v310, 83
        %v1633 = vpop.permute.xlu0 %1632
        %1634 = vrot.lane.b32.xlu0 %v1371, 83
        %v1635 = vpop.permute.xlu0 %1634
        %vm1636 = vcmask 678912
        %v1637 = vsel %vm1636, %v1613, %v1615
        %v1638 = vsel %vm1636, %v1615, %v1617
        %v1639 = vsel %vm1636, %v1617, %v1619
        %v1640 = vsel %vm1636, %v1619, %v1621
        %v1641 = vsel %vm1636, %v1621, %v1623
        %v1642 = vsel %vm1636, %v1623, %v1625
        %v1643 = vsel %vm1636, %v1625, %v1627
        %v1644 = vsel %vm1636, %v1627, %v1629
        %v1645 = vsel %vm1636, %v1629, %v1631
        %v1646 = vsel %vm1636, %v1631, %v1633
        %v1647 = vsel %vm1636, %v1633, %v1635
        %1660 = vst [vmem:[#allocation2 + $0x420] sm:$0xf] %v1637
        %1661 = vst [vmem:[#allocation2 + $0x428] sm:$0xf] %v1638
        %1662 = vst [vmem:[#allocation2 + $0x430] sm:$0xf] %v1639
        %1663 = vst [vmem:[#allocation2 + $0x438] sm:$0xf] %v1640
        %1664 = vst [vmem:[#allocation2 + $0x440] sm:$0xf] %v1641
        %1665 = vst [vmem:[#allocation2 + $0x448] sm:$0xf] %v1642
        %1666 = vst [vmem:[#allocation2 + $0x450] sm:$0xf] %v1643
        %1667 = vst [vmem:[#allocation2 + $0x458] sm:$0xf] %v1644
        %1668 = vst [vmem:[#allocation2 + $0x460] sm:$0xf] %v1645
        %1669 = vst [vmem:[#allocation2 + $0x468] sm:$0xf] %v1646
        %1670 = vst [vmem:[#allocation2 + $0x470] sm:$0xf] %v1647
        %1671 = vst.msk [vmem:[#allocation2 + $0x478] sm:$0xf] %vm340, %v1635
        %1672 = vrot.lane.b32.xlu0 %v343, 82
        %v1673 = vpop.permute.xlu0 %1672
        %1674 = vrot.lane.b32.xlu0 %v305, 82
        %v1675 = vpop.permute.xlu0 %1674
        %1676 = vrot.lane.b32.xlu0 %v344, 82
        %v1677 = vpop.permute.xlu0 %1676
        %1678 = vrot.lane.b32.xlu0 %v306, 82
        %v1679 = vpop.permute.xlu0 %1678
        %1680 = vrot.lane.b32.xlu0 %v345, 82
        %v1681 = vpop.permute.xlu0 %1680
        %1682 = vrot.lane.b32.xlu0 %v307, 82
        %v1683 = vpop.permute.xlu0 %1682
        %1684 = vrot.lane.b32.xlu0 %v346, 82
        %v1685 = vpop.permute.xlu0 %1684
        %1686 = vrot.lane.b32.xlu0 %v308, 82
        %v1687 = vpop.permute.xlu0 %1686
        %1688 = vrot.lane.b32.xlu0 %v347, 82
        %v1689 = vpop.permute.xlu0 %1688
        %1690 = vrot.lane.b32.xlu0 %v309, 82
        %v1691 = vpop.permute.xlu0 %1690
        %1692 = vrot.lane.b32.xlu0 %v830, 82
        %v1693 = vpop.permute.xlu0 %1692
        %1694 = vrot.lane.b32.xlu0 %v310, 82
        %v1695 = vpop.permute.xlu0 %1694
        %vm1696 = vcmask 670720
        %v1697 = vsel %vm1696, %v1673, %v1675
        %v1698 = vsel %vm1696, %v1675, %v1677
        %v1699 = vsel %vm1696, %v1677, %v1679
        %v1700 = vsel %vm1696, %v1679, %v1681
        %v1701 = vsel %vm1696, %v1681, %v1683
        %v1702 = vsel %vm1696, %v1683, %v1685
        %v1703 = vsel %vm1696, %v1685, %v1687
        %v1704 = vsel %vm1696, %v1687, %v1689
        %v1705 = vsel %vm1696, %v1689, %v1691
        %v1706 = vsel %vm1696, %v1691, %v1693
        %v1707 = vsel %vm1696, %v1693, %v1695
        %1720 = vst [vmem:[#allocation2 + $0x420] sm:$0xf0] %v1697
        %1721 = vst [vmem:[#allocation2 + $0x428] sm:$0xf0] %v1698
        %1722 = vst [vmem:[#allocation2 + $0x430] sm:$0xf0] %v1699
        %1723 = vst [vmem:[#allocation2 + $0x438] sm:$0xf0] %v1700
        %1724 = vst [vmem:[#allocation2 + $0x440] sm:$0xf0] %v1701
        %1725 = vst [vmem:[#allocation2 + $0x448] sm:$0xf0] %v1702
        %1726 = vst [vmem:[#allocation2 + $0x450] sm:$0xf0] %v1703
        %1727 = vst [vmem:[#allocation2 + $0x458] sm:$0xf0] %v1704
        %1728 = vst [vmem:[#allocation2 + $0x460] sm:$0xf0] %v1705
        %1729 = vst [vmem:[#allocation2 + $0x468] sm:$0xf0] %v1706
        %1730 = vst [vmem:[#allocation2 + $0x470] sm:$0xf0] %v1707
        %1731 = vst.msk [vmem:[#allocation2 + $0x478] sm:$0xf0] %vm407, %v1695
        %1732 = vrot.lane.b32.xlu0 %v305, 72
        %v1733 = vpop.permute.xlu0 %1732
        %1734 = vrot.lane.b32.xlu0 %v318, 72
        %v1735 = vpop.permute.xlu0 %1734
        %1736 = vrot.lane.b32.xlu0 %v306, 72
        %v1737 = vpop.permute.xlu0 %1736
        %1738 = vrot.lane.b32.xlu0 %v319, 72
        %v1739 = vpop.permute.xlu0 %1738
        %1740 = vrot.lane.b32.xlu0 %v307, 72
        %v1741 = vpop.permute.xlu0 %1740
        %1742 = vrot.lane.b32.xlu0 %v320, 72
        %v1743 = vpop.permute.xlu0 %1742
        %1744 = vrot.lane.b32.xlu0 %v308, 72
        %v1745 = vpop.permute.xlu0 %1744
        %1746 = vrot.lane.b32.xlu0 %v321, 72
        %v1747 = vpop.permute.xlu0 %1746
        %1748 = vrot.lane.b32.xlu0 %v309, 72
        %v1749 = vpop.permute.xlu0 %1748
        %1750 = vrot.lane.b32.xlu0 %v322, 72
        %v1751 = vpop.permute.xlu0 %1750
        %1752 = vrot.lane.b32.xlu0 %v310, 72
        %v1753 = vpop.permute.xlu0 %1752
        %1754 = vrot.lane.b32.xlu0 %v1371, 72
        %v1755 = vpop.permute.xlu0 %1754
        %vm1756 = vcmask 588800
        %v1757 = vsel %vm1756, %v1733, %v1735
        %v1758 = vsel %vm1756, %v1735, %v1737
        %v1759 = vsel %vm1756, %v1737, %v1739
        %v1760 = vsel %vm1756, %v1739, %v1741
        %v1761 = vsel %vm1756, %v1741, %v1743
        %v1762 = vsel %vm1756, %v1743, %v1745
        %v1763 = vsel %vm1756, %v1745, %v1747
        %v1764 = vsel %vm1756, %v1747, %v1749
        %v1765 = vsel %vm1756, %v1749, %v1751
        %v1766 = vsel %vm1756, %v1751, %v1753
        %v1767 = vsel %vm1756, %v1753, %v1755
        %1780 = vst [vmem:[#allocation2 + $0x480] sm:$0xf] %v1757
        %1781 = vst [vmem:[#allocation2 + $0x488] sm:$0xf] %v1758
        %1782 = vst [vmem:[#allocation2 + $0x490] sm:$0xf] %v1759
        %1783 = vst [vmem:[#allocation2 + $0x498] sm:$0xf] %v1760
        %1784 = vst [vmem:[#allocation2 + $0x4a0] sm:$0xf] %v1761
        %1785 = vst [vmem:[#allocation2 + $0x4a8] sm:$0xf] %v1762
        %1786 = vst [vmem:[#allocation2 + $0x4b0] sm:$0xf] %v1763
        %1787 = vst [vmem:[#allocation2 + $0x4b8] sm:$0xf] %v1764
        %1788 = vst [vmem:[#allocation2 + $0x4c0] sm:$0xf] %v1765
        %1789 = vst [vmem:[#allocation2 + $0x4c8] sm:$0xf] %v1766
        %1790 = vst [vmem:[#allocation2 + $0x4d0] sm:$0xf] %v1767
        %1791 = vst.msk [vmem:[#allocation2 + $0x4d8] sm:$0xf] %vm340, %v1755
        %1792 = vrot.lane.b32.xlu0 %v343, 71
        %v1793 = vpop.permute.xlu0 %1792
        %1794 = vrot.lane.b32.xlu0 %v305, 71
        %v1795 = vpop.permute.xlu0 %1794
        %1796 = vrot.lane.b32.xlu0 %v344, 71
        %v1797 = vpop.permute.xlu0 %1796
        %1798 = vrot.lane.b32.xlu0 %v306, 71
        %v1799 = vpop.permute.xlu0 %1798
        %1800 = vrot.lane.b32.xlu0 %v345, 71
        %v1801 = vpop.permute.xlu0 %1800
        %1802 = vrot.lane.b32.xlu0 %v307, 71
        %v1803 = vpop.permute.xlu0 %1802
        %1804 = vrot.lane.b32.xlu0 %v346, 71
        %v1805 = vpop.permute.xlu0 %1804
        %1806 = vrot.lane.b32.xlu0 %v308, 71
        %v1807 = vpop.permute.xlu0 %1806
        %1808 = vrot.lane.b32.xlu0 %v347, 71
        %v1809 = vpop.permute.xlu0 %1808
        %1810 = vrot.lane.b32.xlu0 %v309, 71
        %v1811 = vpop.permute.xlu0 %1810
        %1812 = vrot.lane.b32.xlu0 %v830, 71
        %v1813 = vpop.permute.xlu0 %1812
        %1814 = vrot.lane.b32.xlu0 %v310, 71
        %v1815 = vpop.permute.xlu0 %1814
        %vm1816 = vcmask 580608
        %v1817 = vsel %vm1816, %v1793, %v1795
        %v1818 = vsel %vm1816, %v1795, %v1797
        %v1819 = vsel %vm1816, %v1797, %v1799
        %v1820 = vsel %vm1816, %v1799, %v1801
        %v1821 = vsel %vm1816, %v1801, %v1803
        %v1822 = vsel %vm1816, %v1803, %v1805
        %v1823 = vsel %vm1816, %v1805, %v1807
        %v1824 = vsel %vm1816, %v1807, %v1809
        %v1825 = vsel %vm1816, %v1809, %v1811
        %v1826 = vsel %vm1816, %v1811, %v1813
        %v1827 = vsel %vm1816, %v1813, %v1815
        %1840 = vst [vmem:[#allocation2 + $0x480] sm:$0xf0] %v1817
        %1841 = vst [vmem:[#allocation2 + $0x488] sm:$0xf0] %v1818
        %1842 = vst [vmem:[#allocation2 + $0x490] sm:$0xf0] %v1819
        %1843 = vst [vmem:[#allocation2 + $0x498] sm:$0xf0] %v1820
        %1844 = vst [vmem:[#allocation2 + $0x4a0] sm:$0xf0] %v1821
        %1845 = vst [vmem:[#allocation2 + $0x4a8] sm:$0xf0] %v1822
        %1846 = vst [vmem:[#allocation2 + $0x4b0] sm:$0xf0] %v1823
        %1847 = vst [vmem:[#allocation2 + $0x4b8] sm:$0xf0] %v1824
        %1848 = vst [vmem:[#allocation2 + $0x4c0] sm:$0xf0] %v1825
        %1849 = vst [vmem:[#allocation2 + $0x4c8] sm:$0xf0] %v1826
        %1850 = vst [vmem:[#allocation2 + $0x4d0] sm:$0xf0] %v1827
        %1851 = vst.msk [vmem:[#allocation2 + $0x4d8] sm:$0xf0] %vm407, %v1815
        %1852 = vrot.lane.b32.xlu0 %v305, 70
        %v1853 = vpop.permute.xlu0 %1852
        %1854 = vrot.lane.b32.xlu0 %v318, 70
        %v1855 = vpop.permute.xlu0 %1854
        %1856 = vrot.lane.b32.xlu0 %v306, 70
        %v1857 = vpop.permute.xlu0 %1856
        %1858 = vrot.lane.b32.xlu0 %v319, 70
        %v1859 = vpop.permute.xlu0 %1858
        %1860 = vrot.lane.b32.xlu0 %v307, 70
        %v1861 = vpop.permute.xlu0 %1860
        %1862 = vrot.lane.b32.xlu0 %v320, 70
        %v1863 = vpop.permute.xlu0 %1862
        %1864 = vrot.lane.b32.xlu0 %v308, 70
        %v1865 = vpop.permute.xlu0 %1864
        %1866 = vrot.lane.b32.xlu0 %v321, 70
        %v1867 = vpop.permute.xlu0 %1866
        %1868 = vrot.lane.b32.xlu0 %v309, 70
        %v1869 = vpop.permute.xlu0 %1868
        %1870 = vrot.lane.b32.xlu0 %v322, 70
        %v1871 = vpop.permute.xlu0 %1870
        %1872 = vrot.lane.b32.xlu0 %v310, 70
        %v1873 = vpop.permute.xlu0 %1872
        %1874 = vrot.lane.b32.xlu0 %v1371, 70
        %v1875 = vpop.permute.xlu0 %1874
        %vm1876 = vcmask 572416
        %v1877 = vsel %vm1876, %v1853, %v1855
        %v1878 = vsel %vm1876, %v1855, %v1857
        %v1879 = vsel %vm1876, %v1857, %v1859
        %v1880 = vsel %vm1876, %v1859, %v1861
        %v1881 = vsel %vm1876, %v1861, %v1863
        %v1882 = vsel %vm1876, %v1863, %v1865
        %v1883 = vsel %vm1876, %v1865, %v1867
        %v1884 = vsel %vm1876, %v1867, %v1869
        %v1885 = vsel %vm1876, %v1869, %v1871
        %v1886 = vsel %vm1876, %v1871, %v1873
        %v1887 = vsel %vm1876, %v1873, %v1875
        %1900 = vst [vmem:[#allocation2 + $0x4e0] sm:$0xf] %v1877
        %1901 = vst [vmem:[#allocation2 + $0x4e8] sm:$0xf] %v1878
        %1902 = vst [vmem:[#allocation2 + $0x4f0] sm:$0xf] %v1879
        %1903 = vst [vmem:[#allocation2 + $0x4f8] sm:$0xf] %v1880
        %1904 = vst [vmem:[#allocation2 + $0x500] sm:$0xf] %v1881
        %1905 = vst [vmem:[#allocation2 + $0x508] sm:$0xf] %v1882
        %1906 = vst [vmem:[#allocation2 + $0x510] sm:$0xf] %v1883
        %1907 = vst [vmem:[#allocation2 + $0x518] sm:$0xf] %v1884
        %1908 = vst [vmem:[#allocation2 + $0x520] sm:$0xf] %v1885
        %1909 = vst [vmem:[#allocation2 + $0x528] sm:$0xf] %v1886
        %1910 = vst [vmem:[#allocation2 + $0x530] sm:$0xf] %v1887
        %1911 = vst.msk [vmem:[#allocation2 + $0x538] sm:$0xf] %vm340, %v1875
        %v1912 = vld [vmem:[%s1] sm:$0xf]
        %v1913 = vld [vmem:[#allocation2] sm:$0xff]
        %v1914 = vld [vmem:[#allocation2 + $0x8] sm:$0xff]
        %v1915 = vld [vmem:[#allocation2 + $0x10] sm:$0xff]
        %v1916 = vld [vmem:[#allocation2 + $0x18] sm:$0xff]
        %v1917 = vld [vmem:[#allocation2 + $0x20] sm:$0xff]
        %v1918 = vld [vmem:[#allocation2 + $0x28] sm:$0xff]
        %v1919 = vld [vmem:[#allocation2 + $0x30] sm:$0xff]
        %v1920 = vld [vmem:[#allocation2 + $0x38] sm:$0xff]
        %v1921 = vld [vmem:[#allocation2 + $0x40] sm:$0xff]
        %v1922 = vld [vmem:[#allocation2 + $0x48] sm:$0xff]
        %v1923 = vld [vmem:[#allocation2 + $0x50] sm:$0xff]
        %v1924 = vld [vmem:[#allocation2 + $0x58] sm:$0xff]
        %v1925 = vld [vmem:[#allocation2 + $0x60] sm:$0xff]
        %v1926 = vld [vmem:[#allocation2 + $0x68] sm:$0xff]
        %v1927 = vld [vmem:[#allocation2 + $0x70] sm:$0xff]
        %v1928 = vld [vmem:[#allocation2 + $0x78] sm:$0xff]
        %v1929 = vld [vmem:[#allocation2 + $0x80] sm:$0xff]
        %v1930 = vld [vmem:[#allocation2 + $0x88] sm:$0xff]
        %v1931 = vld [vmem:[#allocation2 + $0x90] sm:$0xff]
        %v1932 = vld [vmem:[#allocation2 + $0x98] sm:$0xff]
        %v1933 = vld [vmem:[#allocation2 + $0xa0] sm:$0xff]
        %v1934 = vld [vmem:[#allocation2 + $0xa8] sm:$0xff]
        %v1935 = vld [vmem:[#allocation2 + $0xb0] sm:$0xff]
        %v1936 = vld [vmem:[#allocation2 + $0xb8] sm:$0xff]
        %v1937 = vld [vmem:[#allocation2 + $0xc0] sm:$0xff]
        %v1938 = vld [vmem:[#allocation2 + $0xc8] sm:$0xff]
        %v1939 = vld [vmem:[#allocation2 + $0xd0] sm:$0xff]
        %v1940 = vld [vmem:[#allocation2 + $0xd8] sm:$0xff]
        %v1941 = vld [vmem:[#allocation2 + $0xe0] sm:$0xff]
        %v1942 = vld [vmem:[#allocation2 + $0xe8] sm:$0xff]
        %v1943 = vld [vmem:[#allocation2 + $0xf0] sm:$0xff]
        %v1944 = vld [vmem:[#allocation2 + $0xf8] sm:$0xff]
        %v1945 = vld [vmem:[#allocation2 + $0x100] sm:$0xff]
        %v1946 = vld [vmem:[#allocation2 + $0x108] sm:$0xff]
        %v1947 = vld [vmem:[#allocation2 + $0x110] sm:$0xff]
        %v1948 = vld [vmem:[#allocation2 + $0x118] sm:$0xff]
        %v1949 = vld [vmem:[#allocation2 + $0x120] sm:$0xff]
        %v1950 = vld [vmem:[#allocation2 + $0x128] sm:$0xff]
        %v1951 = vld [vmem:[#allocation2 + $0x130] sm:$0xff]
        %v1952 = vld [vmem:[#allocation2 + $0x138] sm:$0xff]
        %v1953 = vld [vmem:[#allocation2 + $0x140] sm:$0xff]
        %v1954 = vld [vmem:[#allocation2 + $0x148] sm:$0xff]
        %v1955 = vld [vmem:[#allocation2 + $0x150] sm:$0xff]
        %v1956 = vld [vmem:[#allocation2 + $0x158] sm:$0xff]
        %v1957 = vld [vmem:[#allocation2 + $0x160] sm:$0xff]
        %v1958 = vld [vmem:[#allocation2 + $0x168] sm:$0xff]
        %v1959 = vld [vmem:[#allocation2 + $0x170] sm:$0xff]
        %v1960 = vld [vmem:[#allocation2 + $0x178] sm:$0xff]
        %v1961 = vld [vmem:[#allocation2 + $0x180] sm:$0xff]
        %v1962 = vld [vmem:[#allocation2 + $0x188] sm:$0xff]
        %v1963 = vld [vmem:[#allocation2 + $0x190] sm:$0xff]
        %v1964 = vld [vmem:[#allocation2 + $0x198] sm:$0xff]
        %v1965 = vld [vmem:[#allocation2 + $0x1a0] sm:$0xff]
        %v1966 = vld [vmem:[#allocation2 + $0x1a8] sm:$0xff]
        %v1967 = vld [vmem:[#allocation2 + $0x1b0] sm:$0xff]
        %v1968 = vld [vmem:[#allocation2 + $0x1b8] sm:$0xff]
        %v1969 = vld [vmem:[#allocation2 + $0x1c0] sm:$0xff]
        %v1970 = vld [vmem:[#allocation2 + $0x1c8] sm:$0xff]
        %v1971 = vld [vmem:[#allocation2 + $0x1d0] sm:$0xff]
        %v1972 = vld [vmem:[#allocation2 + $0x1d8] sm:$0xff]
        %v1973 = vld [vmem:[#allocation2 + $0x1e0] sm:$0xff]
        %v1974 = vld [vmem:[#allocation2 + $0x1e8] sm:$0xff]
        %v1975 = vld [vmem:[#allocation2 + $0x1f0] sm:$0xff]
        %v1976 = vld [vmem:[#allocation2 + $0x1f8] sm:$0xff]
        %v1977 = vld [vmem:[#allocation2 + $0x200] sm:$0xff]
        %v1978 = vld [vmem:[#allocation2 + $0x208] sm:$0xff]
        %v1979 = vld [vmem:[#allocation2 + $0x210] sm:$0xff]
        %v1980 = vld [vmem:[#allocation2 + $0x218] sm:$0xff]
        %v1981 = vld [vmem:[#allocation2 + $0x220] sm:$0xff]
        %v1982 = vld [vmem:[#allocation2 + $0x228] sm:$0xff]
        %v1983 = vld [vmem:[#allocation2 + $0x230] sm:$0xff]
        %v1984 = vld [vmem:[#allocation2 + $0x238] sm:$0xff]
        %v1985 = vld [vmem:[#allocation2 + $0x240] sm:$0xff]
        %v1986 = vld [vmem:[#allocation2 + $0x248] sm:$0xff]
        %v1987 = vld [vmem:[#allocation2 + $0x250] sm:$0xff]
        %v1988 = vld [vmem:[#allocation2 + $0x258] sm:$0xff]
        %v1989 = vld [vmem:[#allocation2 + $0x260] sm:$0xff]
        %v1990 = vld [vmem:[#allocation2 + $0x268] sm:$0xff]
        %v1991 = vld [vmem:[#allocation2 + $0x270] sm:$0xff]
        %v1992 = vld [vmem:[#allocation2 + $0x278] sm:$0xff]
        %v1993 = vld [vmem:[#allocation2 + $0x280] sm:$0xff]
        %v1994 = vld [vmem:[#allocation2 + $0x288] sm:$0xff]
        %v1995 = vld [vmem:[#allocation2 + $0x290] sm:$0xff]
        %v1996 = vld [vmem:[#allocation2 + $0x298] sm:$0xff]
        %v1997 = vld [vmem:[#allocation2 + $0x2a0] sm:$0xff]
        %v1998 = vld [vmem:[#allocation2 + $0x2a8] sm:$0xff]
        %v1999 = vld [vmem:[#allocation2 + $0x2b0] sm:$0xff]
        %v2000 = vld [vmem:[#allocation2 + $0x2b8] sm:$0xff]
        %v2001 = vld [vmem:[#allocation2 + $0x2c0] sm:$0xff]
        %v2002 = vld [vmem:[#allocation2 + $0x2c8] sm:$0xff]
        %v2003 = vld [vmem:[#allocation2 + $0x2d0] sm:$0xff]
        %v2004 = vld [vmem:[#allocation2 + $0x2d8] sm:$0xff]
        %v2005 = vld [vmem:[#allocation2 + $0x2e0] sm:$0xff]
        %v2006 = vld [vmem:[#allocation2 + $0x2e8] sm:$0xff]
        %v2007 = vld [vmem:[#allocation2 + $0x2f0] sm:$0xff]
        %v2008 = vld [vmem:[#allocation2 + $0x2f8] sm:$0xff]
        %v2009 = vld [vmem:[#allocation2 + $0x300] sm:$0xff]
        %v2010 = vld [vmem:[#allocation2 + $0x308] sm:$0xff]
        %v2011 = vld [vmem:[#allocation2 + $0x310] sm:$0xff]
        %v2012 = vld [vmem:[#allocation2 + $0x318] sm:$0xff]
        %v2013 = vld [vmem:[#allocation2 + $0x320] sm:$0xff]
        %v2014 = vld [vmem:[#allocation2 + $0x328] sm:$0xff]
        %v2015 = vld [vmem:[#allocation2 + $0x330] sm:$0xff]
        %v2016 = vld [vmem:[#allocation2 + $0x338] sm:$0xff]
        %v2017 = vld [vmem:[#allocation2 + $0x340] sm:$0xff]
        %v2018 = vld [vmem:[#allocation2 + $0x348] sm:$0xff]
        %v2019 = vld [vmem:[#allocation2 + $0x350] sm:$0xff]
        %v2020 = vld [vmem:[#allocation2 + $0x358] sm:$0xff]
        %v2021 = vld [vmem:[#allocation2 + $0x360] sm:$0xff]
        %v2022 = vld [vmem:[#allocation2 + $0x368] sm:$0xff]
        %v2023 = vld [vmem:[#allocation2 + $0x370] sm:$0xff]
        %v2024 = vld [vmem:[#allocation2 + $0x378] sm:$0xff]
        %v2025 = vld [vmem:[#allocation2 + $0x380] sm:$0xff]
        %v2026 = vld [vmem:[#allocation2 + $0x388] sm:$0xff]
        %v2027 = vld [vmem:[#allocation2 + $0x390] sm:$0xff]
        %v2028 = vld [vmem:[#allocation2 + $0x398] sm:$0xff]
        %v2029 = vld [vmem:[#allocation2 + $0x3a0] sm:$0xff]
        %v2030 = vld [vmem:[#allocation2 + $0x3a8] sm:$0xff]
        %v2031 = vld [vmem:[#allocation2 + $0x3b0] sm:$0xff]
        %v2032 = vld [vmem:[#allocation2 + $0x3b8] sm:$0xff]
        %v2033 = vld [vmem:[#allocation2 + $0x3c0] sm:$0xff]
        %v2034 = vld [vmem:[#allocation2 + $0x3c8] sm:$0xff]
        %v2035 = vld [vmem:[#allocation2 + $0x3d0] sm:$0xff]
        %v2036 = vld [vmem:[#allocation2 + $0x3d8] sm:$0xff]
        %v2037 = vld [vmem:[#allocation2 + $0x3e0] sm:$0xff]
        %v2038 = vld [vmem:[#allocation2 + $0x3e8] sm:$0xff]
        %v2039 = vld [vmem:[#allocation2 + $0x3f0] sm:$0xff]
        %v2040 = vld [vmem:[#allocation2 + $0x3f8] sm:$0xff]
        %v2041 = vld [vmem:[#allocation2 + $0x400] sm:$0xff]
        %v2042 = vld [vmem:[#allocation2 + $0x408] sm:$0xff]
        %v2043 = vld [vmem:[#allocation2 + $0x410] sm:$0xff]
        %v2044 = vld [vmem:[#allocation2 + $0x418] sm:$0xff]
        %v2045 = vld [vmem:[#allocation2 + $0x420] sm:$0xff]
        %v2046 = vld [vmem:[#allocation2 + $0x428] sm:$0xff]
        %v2047 = vld [vmem:[#allocation2 + $0x430] sm:$0xff]
        %v2048 = vld [vmem:[#allocation2 + $0x438] sm:$0xff]
        %v2049 = vld [vmem:[#allocation2 + $0x440] sm:$0xff]
        %v2050 = vld [vmem:[#allocation2 + $0x448] sm:$0xff]
        %v2051 = vld [vmem:[#allocation2 + $0x450] sm:$0xff]
        %v2052 = vld [vmem:[#allocation2 + $0x458] sm:$0xff]
        %v2053 = vld [vmem:[#allocation2 + $0x460] sm:$0xff]
        %v2054 = vld [vmem:[#allocation2 + $0x468] sm:$0xff]
        %v2055 = vld [vmem:[#allocation2 + $0x470] sm:$0xff]
        %v2056 = vld [vmem:[#allocation2 + $0x478] sm:$0xff]
        %v2057 = vld [vmem:[#allocation2 + $0x480] sm:$0xff]
        %v2058 = vld [vmem:[#allocation2 + $0x488] sm:$0xff]
        %v2059 = vld [vmem:[#allocation2 + $0x490] sm:$0xff]
        %v2060 = vld [vmem:[#allocation2 + $0x498] sm:$0xff]
        %v2061 = vld [vmem:[#allocation2 + $0x4a0] sm:$0xff]
        %v2062 = vld [vmem:[#allocation2 + $0x4a8] sm:$0xff]
        %v2063 = vld [vmem:[#allocation2 + $0x4b0] sm:$0xff]
        %v2064 = vld [vmem:[#allocation2 + $0x4b8] sm:$0xff]
        %v2065 = vld [vmem:[#allocation2 + $0x4c0] sm:$0xff]
        %v2066 = vld [vmem:[#allocation2 + $0x4c8] sm:$0xff]
        %v2067 = vld [vmem:[#allocation2 + $0x4d0] sm:$0xff]
        %v2068 = vld [vmem:[#allocation2 + $0x4d8] sm:$0xff]
        %v2069 = vld [vmem:[#allocation2 + $0x4e0] sm:$0xf]
        %v2070 = vld [vmem:[#allocation2 + $0x4e8] sm:$0xf]
        %v2071 = vld [vmem:[#allocation2 + $0x4f0] sm:$0xf]
        %v2072 = vld [vmem:[#allocation2 + $0x4f8] sm:$0xf]
        %v2073 = vld [vmem:[#allocation2 + $0x500] sm:$0xf]
        %v2074 = vld [vmem:[#allocation2 + $0x508] sm:$0xf]
        %v2075 = vld [vmem:[#allocation2 + $0x510] sm:$0xf]
        %v2076 = vld [vmem:[#allocation2 + $0x518] sm:$0xf]
        %v2077 = vld [vmem:[#allocation2 + $0x520] sm:$0xf]
        %v2078 = vld [vmem:[#allocation2 + $0x528] sm:$0xf]
        %v2079 = vld [vmem:[#allocation2 + $0x530] sm:$0xf]
        %v2080 = vld [vmem:[#allocation2 + $0x538] sm:$0xf]
        %v2081 = vld [vmem:[%s2] sm:$0xf]
        %2083 = vset.pattern.permute.xlu0 0
        %2084 = vperm.xlu0 %2083, %v2081
        %v2085 = vpop.permute.xlu0 %2084
        %vm2087 = vcmask 883712
        %v2089 = vsel %vm2087, %v1912, 0
        %vm2091 = vcmask 1043456
        %v2093 = vsel %vm2091, %v2069, 0
        %v2096 = vsel %vm2091, %v2070, 0
        %v2099 = vsel %vm2091, %v2071, 0
        %v2102 = vsel %vm2091, %v2072, 0
        %v2105 = vsel %vm2091, %v2073, 0
        %v2108 = vsel %vm2091, %v2074, 0
        %v2111 = vsel %vm2091, %v2075, 0
        %v2114 = vsel %vm2091, %v2076, 0
        %v2117 = vsel %vm2091, %v2077, 0
        %v2120 = vsel %vm2091, %v2078, 0
        %v2123 = vsel %vm2091, %v2079, 0
        %v2126 = vsel %vm2091, %v2080, 0
        %2128 = vmatprep.subr.mxu0 0.0
        %2129 = vmatpush1.msra.mxu0 0.0
        %2130 = vmatprep.subr.mxu0 0.0
        %2131 = vmatpush1.msra.mxu0 0.0
        %2132 = vmatprep.subr.mxu0 %v2096
        %2133 = vmatpush1.msra.mxu0 %v2093
        %2134 = vmatprep.subr.mxu0 %v2058
        %2135 = vmatpush1.msra.mxu0 %v2057
        %2136 = vmatprep.subr.mxu0 %v2046
        %2137 = vmatpush1.msra.mxu0 %v2045
        %2138 = vmatprep.subr.mxu0 %v2034
        %2139 = vmatpush1.msra.mxu0 %v2033
        %2140 = vmatprep.subr.mxu0 %v2022
        %2141 = vmatpush1.msra.mxu0 %v2021
        %2142 = vmatprep.subr.mxu0 %v2010
        %2143 = vmatpush1.msra.mxu0 %v2009
        %2144 = vmatprep.subr.mxu0 %v1998
        %2145 = vmatpush1.msra.mxu0 %v1997
        %2146 = vmatprep.subr.mxu0 %v1986
        %2147 = vmatpush1.msra.mxu0 %v1985
        %2148 = vmatprep.subr.mxu0 %v1974
        %2149 = vmatpush1.msra.mxu0 %v1973
        %2150 = vmatprep.subr.mxu0 %v1962
        %2151 = vmatpush1.msra.mxu0 %v1961
        %2152 = vmatprep.subr.mxu0 %v1950
        %2153 = vmatpush1.msra.mxu0 %v1949
        %2154 = vmatprep.subr.mxu0 %v1938
        %2155 = vmatpush1.msra.mxu0 %v1937
        %2156 = vmatprep.subr.mxu0 %v1926
        %2157 = vmatpush1.msra.mxu0 %v1925
        %2158 = vmatprep.subr.mxu0 %v1914
        %2159 = vmatpush1.msra.mxu0 %v1913
        %2160 = vmatprep.subr.mxu0 0.0
        %2161 = vmatpush2.msra.mxu0 0.0
        %2162 = vmatprep.subr.mxu0 0.0
        %2163 = vmatpush2.msra.mxu0 0.0
        %2164 = vmatprep.subr.mxu0 0.0
        %2165 = vmatpush2.msra.mxu0 0.0
        %2166 = vmatprep.subr.mxu0 0.0
        %2167 = vmatpush2.msra.mxu0 0.0
        %2168 = vmatprep.subr.mxu0 0.0
        %2169 = vmatpush2.msra.mxu0 0.0
        %2170 = vmatprep.subr.mxu0 0.0
        %2171 = vmatpush2.msra.mxu0 0.0
        %2172 = vmatprep.subr.mxu0 0.0
        %2173 = vmatpush2.msra.mxu0 0.0
        %2174 = vmatprep.subr.mxu0 0.0
        %2175 = vmatpush2.msra.mxu0 0.0
        %2176 = vmatprep.subr.mxu0 0.0
        %2177 = vmatpush2.msra.mxu0 0.0
        %2178 = vmatprep.subr.mxu0 0.0
        %2179 = vmatpush2.msra.mxu0 0.0
        %2180 = vmatprep.subr.mxu0 0.0
        %2181 = vmatpush2.msra.mxu0 0.0
        %2182 = vmatprep.subr.mxu0 0.0
        %2183 = vmatpush2.msra.mxu0 0.0
        %2184 = vmatprep.subr.mxu0 0.0
        %2185 = vmatpush2.msra.mxu0 0.0
        %2186 = vmatprep.subr.mxu0 0.0
        %2187 = vmatpush2.msra.mxu0 0.0
        %2188 = vmatprep.subr.mxu0 0.0
        %2189 = vmatpush2.msra.mxu0 0.0
        %2190 = vmatprep.subr.mxu0 0.0
        %2191 = vmatpush2.msra.mxu0 0.0
        %2192 = vmatprep.mubr.f32.mxu0 0.0
        %2193 = vmatmul.mubr.f32.gmra.mxu0 %v2089
        %v2194 = vpop.f32.mrf.mxu0
        %v2195 = vadd.f32 %v2085, %v2194
        %v2196 = vpop.f32.mrf.mxu0
        %v2197 = vadd.f32 %v2085, %v2196
        %2198 = vdwg.mxu0
        %2199 = vmatprep.subr.mxu0 0.0
        %2200 = vmatpush1.msra.mxu0 0.0
        %2201 = vmatprep.subr.mxu0 0.0
        %2202 = vmatpush1.msra.mxu0 0.0
        %2203 = vmatprep.subr.mxu0 %v2102
        %2204 = vmatpush1.msra.mxu0 %v2099
        %2205 = vmatprep.subr.mxu0 %v2060
        %2206 = vmatpush1.msra.mxu0 %v2059
        %2207 = vmatprep.subr.mxu0 %v2048
        %2208 = vmatpush1.msra.mxu0 %v2047
        %2209 = vmatprep.subr.mxu0 %v2036
        %2210 = vmatpush1.msra.mxu0 %v2035
        %2211 = vmatprep.subr.mxu0 %v2024
        %2212 = vmatpush1.msra.mxu0 %v2023
        %2213 = vmatprep.subr.mxu0 %v2012
        %2214 = vmatpush1.msra.mxu0 %v2011
        %2215 = vmatprep.subr.mxu0 %v2000
        %2216 = vmatpush1.msra.mxu0 %v1999
        %2217 = vmatprep.subr.mxu0 %v1988
        %2218 = vmatpush1.msra.mxu0 %v1987
        %2219 = vmatprep.subr.mxu0 %v1976
        %2220 = vmatpush1.msra.mxu0 %v1975
        %2221 = vmatprep.subr.mxu0 %v1964
        %2222 = vmatpush1.msra.mxu0 %v1963
        %2223 = vmatprep.subr.mxu0 %v1952
        %2224 = vmatpush1.msra.mxu0 %v1951
        %2225 = vmatprep.subr.mxu0 %v1940
        %2226 = vmatpush1.msra.mxu0 %v1939
        %2227 = vmatprep.subr.mxu0 %v1928
        %2228 = vmatpush1.msra.mxu0 %v1927
        %2229 = vmatprep.subr.mxu0 %v1916
        %2230 = vmatpush1.msra.mxu0 %v1915
        %2231 = vmatprep.subr.mxu0 0.0
        %2232 = vmatpush2.msra.mxu0 0.0
        %2233 = vmatprep.subr.mxu0 0.0
        %2234 = vmatpush2.msra.mxu0 0.0
        %2235 = vmatprep.subr.mxu0 0.0
        %2236 = vmatpush2.msra.mxu0 0.0
        %2237 = vmatprep.subr.mxu0 0.0
        %2238 = vmatpush2.msra.mxu0 0.0
        %2239 = vmatprep.subr.mxu0 0.0
        %2240 = vmatpush2.msra.mxu0 0.0
        %2241 = vmatprep.subr.mxu0 0.0
        %2242 = vmatpush2.msra.mxu0 0.0
        %2243 = vmatprep.subr.mxu0 0.0
        %2244 = vmatpush2.msra.mxu0 0.0
        %2245 = vmatprep.subr.mxu0 0.0
        %2246 = vmatpush2.msra.mxu0 0.0
        %2247 = vmatprep.subr.mxu0 0.0
        %2248 = vmatpush2.msra.mxu0 0.0
        %2249 = vmatprep.subr.mxu0 0.0
        %2250 = vmatpush2.msra.mxu0 0.0
        %2251 = vmatprep.subr.mxu0 0.0
        %2252 = vmatpush2.msra.mxu0 0.0
        %2253 = vmatprep.subr.mxu0 0.0
        %2254 = vmatpush2.msra.mxu0 0.0
        %2255 = vmatprep.subr.mxu0 0.0
        %2256 = vmatpush2.msra.mxu0 0.0
        %2257 = vmatprep.subr.mxu0 0.0
        %2258 = vmatpush2.msra.mxu0 0.0
        %2259 = vmatprep.subr.mxu0 0.0
        %2260 = vmatpush2.msra.mxu0 0.0
        %2261 = vmatprep.subr.mxu0 0.0
        %2262 = vmatpush2.msra.mxu0 0.0
        %2263 = vmatprep.mubr.f32.mxu0 0.0
        %2264 = vmatmul.mubr.f32.gmra.mxu0 %v2089
        %v2265 = vpop.f32.mrf.mxu0
        %v2266 = vadd.f32 %v2085, %v2265
        %v2267 = vpop.f32.mrf.mxu0
        %v2268 = vadd.f32 %v2085, %v2267
        %2269 = vdwg.mxu0
        %2270 = vmatprep.subr.mxu0 0.0
        %2271 = vmatpush1.msra.mxu0 0.0
        %2272 = vmatprep.subr.mxu0 0.0
        %2273 = vmatpush1.msra.mxu0 0.0
        %2274 = vmatprep.subr.mxu0 %v2108
        %2275 = vmatpush1.msra.mxu0 %v2105
        %2276 = vmatprep.subr.mxu0 %v2062
        %2277 = vmatpush1.msra.mxu0 %v2061
        %2278 = vmatprep.subr.mxu0 %v2050
        %2279 = vmatpush1.msra.mxu0 %v2049
        %2280 = vmatprep.subr.mxu0 %v2038
        %2281 = vmatpush1.msra.mxu0 %v2037
        %2282 = vmatprep.subr.mxu0 %v2026
        %2283 = vmatpush1.msra.mxu0 %v2025
        %2284 = vmatprep.subr.mxu0 %v2014
        %2285 = vmatpush1.msra.mxu0 %v2013
        %2286 = vmatprep.subr.mxu0 %v2002
        %2287 = vmatpush1.msra.mxu0 %v2001
        %2288 = vmatprep.subr.mxu0 %v1990
        %2289 = vmatpush1.msra.mxu0 %v1989
        %2290 = vmatprep.subr.mxu0 %v1978
        %2291 = vmatpush1.msra.mxu0 %v1977
        %2292 = vmatprep.subr.mxu0 %v1966
        %2293 = vmatpush1.msra.mxu0 %v1965
        %2294 = vmatprep.subr.mxu0 %v1954
        %2295 = vmatpush1.msra.mxu0 %v1953
        %2296 = vmatprep.subr.mxu0 %v1942
        %2297 = vmatpush1.msra.mxu0 %v1941
        %2298 = vmatprep.subr.mxu0 %v1930
        %2299 = vmatpush1.msra.mxu0 %v1929
        %2300 = vmatprep.subr.mxu0 %v1918
        %2301 = vmatpush1.msra.mxu0 %v1917
        %2302 = vmatprep.subr.mxu0 0.0
        %2303 = vmatpush2.msra.mxu0 0.0
        %2304 = vmatprep.subr.mxu0 0.0
        %2305 = vmatpush2.msra.mxu0 0.0
        %2306 = vmatprep.subr.mxu0 0.0
        %2307 = vmatpush2.msra.mxu0 0.0
        %2308 = vmatprep.subr.mxu0 0.0
        %2309 = vmatpush2.msra.mxu0 0.0
        %2310 = vmatprep.subr.mxu0 0.0
        %2311 = vmatpush2.msra.mxu0 0.0
        %2312 = vmatprep.subr.mxu0 0.0
        %2313 = vmatpush2.msra.mxu0 0.0
        %2314 = vmatprep.subr.mxu0 0.0
        %2315 = vmatpush2.msra.mxu0 0.0
        %2316 = vmatprep.subr.mxu0 0.0
        %2317 = vmatpush2.msra.mxu0 0.0
        %2318 = vmatprep.subr.mxu0 0.0
        %2319 = vmatpush2.msra.mxu0 0.0
        %2320 = vmatprep.subr.mxu0 0.0
        %2321 = vmatpush2.msra.mxu0 0.0
        %2322 = vmatprep.subr.mxu0 0.0
        %2323 = vmatpush2.msra.mxu0 0.0
        %2324 = vmatprep.subr.mxu0 0.0
        %2325 = vmatpush2.msra.mxu0 0.0
        %2326 = vmatprep.subr.mxu0 0.0
        %2327 = vmatpush2.msra.mxu0 0.0
        %2328 = vmatprep.subr.mxu0 0.0
        %2329 = vmatpush2.msra.mxu0 0.0
        %2330 = vmatprep.subr.mxu0 0.0
        %2331 = vmatpush2.msra.mxu0 0.0
        %2332 = vmatprep.subr.mxu0 0.0
        %2333 = vmatpush2.msra.mxu0 0.0
        %2334 = vmatprep.mubr.f32.mxu0 0.0
        %2335 = vmatmul.mubr.f32.gmra.mxu0 %v2089
        %v2336 = vpop.f32.mrf.mxu0
        %v2337 = vadd.f32 %v2085, %v2336
        %v2338 = vpop.f32.mrf.mxu0
        %v2339 = vadd.f32 %v2085, %v2338
        %2340 = vdwg.mxu0
        %2341 = vmatprep.subr.mxu0 0.0
        %2342 = vmatpush1.msra.mxu0 0.0
        %2343 = vmatprep.subr.mxu0 0.0
        %2344 = vmatpush1.msra.mxu0 0.0
        %2345 = vmatprep.subr.mxu0 %v2114
        %2346 = vmatpush1.msra.mxu0 %v2111
        %2347 = vmatprep.subr.mxu0 %v2064
        %2348 = vmatpush1.msra.mxu0 %v2063
        %2349 = vmatprep.subr.mxu0 %v2052
        %2350 = vmatpush1.msra.mxu0 %v2051
        %2351 = vmatprep.subr.mxu0 %v2040
        %2352 = vmatpush1.msra.mxu0 %v2039
        %2353 = vmatprep.subr.mxu0 %v2028
        %2354 = vmatpush1.msra.mxu0 %v2027
        %2355 = vmatprep.subr.mxu0 %v2016
        %2356 = vmatpush1.msra.mxu0 %v2015
        %2357 = vmatprep.subr.mxu0 %v2004
        %2358 = vmatpush1.msra.mxu0 %v2003
        %2359 = vmatprep.subr.mxu0 %v1992
        %2360 = vmatpush1.msra.mxu0 %v1991
        %2361 = vmatprep.subr.mxu0 %v1980
        %2362 = vmatpush1.msra.mxu0 %v1979
        %2363 = vmatprep.subr.mxu0 %v1968
        %2364 = vmatpush1.msra.mxu0 %v1967
        %2365 = vmatprep.subr.mxu0 %v1956
        %2366 = vmatpush1.msra.mxu0 %v1955
        %2367 = vmatprep.subr.mxu0 %v1944
        %2368 = vmatpush1.msra.mxu0 %v1943
        %2369 = vmatprep.subr.mxu0 %v1932
        %2370 = vmatpush1.msra.mxu0 %v1931
        %2371 = vmatprep.subr.mxu0 %v1920
        %2372 = vmatpush1.msra.mxu0 %v1919
        %2373 = vmatprep.subr.mxu0 0.0
        %2374 = vmatpush2.msra.mxu0 0.0
        %2375 = vmatprep.subr.mxu0 0.0
        %2376 = vmatpush2.msra.mxu0 0.0
        %2377 = vmatprep.subr.mxu0 0.0
        %2378 = vmatpush2.msra.mxu0 0.0
        %2379 = vmatprep.subr.mxu0 0.0
        %2380 = vmatpush2.msra.mxu0 0.0
        %2381 = vmatprep.subr.mxu0 0.0
        %2382 = vmatpush2.msra.mxu0 0.0
        %2383 = vmatprep.subr.mxu0 0.0
        %2384 = vmatpush2.msra.mxu0 0.0
        %2385 = vmatprep.subr.mxu0 0.0
        %2386 = vmatpush2.msra.mxu0 0.0
        %2387 = vmatprep.subr.mxu0 0.0
        %2388 = vmatpush2.msra.mxu0 0.0
        %2389 = vmatprep.subr.mxu0 0.0
        %2390 = vmatpush2.msra.mxu0 0.0
        %2391 = vmatprep.subr.mxu0 0.0
        %2392 = vmatpush2.msra.mxu0 0.0
        %2393 = vmatprep.subr.mxu0 0.0
        %2394 = vmatpush2.msra.mxu0 0.0
        %2395 = vmatprep.subr.mxu0 0.0
        %2396 = vmatpush2.msra.mxu0 0.0
        %2397 = vmatprep.subr.mxu0 0.0
        %2398 = vmatpush2.msra.mxu0 0.0
        %2399 = vmatprep.subr.mxu0 0.0
        %2400 = vmatpush2.msra.mxu0 0.0
        %2401 = vmatprep.subr.mxu0 0.0
        %2402 = vmatpush2.msra.mxu0 0.0
        %2403 = vmatprep.subr.mxu0 0.0
        %2404 = vmatpush2.msra.mxu0 0.0
        %2405 = vmatprep.mubr.f32.mxu0 0.0
        %2406 = vmatmul.mubr.f32.gmra.mxu0 %v2089
        %v2407 = vpop.f32.mrf.mxu0
        %v2408 = vadd.f32 %v2085, %v2407
        %v2409 = vpop.f32.mrf.mxu0
        %v2410 = vadd.f32 %v2085, %v2409
        %2411 = vdwg.mxu0
        %2412 = vmatprep.subr.mxu0 0.0
        %2413 = vmatpush1.msra.mxu0 0.0
        %2414 = vmatprep.subr.mxu0 0.0
        %2415 = vmatpush1.msra.mxu0 0.0
        %2416 = vmatprep.subr.mxu0 %v2120
        %2417 = vmatpush1.msra.mxu0 %v2117
        %2418 = vmatprep.subr.mxu0 %v2066
        %2419 = vmatpush1.msra.mxu0 %v2065
        %2420 = vmatprep.subr.mxu0 %v2054
        %2421 = vmatpush1.msra.mxu0 %v2053
        %2422 = vmatprep.subr.mxu0 %v2042
        %2423 = vmatpush1.msra.mxu0 %v2041
        %2424 = vmatprep.subr.mxu0 %v2030
        %2425 = vmatpush1.msra.mxu0 %v2029
        %2426 = vmatprep.subr.mxu0 %v2018
        %2427 = vmatpush1.msra.mxu0 %v2017
        %2428 = vmatprep.subr.mxu0 %v2006
        %2429 = vmatpush1.msra.mxu0 %v2005
        %2430 = vmatprep.subr.mxu0 %v1994
        %2431 = vmatpush1.msra.mxu0 %v1993
        %2432 = vmatprep.subr.mxu0 %v1982
        %2433 = vmatpush1.msra.mxu0 %v1981
        %2434 = vmatprep.subr.mxu0 %v1970
        %2435 = vmatpush1.msra.mxu0 %v1969
        %2436 = vmatprep.subr.mxu0 %v1958
        %2437 = vmatpush1.msra.mxu0 %v1957
        %2438 = vmatprep.subr.mxu0 %v1946
        %2439 = vmatpush1.msra.mxu0 %v1945
        %2440 = vmatprep.subr.mxu0 %v1934
        %2441 = vmatpush1.msra.mxu0 %v1933
        %2442 = vmatprep.subr.mxu0 %v1922
        %2443 = vmatpush1.msra.mxu0 %v1921
        %2444 = vmatprep.subr.mxu0 0.0
        %2445 = vmatpush2.msra.mxu0 0.0
        %2446 = vmatprep.subr.mxu0 0.0
        %2447 = vmatpush2.msra.mxu0 0.0
        %2448 = vmatprep.subr.mxu0 0.0
        %2449 = vmatpush2.msra.mxu0 0.0
        %2450 = vmatprep.subr.mxu0 0.0
        %2451 = vmatpush2.msra.mxu0 0.0
        %2452 = vmatprep.subr.mxu0 0.0
        %2453 = vmatpush2.msra.mxu0 0.0
        %2454 = vmatprep.subr.mxu0 0.0
        %2455 = vmatpush2.msra.mxu0 0.0
        %2456 = vmatprep.subr.mxu0 0.0
        %2457 = vmatpush2.msra.mxu0 0.0
        %2458 = vmatprep.subr.mxu0 0.0
        %2459 = vmatpush2.msra.mxu0 0.0
        %2460 = vmatprep.subr.mxu0 0.0
        %2461 = vmatpush2.msra.mxu0 0.0
        %2462 = vmatprep.subr.mxu0 0.0
        %2463 = vmatpush2.msra.mxu0 0.0
        %2464 = vmatprep.subr.mxu0 0.0
        %2465 = vmatpush2.msra.mxu0 0.0
        %2466 = vmatprep.subr.mxu0 0.0
        %2467 = vmatpush2.msra.mxu0 0.0
        %2468 = vmatprep.subr.mxu0 0.0
        %2469 = vmatpush2.msra.mxu0 0.0
        %2470 = vmatprep.subr.mxu0 0.0
        %2471 = vmatpush2.msra.mxu0 0.0
        %2472 = vmatprep.subr.mxu0 0.0
        %2473 = vmatpush2.msra.mxu0 0.0
        %2474 = vmatprep.subr.mxu0 0.0
        %2475 = vmatpush2.msra.mxu0 0.0
        %2476 = vmatprep.mubr.f32.mxu0 0.0
        %2477 = vmatmul.mubr.f32.gmra.mxu0 %v2089
        %v2478 = vpop.f32.mrf.mxu0
        %v2479 = vadd.f32 %v2085, %v2478
        %v2480 = vpop.f32.mrf.mxu0
        %v2481 = vadd.f32 %v2085, %v2480
        %2482 = vdwg.mxu0
        %2483 = vmatprep.subr.mxu0 0.0
        %2484 = vmatpush1.msra.mxu0 0.0
        %2485 = vmatprep.subr.mxu0 0.0
        %2486 = vmatpush1.msra.mxu0 0.0
        %2487 = vmatprep.subr.mxu0 %v2126
        %2488 = vmatpush1.msra.mxu0 %v2123
        %2489 = vmatprep.subr.mxu0 %v2068
        %2490 = vmatpush1.msra.mxu0 %v2067
        %2491 = vmatprep.subr.mxu0 %v2056
        %2492 = vmatpush1.msra.mxu0 %v2055
        %2493 = vmatprep.subr.mxu0 %v2044
        %2494 = vmatpush1.msra.mxu0 %v2043
        %2495 = vmatprep.subr.mxu0 %v2032
        %2496 = vmatpush1.msra.mxu0 %v2031
        %2497 = vmatprep.subr.mxu0 %v2020
        %2498 = vmatpush1.msra.mxu0 %v2019
        %2499 = vmatprep.subr.mxu0 %v2008
        %2500 = vmatpush1.msra.mxu0 %v2007
        %2501 = vmatprep.subr.mxu0 %v1996
        %2502 = vmatpush1.msra.mxu0 %v1995
        %2503 = vmatprep.subr.mxu0 %v1984
        %2504 = vmatpush1.msra.mxu0 %v1983
        %2505 = vmatprep.subr.mxu0 %v1972
        %2506 = vmatpush1.msra.mxu0 %v1971
        %2507 = vmatprep.subr.mxu0 %v1960
        %2508 = vmatpush1.msra.mxu0 %v1959
        %2509 = vmatprep.subr.mxu0 %v1948
        %2510 = vmatpush1.msra.mxu0 %v1947
        %2511 = vmatprep.subr.mxu0 %v1936
        %2512 = vmatpush1.msra.mxu0 %v1935
        %2513 = vmatprep.subr.mxu0 %v1924
        %2514 = vmatpush1.msra.mxu0 %v1923
        %2515 = vmatprep.subr.mxu0 0.0
        %2516 = vmatpush2.msra.mxu0 0.0
        %2517 = vmatprep.subr.mxu0 0.0
        %2518 = vmatpush2.msra.mxu0 0.0
        %2519 = vmatprep.subr.mxu0 0.0
        %2520 = vmatpush2.msra.mxu0 0.0
        %2521 = vmatprep.subr.mxu0 0.0
        %2522 = vmatpush2.msra.mxu0 0.0
        %2523 = vmatprep.subr.mxu0 0.0
        %2524 = vmatpush2.msra.mxu0 0.0
        %2525 = vmatprep.subr.mxu0 0.0
        %2526 = vmatpush2.msra.mxu0 0.0
        %2527 = vmatprep.subr.mxu0 0.0
        %2528 = vmatpush2.msra.mxu0 0.0
        %2529 = vmatprep.subr.mxu0 0.0
        %2530 = vmatpush2.msra.mxu0 0.0
        %2531 = vmatprep.subr.mxu0 0.0
        %2532 = vmatpush2.msra.mxu0 0.0
        %2533 = vmatprep.subr.mxu0 0.0
        %2534 = vmatpush2.msra.mxu0 0.0
        %2535 = vmatprep.subr.mxu0 0.0
        %2536 = vmatpush2.msra.mxu0 0.0
        %2537 = vmatprep.subr.mxu0 0.0
        %2538 = vmatpush2.msra.mxu0 0.0
        %2539 = vmatprep.subr.mxu0 0.0
        %2540 = vmatpush2.msra.mxu0 0.0
        %2541 = vmatprep.subr.mxu0 0.0
        %2542 = vmatpush2.msra.mxu0 0.0
        %2543 = vmatprep.subr.mxu0 0.0
        %2544 = vmatpush2.msra.mxu0 0.0
        %2545 = vmatprep.subr.mxu0 0.0
        %2546 = vmatpush2.msra.mxu0 0.0
        %2547 = vmatprep.mubr.f32.mxu0 0.0
        %2548 = vmatmul.mubr.f32.gmra.mxu0 %v2089
        %v2549 = vpop.f32.mrf.mxu0
        %v2550 = vadd.f32 %v2085, %v2549
        %v2551 = vpop.f32.mrf.mxu0
        %v2552 = vadd.f32 %v2085, %v2551
        %2553 = vdwg.mxu0
        %v2554 = vmul.f32 %v2195, 0.2
        %v2555 = vmul.f32 %v2197, 0.2
        %v2556 = vmul.f32 %v2266, 0.2
        %v2557 = vmul.f32 %v2268, 0.2
        %v2558 = vmul.f32 %v2337, 0.2
        %v2559 = vmul.f32 %v2339, 0.2
        %v2560 = vmul.f32 %v2408, 0.2
        %v2561 = vmul.f32 %v2410, 0.2
        %v2562 = vmul.f32 %v2479, 0.2
        %v2563 = vmul.f32 %v2481, 0.2
        %v2564 = vmul.f32 %v2550, 0.2
        %v2565 = vmul.f32 %v2552, 0.2
        %v2566 = vmax.f32 %v2195, %v2554
        %v2567 = vmax.f32 %v2197, %v2555
        %v2568 = vmax.f32 %v2266, %v2556
        %v2569 = vmax.f32 %v2268, %v2557
        %v2570 = vmax.f32 %v2337, %v2558
        %v2571 = vmax.f32 %v2339, %v2559
        %v2572 = vmax.f32 %v2408, %v2560
        %v2573 = vmax.f32 %v2410, %v2561
        %v2574 = vmax.f32 %v2479, %v2562
        %v2575 = vmax.f32 %v2481, %v2563
        %v2576 = vmax.f32 %v2550, %v2564
        %v2577 = vmax.f32 %v2552, %v2565
        %2578 = vst [vmem:[#allocation2] sm:$0xf] %v2566
        %2579 = vst [vmem:[#allocation2 + $0x8] sm:$0xf] %v2567
        %2580 = vst [vmem:[#allocation2 + $0x10] sm:$0xf] %v2568
        %2581 = vst [vmem:[#allocation2 + $0x18] sm:$0xf] %v2569
        %2582 = vst [vmem:[#allocation2 + $0x20] sm:$0xf] %v2570
        %2583 = vst [vmem:[#allocation2 + $0x28] sm:$0xf] %v2571
        %2584 = vst [vmem:[#allocation2 + $0x30] sm:$0xf] %v2572
        %2585 = vst [vmem:[#allocation2 + $0x38] sm:$0xf] %v2573
        %vm2586 = vcmask 617472
        %2587 = vst.msk [vmem:[#allocation2 + $0x40] sm:$0xf] %vm2586, %v2574
        %v2597 = vrot.slane %v2566, 4
        %v2598 = vrot.slane %v2567, 4
        %v2599 = vrot.slane %v2568, 4
        %v2600 = vrot.slane %v2569, 4
        %v2601 = vrot.slane %v2570, 4
        %v2602 = vrot.slane %v2571, 4
        %v2603 = vrot.slane %v2572, 4
        %v2604 = vrot.slane %v2573, 4
        %v2605 = vrot.slane %v2574, 4
        %2606 = vrot.lane.b32.xlu0 %v2597, 127
        %v2607 = vpop.permute.xlu0 %2606
        %2608 = vrot.lane.b32.xlu0 %v2598, 127
        %v2609 = vpop.permute.xlu0 %2608
        %2610 = vrot.lane.b32.xlu0 %v2599, 127
        %v2611 = vpop.permute.xlu0 %2610
        %2612 = vrot.lane.b32.xlu0 %v2600, 127
        %v2613 = vpop.permute.xlu0 %2612
        %2614 = vrot.lane.b32.xlu0 %v2601, 127
        %v2615 = vpop.permute.xlu0 %2614
        %2616 = vrot.lane.b32.xlu0 %v2602, 127
        %v2617 = vpop.permute.xlu0 %2616
        %2618 = vrot.lane.b32.xlu0 %v2603, 127
        %v2619 = vpop.permute.xlu0 %2618
        %2620 = vrot.lane.b32.xlu0 %v2604, 127
        %v2621 = vpop.permute.xlu0 %2620
        %2622 = vrot.lane.b32.xlu0 %v2605, 127
        %v2623 = vpop.permute.xlu0 %2622
        %v2624 = vsel %vm372, %v2607, %v2609
        %v2625 = vsel %vm372, %v2609, %v2611
        %v2626 = vsel %vm372, %v2611, %v2613
        %v2627 = vsel %vm372, %v2613, %v2615
        %v2628 = vsel %vm372, %v2615, %v2617
        %v2629 = vsel %vm372, %v2617, %v2619
        %v2630 = vsel %vm372, %v2619, %v2621
        %v2631 = vsel %vm372, %v2621, %v2623
        %2641 = vst [vmem:[#allocation2] sm:$0xf0] %v2624
        %2642 = vst [vmem:[#allocation2 + $0x8] sm:$0xf0] %v2625
        %2643 = vst [vmem:[#allocation2 + $0x10] sm:$0xf0] %v2626
        %2644 = vst [vmem:[#allocation2 + $0x18] sm:$0xf0] %v2627
        %2645 = vst [vmem:[#allocation2 + $0x20] sm:$0xf0] %v2628
        %2646 = vst [vmem:[#allocation2 + $0x28] sm:$0xf0] %v2629
        %2647 = vst [vmem:[#allocation2 + $0x30] sm:$0xf0] %v2630
        %2648 = vst [vmem:[#allocation2 + $0x38] sm:$0xf0] %v2631
        %vm2649 = vcmask 621572
        %2650 = vst.msk [vmem:[#allocation2 + $0x40] sm:$0xf0] %vm2649, %v2623
        %2651 = vrot.lane.b32.xlu0 %v2566, 126
        %v2652 = vpop.permute.xlu0 %2651
        %2653 = vrot.lane.b32.xlu0 %v2567, 126
        %v2654 = vpop.permute.xlu0 %2653
        %2655 = vrot.lane.b32.xlu0 %v2568, 126
        %v2656 = vpop.permute.xlu0 %2655
        %2657 = vrot.lane.b32.xlu0 %v2569, 126
        %v2658 = vpop.permute.xlu0 %2657
        %2659 = vrot.lane.b32.xlu0 %v2570, 126
        %v2660 = vpop.permute.xlu0 %2659
        %2661 = vrot.lane.b32.xlu0 %v2571, 126
        %v2662 = vpop.permute.xlu0 %2661
        %2663 = vrot.lane.b32.xlu0 %v2572, 126
        %v2664 = vpop.permute.xlu0 %2663
        %2665 = vrot.lane.b32.xlu0 %v2573, 126
        %v2666 = vpop.permute.xlu0 %2665
        %2667 = vrot.lane.b32.xlu0 %v2574, 126
        %v2668 = vpop.permute.xlu0 %2667
        %v2669 = vsel %vm433, %v2652, %v2654
        %v2670 = vsel %vm433, %v2654, %v2656
        %v2671 = vsel %vm433, %v2656, %v2658
        %v2672 = vsel %vm433, %v2658, %v2660
        %v2673 = vsel %vm433, %v2660, %v2662
        %v2674 = vsel %vm433, %v2662, %v2664
        %v2675 = vsel %vm433, %v2664, %v2666
        %v2676 = vsel %vm433, %v2666, %v2668
        %2686 = vst [vmem:[#allocation2 + $0x60] sm:$0xf] %v2669
        %2687 = vst [vmem:[#allocation2 + $0x68] sm:$0xf] %v2670
        %2688 = vst [vmem:[#allocation2 + $0x70] sm:$0xf] %v2671
        %2689 = vst [vmem:[#allocation2 + $0x78] sm:$0xf] %v2672
        %2690 = vst [vmem:[#allocation2 + $0x80] sm:$0xf] %v2673
        %2691 = vst [vmem:[#allocation2 + $0x88] sm:$0xf] %v2674
        %2692 = vst [vmem:[#allocation2 + $0x90] sm:$0xf] %v2675
        %2693 = vst [vmem:[#allocation2 + $0x98] sm:$0xf] %v2676
        %2694 = vst.msk [vmem:[#allocation2 + $0xa0] sm:$0xf] %vm2586, %v2668
        %2695 = vrot.lane.b32.xlu0 %v2597, 116
        %v2696 = vpop.permute.xlu0 %2695
        %2697 = vrot.lane.b32.xlu0 %v2598, 116
        %v2698 = vpop.permute.xlu0 %2697
        %2699 = vrot.lane.b32.xlu0 %v2599, 116
        %v2700 = vpop.permute.xlu0 %2699
        %2701 = vrot.lane.b32.xlu0 %v2600, 116
        %v2702 = vpop.permute.xlu0 %2701
        %2703 = vrot.lane.b32.xlu0 %v2601, 116
        %v2704 = vpop.permute.xlu0 %2703
        %2705 = vrot.lane.b32.xlu0 %v2602, 116
        %v2706 = vpop.permute.xlu0 %2705
        %2707 = vrot.lane.b32.xlu0 %v2603, 116
        %v2708 = vpop.permute.xlu0 %2707
        %2709 = vrot.lane.b32.xlu0 %v2604, 116
        %v2710 = vpop.permute.xlu0 %2709
        %2711 = vrot.lane.b32.xlu0 %v2605, 116
        %v2712 = vpop.permute.xlu0 %2711
        %v2713 = vsel %vm493, %v2696, %v2698
        %v2714 = vsel %vm493, %v2698, %v2700
        %v2715 = vsel %vm493, %v2700, %v2702
        %v2716 = vsel %vm493, %v2702, %v2704
        %v2717 = vsel %vm493, %v2704, %v2706
        %v2718 = vsel %vm493, %v2706, %v2708
        %v2719 = vsel %vm493, %v2708, %v2710
        %v2720 = vsel %vm493, %v2710, %v2712
        %2730 = vst [vmem:[#allocation2 + $0x60] sm:$0xf0] %v2713
        %2731 = vst [vmem:[#allocation2 + $0x68] sm:$0xf0] %v2714
        %2732 = vst [vmem:[#allocation2 + $0x70] sm:$0xf0] %v2715
        %2733 = vst [vmem:[#allocation2 + $0x78] sm:$0xf0] %v2716
        %2734 = vst [vmem:[#allocation2 + $0x80] sm:$0xf0] %v2717
        %2735 = vst [vmem:[#allocation2 + $0x88] sm:$0xf0] %v2718
        %2736 = vst [vmem:[#allocation2 + $0x90] sm:$0xf0] %v2719
        %2737 = vst [vmem:[#allocation2 + $0x98] sm:$0xf0] %v2720
        %2738 = vst.msk [vmem:[#allocation2 + $0xa0] sm:$0xf0] %vm2649, %v2712
        %2739 = vrot.lane.b32.xlu0 %v2566, 115
        %v2740 = vpop.permute.xlu0 %2739
        %2741 = vrot.lane.b32.xlu0 %v2567, 115
        %v2742 = vpop.permute.xlu0 %2741
        %2743 = vrot.lane.b32.xlu0 %v2568, 115
        %v2744 = vpop.permute.xlu0 %2743
        %2745 = vrot.lane.b32.xlu0 %v2569, 115
        %v2746 = vpop.permute.xlu0 %2745
        %2747 = vrot.lane.b32.xlu0 %v2570, 115
        %v2748 = vpop.permute.xlu0 %2747
        %2749 = vrot.lane.b32.xlu0 %v2571, 115
        %v2750 = vpop.permute.xlu0 %2749
        %2751 = vrot.lane.b32.xlu0 %v2572, 115
        %v2752 = vpop.permute.xlu0 %2751
        %2753 = vrot.lane.b32.xlu0 %v2573, 115
        %v2754 = vpop.permute.xlu0 %2753
        %2755 = vrot.lane.b32.xlu0 %v2574, 115
        %v2756 = vpop.permute.xlu0 %2755
        %v2757 = vsel %vm553, %v2740, %v2742
        %v2758 = vsel %vm553, %v2742, %v2744
        %v2759 = vsel %vm553, %v2744, %v2746
        %v2760 = vsel %vm553, %v2746, %v2748
        %v2761 = vsel %vm553, %v2748, %v2750
        %v2762 = vsel %vm553, %v2750, %v2752
        %v2763 = vsel %vm553, %v2752, %v2754
        %v2764 = vsel %vm553, %v2754, %v2756
        %2774 = vst [vmem:[#allocation2 + $0xc0] sm:$0xf] %v2757
        %2775 = vst [vmem:[#allocation2 + $0xc8] sm:$0xf] %v2758
        %2776 = vst [vmem:[#allocation2 + $0xd0] sm:$0xf] %v2759
        %2777 = vst [vmem:[#allocation2 + $0xd8] sm:$0xf] %v2760
        %2778 = vst [vmem:[#allocation2 + $0xe0] sm:$0xf] %v2761
        %2779 = vst [vmem:[#allocation2 + $0xe8] sm:$0xf] %v2762
        %2780 = vst [vmem:[#allocation2 + $0xf0] sm:$0xf] %v2763
        %2781 = vst [vmem:[#allocation2 + $0xf8] sm:$0xf] %v2764
        %2782 = vst.msk [vmem:[#allocation2 + $0x100] sm:$0xf] %vm2586, %v2756
        %2783 = vrot.lane.b32.xlu0 %v2597, 114
        %v2784 = vpop.permute.xlu0 %2783
        %2785 = vrot.lane.b32.xlu0 %v2598, 114
        %v2786 = vpop.permute.xlu0 %2785
        %2787 = vrot.lane.b32.xlu0 %v2599, 114
        %v2788 = vpop.permute.xlu0 %2787
        %2789 = vrot.lane.b32.xlu0 %v2600, 114
        %v2790 = vpop.permute.xlu0 %2789
        %2791 = vrot.lane.b32.xlu0 %v2601, 114
        %v2792 = vpop.permute.xlu0 %2791
        %2793 = vrot.lane.b32.xlu0 %v2602, 114
        %v2794 = vpop.permute.xlu0 %2793
        %2795 = vrot.lane.b32.xlu0 %v2603, 114
        %v2796 = vpop.permute.xlu0 %2795
        %2797 = vrot.lane.b32.xlu0 %v2604, 114
        %v2798 = vpop.permute.xlu0 %2797
        %2799 = vrot.lane.b32.xlu0 %v2605, 114
        %v2800 = vpop.permute.xlu0 %2799
        %v2801 = vsel %vm613, %v2784, %v2786
        %v2802 = vsel %vm613, %v2786, %v2788
        %v2803 = vsel %vm613, %v2788, %v2790
        %v2804 = vsel %vm613, %v2790, %v2792
        %v2805 = vsel %vm613, %v2792, %v2794
        %v2806 = vsel %vm613, %v2794, %v2796
        %v2807 = vsel %vm613, %v2796, %v2798
        %v2808 = vsel %vm613, %v2798, %v2800
        %2818 = vst [vmem:[#allocation2 + $0xc0] sm:$0xf0] %v2801
        %2819 = vst [vmem:[#allocation2 + $0xc8] sm:$0xf0] %v2802
        %2820 = vst [vmem:[#allocation2 + $0xd0] sm:$0xf0] %v2803
        %2821 = vst [vmem:[#allocation2 + $0xd8] sm:$0xf0] %v2804
        %2822 = vst [vmem:[#allocation2 + $0xe0] sm:$0xf0] %v2805
        %2823 = vst [vmem:[#allocation2 + $0xe8] sm:$0xf0] %v2806
        %2824 = vst [vmem:[#allocation2 + $0xf0] sm:$0xf0] %v2807
        %2825 = vst [vmem:[#allocation2 + $0xf8] sm:$0xf0] %v2808
        %2826 = vst.msk [vmem:[#allocation2 + $0x100] sm:$0xf0] %vm2649, %v2800
        %2827 = vrot.lane.b32.xlu0 %v2566, 104
        %v2828 = vpop.permute.xlu0 %2827
        %2829 = vrot.lane.b32.xlu0 %v2567, 104
        %v2830 = vpop.permute.xlu0 %2829
        %2831 = vrot.lane.b32.xlu0 %v2568, 104
        %v2832 = vpop.permute.xlu0 %2831
        %2833 = vrot.lane.b32.xlu0 %v2569, 104
        %v2834 = vpop.permute.xlu0 %2833
        %2835 = vrot.lane.b32.xlu0 %v2570, 104
        %v2836 = vpop.permute.xlu0 %2835
        %2837 = vrot.lane.b32.xlu0 %v2571, 104
        %v2838 = vpop.permute.xlu0 %2837
        %2839 = vrot.lane.b32.xlu0 %v2572, 104
        %v2840 = vpop.permute.xlu0 %2839
        %2841 = vrot.lane.b32.xlu0 %v2573, 104
        %v2842 = vpop.permute.xlu0 %2841
        %2843 = vrot.lane.b32.xlu0 %v2574, 104
        %v2844 = vpop.permute.xlu0 %2843
        %v2845 = vsel %vm673, %v2828, %v2830
        %v2846 = vsel %vm673, %v2830, %v2832
        %v2847 = vsel %vm673, %v2832, %v2834
        %v2848 = vsel %vm673, %v2834, %v2836
        %v2849 = vsel %vm673, %v2836, %v2838
        %v2850 = vsel %vm673, %v2838, %v2840
        %v2851 = vsel %vm673, %v2840, %v2842
        %v2852 = vsel %vm673, %v2842, %v2844
        %2862 = vst [vmem:[#allocation2 + $0x120] sm:$0xf] %v2845
        %2863 = vst [vmem:[#allocation2 + $0x128] sm:$0xf] %v2846
        %2864 = vst [vmem:[#allocation2 + $0x130] sm:$0xf] %v2847
        %2865 = vst [vmem:[#allocation2 + $0x138] sm:$0xf] %v2848
        %2866 = vst [vmem:[#allocation2 + $0x140] sm:$0xf] %v2849
        %2867 = vst [vmem:[#allocation2 + $0x148] sm:$0xf] %v2850
        %2868 = vst [vmem:[#allocation2 + $0x150] sm:$0xf] %v2851
        %2869 = vst [vmem:[#allocation2 + $0x158] sm:$0xf] %v2852
        %2870 = vst.msk [vmem:[#allocation2 + $0x160] sm:$0xf] %vm2586, %v2844
        %2871 = vrot.lane.b32.xlu0 %v2597, 103
        %v2872 = vpop.permute.xlu0 %2871
        %2873 = vrot.lane.b32.xlu0 %v2598, 103
        %v2874 = vpop.permute.xlu0 %2873
        %2875 = vrot.lane.b32.xlu0 %v2599, 103
        %v2876 = vpop.permute.xlu0 %2875
        %2877 = vrot.lane.b32.xlu0 %v2600, 103
        %v2878 = vpop.permute.xlu0 %2877
        %2879 = vrot.lane.b32.xlu0 %v2601, 103
        %v2880 = vpop.permute.xlu0 %2879
        %2881 = vrot.lane.b32.xlu0 %v2602, 103
        %v2882 = vpop.permute.xlu0 %2881
        %2883 = vrot.lane.b32.xlu0 %v2603, 103
        %v2884 = vpop.permute.xlu0 %2883
        %2885 = vrot.lane.b32.xlu0 %v2604, 103
        %v2886 = vpop.permute.xlu0 %2885
        %2887 = vrot.lane.b32.xlu0 %v2605, 103
        %v2888 = vpop.permute.xlu0 %2887
        %v2889 = vsel %vm733, %v2872, %v2874
        %v2890 = vsel %vm733, %v2874, %v2876
        %v2891 = vsel %vm733, %v2876, %v2878
        %v2892 = vsel %vm733, %v2878, %v2880
        %v2893 = vsel %vm733, %v2880, %v2882
        %v2894 = vsel %vm733, %v2882, %v2884
        %v2895 = vsel %vm733, %v2884, %v2886
        %v2896 = vsel %vm733, %v2886, %v2888
        %2906 = vst [vmem:[#allocation2 + $0x120] sm:$0xf0] %v2889
        %2907 = vst [vmem:[#allocation2 + $0x128] sm:$0xf0] %v2890
        %2908 = vst [vmem:[#allocation2 + $0x130] sm:$0xf0] %v2891
        %2909 = vst [vmem:[#allocation2 + $0x138] sm:$0xf0] %v2892
        %2910 = vst [vmem:[#allocation2 + $0x140] sm:$0xf0] %v2893
        %2911 = vst [vmem:[#allocation2 + $0x148] sm:$0xf0] %v2894
        %2912 = vst [vmem:[#allocation2 + $0x150] sm:$0xf0] %v2895
        %2913 = vst [vmem:[#allocation2 + $0x158] sm:$0xf0] %v2896
        %2914 = vst.msk [vmem:[#allocation2 + $0x160] sm:$0xf0] %vm2649, %v2888
        %2915 = vrot.lane.b32.xlu0 %v2566, 102
        %v2916 = vpop.permute.xlu0 %2915
        %2917 = vrot.lane.b32.xlu0 %v2567, 102
        %v2918 = vpop.permute.xlu0 %2917
        %2919 = vrot.lane.b32.xlu0 %v2568, 102
        %v2920 = vpop.permute.xlu0 %2919
        %2921 = vrot.lane.b32.xlu0 %v2569, 102
        %v2922 = vpop.permute.xlu0 %2921
        %2923 = vrot.lane.b32.xlu0 %v2570, 102
        %v2924 = vpop.permute.xlu0 %2923
        %2925 = vrot.lane.b32.xlu0 %v2571, 102
        %v2926 = vpop.permute.xlu0 %2925
        %2927 = vrot.lane.b32.xlu0 %v2572, 102
        %v2928 = vpop.permute.xlu0 %2927
        %2929 = vrot.lane.b32.xlu0 %v2573, 102
        %v2930 = vpop.permute.xlu0 %2929
        %2931 = vrot.lane.b32.xlu0 %v2574, 102
        %v2932 = vpop.permute.xlu0 %2931
        %v2933 = vsel %vm793, %v2916, %v2918
        %v2934 = vsel %vm793, %v2918, %v2920
        %v2935 = vsel %vm793, %v2920, %v2922
        %v2936 = vsel %vm793, %v2922, %v2924
        %v2937 = vsel %vm793, %v2924, %v2926
        %v2938 = vsel %vm793, %v2926, %v2928
        %v2939 = vsel %vm793, %v2928, %v2930
        %v2940 = vsel %vm793, %v2930, %v2932
        %2950 = vst [vmem:[#allocation2 + $0x180] sm:$0xf] %v2933
        %2951 = vst [vmem:[#allocation2 + $0x188] sm:$0xf] %v2934
        %2952 = vst [vmem:[#allocation2 + $0x190] sm:$0xf] %v2935
        %2953 = vst [vmem:[#allocation2 + $0x198] sm:$0xf] %v2936
        %2954 = vst [vmem:[#allocation2 + $0x1a0] sm:$0xf] %v2937
        %2955 = vst [vmem:[#allocation2 + $0x1a8] sm:$0xf] %v2938
        %2956 = vst [vmem:[#allocation2 + $0x1b0] sm:$0xf] %v2939
        %2957 = vst [vmem:[#allocation2 + $0x1b8] sm:$0xf] %v2940
        %2958 = vst.msk [vmem:[#allocation2 + $0x1c0] sm:$0xf] %vm2586, %v2932
        %v2960 = vrot.slane %v2575, 4
        %2961 = vrot.lane.b32.xlu0 %v2598, 112
        %v2962 = vpop.permute.xlu0 %2961
        %2963 = vrot.lane.b32.xlu0 %v2599, 112
        %v2964 = vpop.permute.xlu0 %2963
        %2965 = vrot.lane.b32.xlu0 %v2600, 112
        %v2966 = vpop.permute.xlu0 %2965
        %2967 = vrot.lane.b32.xlu0 %v2601, 112
        %v2968 = vpop.permute.xlu0 %2967
        %2969 = vrot.lane.b32.xlu0 %v2602, 112
        %v2970 = vpop.permute.xlu0 %2969
        %2971 = vrot.lane.b32.xlu0 %v2603, 112
        %v2972 = vpop.permute.xlu0 %2971
        %2973 = vrot.lane.b32.xlu0 %v2604, 112
        %v2974 = vpop.permute.xlu0 %2973
        %2975 = vrot.lane.b32.xlu0 %v2605, 112
        %v2976 = vpop.permute.xlu0 %2975
        %2977 = vrot.lane.b32.xlu0 %v2960, 112
        %v2978 = vpop.permute.xlu0 %2977
        %v2979 = vsel %vm855, %v2962, %v2964
        %v2980 = vsel %vm855, %v2964, %v2966
        %v2981 = vsel %vm855, %v2966, %v2968
        %v2982 = vsel %vm855, %v2968, %v2970
        %v2983 = vsel %vm855, %v2970, %v2972
        %v2984 = vsel %vm855, %v2972, %v2974
        %v2985 = vsel %vm855, %v2974, %v2976
        %v2986 = vsel %vm855, %v2976, %v2978
        %2996 = vst [vmem:[#allocation2 + $0x180] sm:$0xf0] %v2979
        %2997 = vst [vmem:[#allocation2 + $0x188] sm:$0xf0] %v2980
        %2998 = vst [vmem:[#allocation2 + $0x190] sm:$0xf0] %v2981
        %2999 = vst [vmem:[#allocation2 + $0x198] sm:$0xf0] %v2982
        %3000 = vst [vmem:[#allocation2 + $0x1a0] sm:$0xf0] %v2983
        %3001 = vst [vmem:[#allocation2 + $0x1a8] sm:$0xf0] %v2984
        %3002 = vst [vmem:[#allocation2 + $0x1b0] sm:$0xf0] %v2985
        %3003 = vst [vmem:[#allocation2 + $0x1b8] sm:$0xf0] %v2986
        %3004 = vst.msk [vmem:[#allocation2 + $0x1c0] sm:$0xf0] %vm2649, %v2978
        %3005 = vrot.lane.b32.xlu0 %v2567, 111
        %v3006 = vpop.permute.xlu0 %3005
        %3007 = vrot.lane.b32.xlu0 %v2568, 111
        %v3008 = vpop.permute.xlu0 %3007
        %3009 = vrot.lane.b32.xlu0 %v2569, 111
        %v3010 = vpop.permute.xlu0 %3009
        %3011 = vrot.lane.b32.xlu0 %v2570, 111
        %v3012 = vpop.permute.xlu0 %3011
        %3013 = vrot.lane.b32.xlu0 %v2571, 111
        %v3014 = vpop.permute.xlu0 %3013
        %3015 = vrot.lane.b32.xlu0 %v2572, 111
        %v3016 = vpop.permute.xlu0 %3015
        %3017 = vrot.lane.b32.xlu0 %v2573, 111
        %v3018 = vpop.permute.xlu0 %3017
        %3019 = vrot.lane.b32.xlu0 %v2574, 111
        %v3020 = vpop.permute.xlu0 %3019
        %3021 = vrot.lane.b32.xlu0 %v2575, 111
        %v3022 = vpop.permute.xlu0 %3021
        %v3023 = vsel %vm915, %v3006, %v3008
        %v3024 = vsel %vm915, %v3008, %v3010
        %v3025 = vsel %vm915, %v3010, %v3012
        %v3026 = vsel %vm915, %v3012, %v3014
        %v3027 = vsel %vm915, %v3014, %v3016
        %v3028 = vsel %vm915, %v3016, %v3018
        %v3029 = vsel %vm915, %v3018, %v3020
        %v3030 = vsel %vm915, %v3020, %v3022
        %3040 = vst [vmem:[#allocation2 + $0x1e0] sm:$0xf] %v3023
        %3041 = vst [vmem:[#allocation2 + $0x1e8] sm:$0xf] %v3024
        %3042 = vst [vmem:[#allocation2 + $0x1f0] sm:$0xf] %v3025
        %3043 = vst [vmem:[#allocation2 + $0x1f8] sm:$0xf] %v3026
        %3044 = vst [vmem:[#allocation2 + $0x200] sm:$0xf] %v3027
        %3045 = vst [vmem:[#allocation2 + $0x208] sm:$0xf] %v3028
        %3046 = vst [vmem:[#allocation2 + $0x210] sm:$0xf] %v3029
        %3047 = vst [vmem:[#allocation2 + $0x218] sm:$0xf] %v3030
        %3048 = vst.msk [vmem:[#allocation2 + $0x220] sm:$0xf] %vm2586, %v3022
        %3049 = vrot.lane.b32.xlu0 %v2598, 110
        %v3050 = vpop.permute.xlu0 %3049
        %3051 = vrot.lane.b32.xlu0 %v2599, 110
        %v3052 = vpop.permute.xlu0 %3051
        %3053 = vrot.lane.b32.xlu0 %v2600, 110
        %v3054 = vpop.permute.xlu0 %3053
        %3055 = vrot.lane.b32.xlu0 %v2601, 110
        %v3056 = vpop.permute.xlu0 %3055
        %3057 = vrot.lane.b32.xlu0 %v2602, 110
        %v3058 = vpop.permute.xlu0 %3057
        %3059 = vrot.lane.b32.xlu0 %v2603, 110
        %v3060 = vpop.permute.xlu0 %3059
        %3061 = vrot.lane.b32.xlu0 %v2604, 110
        %v3062 = vpop.permute.xlu0 %3061
        %3063 = vrot.lane.b32.xlu0 %v2605, 110
        %v3064 = vpop.permute.xlu0 %3063
        %3065 = vrot.lane.b32.xlu0 %v2960, 110
        %v3066 = vpop.permute.xlu0 %3065
        %v3067 = vsel %vm975, %v3050, %v3052
        %v3068 = vsel %vm975, %v3052, %v3054
        %v3069 = vsel %vm975, %v3054, %v3056
        %v3070 = vsel %vm975, %v3056, %v3058
        %v3071 = vsel %vm975, %v3058, %v3060
        %v3072 = vsel %vm975, %v3060, %v3062
        %v3073 = vsel %vm975, %v3062, %v3064
        %v3074 = vsel %vm975, %v3064, %v3066
        %3084 = vst [vmem:[#allocation2 + $0x1e0] sm:$0xf0] %v3067
        %3085 = vst [vmem:[#allocation2 + $0x1e8] sm:$0xf0] %v3068
        %3086 = vst [vmem:[#allocation2 + $0x1f0] sm:$0xf0] %v3069
        %3087 = vst [vmem:[#allocation2 + $0x1f8] sm:$0xf0] %v3070
        %3088 = vst [vmem:[#allocation2 + $0x200] sm:$0xf0] %v3071
        %3089 = vst [vmem:[#allocation2 + $0x208] sm:$0xf0] %v3072
        %3090 = vst [vmem:[#allocation2 + $0x210] sm:$0xf0] %v3073
        %3091 = vst [vmem:[#allocation2 + $0x218] sm:$0xf0] %v3074
        %3092 = vst.msk [vmem:[#allocation2 + $0x220] sm:$0xf0] %vm2649, %v3066
        %3093 = vrot.lane.b32.xlu0 %v2567, 100
        %v3094 = vpop.permute.xlu0 %3093
        %3095 = vrot.lane.b32.xlu0 %v2568, 100
        %v3096 = vpop.permute.xlu0 %3095
        %3097 = vrot.lane.b32.xlu0 %v2569, 100
        %v3098 = vpop.permute.xlu0 %3097
        %3099 = vrot.lane.b32.xlu0 %v2570, 100
        %v3100 = vpop.permute.xlu0 %3099
        %3101 = vrot.lane.b32.xlu0 %v2571, 100
        %v3102 = vpop.permute.xlu0 %3101
        %3103 = vrot.lane.b32.xlu0 %v2572, 100
        %v3104 = vpop.permute.xlu0 %3103
        %3105 = vrot.lane.b32.xlu0 %v2573, 100
        %v3106 = vpop.permute.xlu0 %3105
        %3107 = vrot.lane.b32.xlu0 %v2574, 100
        %v3108 = vpop.permute.xlu0 %3107
        %3109 = vrot.lane.b32.xlu0 %v2575, 100
        %v3110 = vpop.permute.xlu0 %3109
        %v3111 = vsel %vm1035, %v3094, %v3096
        %v3112 = vsel %vm1035, %v3096, %v3098
        %v3113 = vsel %vm1035, %v3098, %v3100
        %v3114 = vsel %vm1035, %v3100, %v3102
        %v3115 = vsel %vm1035, %v3102, %v3104
        %v3116 = vsel %vm1035, %v3104, %v3106
        %v3117 = vsel %vm1035, %v3106, %v3108
        %v3118 = vsel %vm1035, %v3108, %v3110
        %3128 = vst [vmem:[#allocation2 + $0x240] sm:$0xf] %v3111
        %3129 = vst [vmem:[#allocation2 + $0x248] sm:$0xf] %v3112
        %3130 = vst [vmem:[#allocation2 + $0x250] sm:$0xf] %v3113
        %3131 = vst [vmem:[#allocation2 + $0x258] sm:$0xf] %v3114
        %3132 = vst [vmem:[#allocation2 + $0x260] sm:$0xf] %v3115
        %3133 = vst [vmem:[#allocation2 + $0x268] sm:$0xf] %v3116
        %3134 = vst [vmem:[#allocation2 + $0x270] sm:$0xf] %v3117
        %3135 = vst [vmem:[#allocation2 + $0x278] sm:$0xf] %v3118
        %3136 = vst.msk [vmem:[#allocation2 + $0x280] sm:$0xf] %vm2586, %v3110
        %3137 = vrot.lane.b32.xlu0 %v2598, 99
        %v3138 = vpop.permute.xlu0 %3137
        %3139 = vrot.lane.b32.xlu0 %v2599, 99
        %v3140 = vpop.permute.xlu0 %3139
        %3141 = vrot.lane.b32.xlu0 %v2600, 99
        %v3142 = vpop.permute.xlu0 %3141
        %3143 = vrot.lane.b32.xlu0 %v2601, 99
        %v3144 = vpop.permute.xlu0 %3143
        %3145 = vrot.lane.b32.xlu0 %v2602, 99
        %v3146 = vpop.permute.xlu0 %3145
        %3147 = vrot.lane.b32.xlu0 %v2603, 99
        %v3148 = vpop.permute.xlu0 %3147
        %3149 = vrot.lane.b32.xlu0 %v2604, 99
        %v3150 = vpop.permute.xlu0 %3149
        %3151 = vrot.lane.b32.xlu0 %v2605, 99
        %v3152 = vpop.permute.xlu0 %3151
        %3153 = vrot.lane.b32.xlu0 %v2960, 99
        %v3154 = vpop.permute.xlu0 %3153
        %v3155 = vsel %vm1095, %v3138, %v3140
        %v3156 = vsel %vm1095, %v3140, %v3142
        %v3157 = vsel %vm1095, %v3142, %v3144
        %v3158 = vsel %vm1095, %v3144, %v3146
        %v3159 = vsel %vm1095, %v3146, %v3148
        %v3160 = vsel %vm1095, %v3148, %v3150
        %v3161 = vsel %vm1095, %v3150, %v3152
        %v3162 = vsel %vm1095, %v3152, %v3154
        %3172 = vst [vmem:[#allocation2 + $0x240] sm:$0xf0] %v3155
        %3173 = vst [vmem:[#allocation2 + $0x248] sm:$0xf0] %v3156
        %3174 = vst [vmem:[#allocation2 + $0x250] sm:$0xf0] %v3157
        %3175 = vst [vmem:[#allocation2 + $0x258] sm:$0xf0] %v3158
        %3176 = vst [vmem:[#allocation2 + $0x260] sm:$0xf0] %v3159
        %3177 = vst [vmem:[#allocation2 + $0x268] sm:$0xf0] %v3160
        %3178 = vst [vmem:[#allocation2 + $0x270] sm:$0xf0] %v3161
        %3179 = vst [vmem:[#allocation2 + $0x278] sm:$0xf0] %v3162
        %3180 = vst.msk [vmem:[#allocation2 + $0x280] sm:$0xf0] %vm2649, %v3154
        %3181 = vrot.lane.b32.xlu0 %v2567, 98
        %v3182 = vpop.permute.xlu0 %3181
        %3183 = vrot.lane.b32.xlu0 %v2568, 98
        %v3184 = vpop.permute.xlu0 %3183
        %3185 = vrot.lane.b32.xlu0 %v2569, 98
        %v3186 = vpop.permute.xlu0 %3185
        %3187 = vrot.lane.b32.xlu0 %v2570, 98
        %v3188 = vpop.permute.xlu0 %3187
        %3189 = vrot.lane.b32.xlu0 %v2571, 98
        %v3190 = vpop.permute.xlu0 %3189
        %3191 = vrot.lane.b32.xlu0 %v2572, 98
        %v3192 = vpop.permute.xlu0 %3191
        %3193 = vrot.lane.b32.xlu0 %v2573, 98
        %v3194 = vpop.permute.xlu0 %3193
        %3195 = vrot.lane.b32.xlu0 %v2574, 98
        %v3196 = vpop.permute.xlu0 %3195
        %3197 = vrot.lane.b32.xlu0 %v2575, 98
        %v3198 = vpop.permute.xlu0 %3197
        %v3199 = vsel %vm1155, %v3182, %v3184
        %v3200 = vsel %vm1155, %v3184, %v3186
        %v3201 = vsel %vm1155, %v3186, %v3188
        %v3202 = vsel %vm1155, %v3188, %v3190
        %v3203 = vsel %vm1155, %v3190, %v3192
        %v3204 = vsel %vm1155, %v3192, %v3194
        %v3205 = vsel %vm1155, %v3194, %v3196
        %v3206 = vsel %vm1155, %v3196, %v3198
        %3216 = vst [vmem:[#allocation2 + $0x2a0] sm:$0xf] %v3199
        %3217 = vst [vmem:[#allocation2 + $0x2a8] sm:$0xf] %v3200
        %3218 = vst [vmem:[#allocation2 + $0x2b0] sm:$0xf] %v3201
        %3219 = vst [vmem:[#allocation2 + $0x2b8] sm:$0xf] %v3202
        %3220 = vst [vmem:[#allocation2 + $0x2c0] sm:$0xf] %v3203
        %3221 = vst [vmem:[#allocation2 + $0x2c8] sm:$0xf] %v3204
        %3222 = vst [vmem:[#allocation2 + $0x2d0] sm:$0xf] %v3205
        %3223 = vst [vmem:[#allocation2 + $0x2d8] sm:$0xf] %v3206
        %3224 = vst.msk [vmem:[#allocation2 + $0x2e0] sm:$0xf] %vm2586, %v3198
        %3225 = vrot.lane.b32.xlu0 %v2598, 88
        %v3226 = vpop.permute.xlu0 %3225
        %3227 = vrot.lane.b32.xlu0 %v2599, 88
        %v3228 = vpop.permute.xlu0 %3227
        %3229 = vrot.lane.b32.xlu0 %v2600, 88
        %v3230 = vpop.permute.xlu0 %3229
        %3231 = vrot.lane.b32.xlu0 %v2601, 88
        %v3232 = vpop.permute.xlu0 %3231
        %3233 = vrot.lane.b32.xlu0 %v2602, 88
        %v3234 = vpop.permute.xlu0 %3233
        %3235 = vrot.lane.b32.xlu0 %v2603, 88
        %v3236 = vpop.permute.xlu0 %3235
        %3237 = vrot.lane.b32.xlu0 %v2604, 88
        %v3238 = vpop.permute.xlu0 %3237
        %3239 = vrot.lane.b32.xlu0 %v2605, 88
        %v3240 = vpop.permute.xlu0 %3239
        %3241 = vrot.lane.b32.xlu0 %v2960, 88
        %v3242 = vpop.permute.xlu0 %3241
        %v3243 = vsel %vm1215, %v3226, %v3228
        %v3244 = vsel %vm1215, %v3228, %v3230
        %v3245 = vsel %vm1215, %v3230, %v3232
        %v3246 = vsel %vm1215, %v3232, %v3234
        %v3247 = vsel %vm1215, %v3234, %v3236
        %v3248 = vsel %vm1215, %v3236, %v3238
        %v3249 = vsel %vm1215, %v3238, %v3240
        %v3250 = vsel %vm1215, %v3240, %v3242
        %3260 = vst [vmem:[#allocation2 + $0x2a0] sm:$0xf0] %v3243
        %3261 = vst [vmem:[#allocation2 + $0x2a8] sm:$0xf0] %v3244
        %3262 = vst [vmem:[#allocation2 + $0x2b0] sm:$0xf0] %v3245
        %3263 = vst [vmem:[#allocation2 + $0x2b8] sm:$0xf0] %v3246
        %3264 = vst [vmem:[#allocation2 + $0x2c0] sm:$0xf0] %v3247
        %3265 = vst [vmem:[#allocation2 + $0x2c8] sm:$0xf0] %v3248
        %3266 = vst [vmem:[#allocation2 + $0x2d0] sm:$0xf0] %v3249
        %3267 = vst [vmem:[#allocation2 + $0x2d8] sm:$0xf0] %v3250
        %3268 = vst.msk [vmem:[#allocation2 + $0x2e0] sm:$0xf0] %vm2649, %v3242
        %3269 = vrot.lane.b32.xlu0 %v2567, 87
        %v3270 = vpop.permute.xlu0 %3269
        %3271 = vrot.lane.b32.xlu0 %v2568, 87
        %v3272 = vpop.permute.xlu0 %3271
        %3273 = vrot.lane.b32.xlu0 %v2569, 87
        %v3274 = vpop.permute.xlu0 %3273
        %3275 = vrot.lane.b32.xlu0 %v2570, 87
        %v3276 = vpop.permute.xlu0 %3275
        %3277 = vrot.lane.b32.xlu0 %v2571, 87
        %v3278 = vpop.permute.xlu0 %3277
        %3279 = vrot.lane.b32.xlu0 %v2572, 87
        %v3280 = vpop.permute.xlu0 %3279
        %3281 = vrot.lane.b32.xlu0 %v2573, 87
        %v3282 = vpop.permute.xlu0 %3281
        %3283 = vrot.lane.b32.xlu0 %v2574, 87
        %v3284 = vpop.permute.xlu0 %3283
        %3285 = vrot.lane.b32.xlu0 %v2575, 87
        %v3286 = vpop.permute.xlu0 %3285
        %v3287 = vsel %vm1275, %v3270, %v3272
        %v3288 = vsel %vm1275, %v3272, %v3274
        %v3289 = vsel %vm1275, %v3274, %v3276
        %v3290 = vsel %vm1275, %v3276, %v3278
        %v3291 = vsel %vm1275, %v3278, %v3280
        %v3292 = vsel %vm1275, %v3280, %v3282
        %v3293 = vsel %vm1275, %v3282, %v3284
        %v3294 = vsel %vm1275, %v3284, %v3286
        %3304 = vst [vmem:[#allocation2 + $0x300] sm:$0xf] %v3287
        %3305 = vst [vmem:[#allocation2 + $0x308] sm:$0xf] %v3288
        %3306 = vst [vmem:[#allocation2 + $0x310] sm:$0xf] %v3289
        %3307 = vst [vmem:[#allocation2 + $0x318] sm:$0xf] %v3290
        %3308 = vst [vmem:[#allocation2 + $0x320] sm:$0xf] %v3291
        %3309 = vst [vmem:[#allocation2 + $0x328] sm:$0xf] %v3292
        %3310 = vst [vmem:[#allocation2 + $0x330] sm:$0xf] %v3293
        %3311 = vst [vmem:[#allocation2 + $0x338] sm:$0xf] %v3294
        %3312 = vst.msk [vmem:[#allocation2 + $0x340] sm:$0xf] %vm2586, %v3286
        %3313 = vrot.lane.b32.xlu0 %v2598, 86
        %v3314 = vpop.permute.xlu0 %3313
        %3315 = vrot.lane.b32.xlu0 %v2599, 86
        %v3316 = vpop.permute.xlu0 %3315
        %3317 = vrot.lane.b32.xlu0 %v2600, 86
        %v3318 = vpop.permute.xlu0 %3317
        %3319 = vrot.lane.b32.xlu0 %v2601, 86
        %v3320 = vpop.permute.xlu0 %3319
        %3321 = vrot.lane.b32.xlu0 %v2602, 86
        %v3322 = vpop.permute.xlu0 %3321
        %3323 = vrot.lane.b32.xlu0 %v2603, 86
        %v3324 = vpop.permute.xlu0 %3323
        %3325 = vrot.lane.b32.xlu0 %v2604, 86
        %v3326 = vpop.permute.xlu0 %3325
        %3327 = vrot.lane.b32.xlu0 %v2605, 86
        %v3328 = vpop.permute.xlu0 %3327
        %3329 = vrot.lane.b32.xlu0 %v2960, 86
        %v3330 = vpop.permute.xlu0 %3329
        %v3331 = vsel %vm1335, %v3314, %v3316
        %v3332 = vsel %vm1335, %v3316, %v3318
        %v3333 = vsel %vm1335, %v3318, %v3320
        %v3334 = vsel %vm1335, %v3320, %v3322
        %v3335 = vsel %vm1335, %v3322, %v3324
        %v3336 = vsel %vm1335, %v3324, %v3326
        %v3337 = vsel %vm1335, %v3326, %v3328
        %v3338 = vsel %vm1335, %v3328, %v3330
        %3348 = vst [vmem:[#allocation2 + $0x300] sm:$0xf0] %v3331
        %3349 = vst [vmem:[#allocation2 + $0x308] sm:$0xf0] %v3332
        %3350 = vst [vmem:[#allocation2 + $0x310] sm:$0xf0] %v3333
        %3351 = vst [vmem:[#allocation2 + $0x318] sm:$0xf0] %v3334
        %3352 = vst [vmem:[#allocation2 + $0x320] sm:$0xf0] %v3335
        %3353 = vst [vmem:[#allocation2 + $0x328] sm:$0xf0] %v3336
        %3354 = vst [vmem:[#allocation2 + $0x330] sm:$0xf0] %v3337
        %3355 = vst [vmem:[#allocation2 + $0x338] sm:$0xf0] %v3338
        %3356 = vst.msk [vmem:[#allocation2 + $0x340] sm:$0xf0] %vm2649, %v3330
        %3358 = vrot.lane.b32.xlu0 %v2568, 96
        %v3359 = vpop.permute.xlu0 %3358
        %3360 = vrot.lane.b32.xlu0 %v2569, 96
        %v3361 = vpop.permute.xlu0 %3360
        %3362 = vrot.lane.b32.xlu0 %v2570, 96
        %v3363 = vpop.permute.xlu0 %3362
        %3364 = vrot.lane.b32.xlu0 %v2571, 96
        %v3365 = vpop.permute.xlu0 %3364
        %3366 = vrot.lane.b32.xlu0 %v2572, 96
        %v3367 = vpop.permute.xlu0 %3366
        %3368 = vrot.lane.b32.xlu0 %v2573, 96
        %v3369 = vpop.permute.xlu0 %3368
        %3370 = vrot.lane.b32.xlu0 %v2574, 96
        %v3371 = vpop.permute.xlu0 %3370
        %3372 = vrot.lane.b32.xlu0 %v2575, 96
        %v3373 = vpop.permute.xlu0 %3372
        %3374 = vrot.lane.b32.xlu0 %v2576, 96
        %v3375 = vpop.permute.xlu0 %3374
        %v3376 = vsel %vm1396, %v3359, %v3361
        %v3377 = vsel %vm1396, %v3361, %v3363
        %v3378 = vsel %vm1396, %v3363, %v3365
        %v3379 = vsel %vm1396, %v3365, %v3367
        %v3380 = vsel %vm1396, %v3367, %v3369
        %v3381 = vsel %vm1396, %v3369, %v3371
        %v3382 = vsel %vm1396, %v3371, %v3373
        %v3383 = vsel %vm1396, %v3373, %v3375
        %3393 = vst [vmem:[#allocation2 + $0x360] sm:$0xf] %v3376
        %3394 = vst [vmem:[#allocation2 + $0x368] sm:$0xf] %v3377
        %3395 = vst [vmem:[#allocation2 + $0x370] sm:$0xf] %v3378
        %3396 = vst [vmem:[#allocation2 + $0x378] sm:$0xf] %v3379
        %3397 = vst [vmem:[#allocation2 + $0x380] sm:$0xf] %v3380
        %3398 = vst [vmem:[#allocation2 + $0x388] sm:$0xf] %v3381
        %3399 = vst [vmem:[#allocation2 + $0x390] sm:$0xf] %v3382
        %3400 = vst [vmem:[#allocation2 + $0x398] sm:$0xf] %v3383
        %3401 = vst.msk [vmem:[#allocation2 + $0x3a0] sm:$0xf] %vm2586, %v3375
        %v3402 = vrot.slane %v2576, 4
        %3403 = vrot.lane.b32.xlu0 %v2599, 95
        %v3404 = vpop.permute.xlu0 %3403
        %3405 = vrot.lane.b32.xlu0 %v2600, 95
        %v3406 = vpop.permute.xlu0 %3405
        %3407 = vrot.lane.b32.xlu0 %v2601, 95
        %v3408 = vpop.permute.xlu0 %3407
        %3409 = vrot.lane.b32.xlu0 %v2602, 95
        %v3410 = vpop.permute.xlu0 %3409
        %3411 = vrot.lane.b32.xlu0 %v2603, 95
        %v3412 = vpop.permute.xlu0 %3411
        %3413 = vrot.lane.b32.xlu0 %v2604, 95
        %v3414 = vpop.permute.xlu0 %3413
        %3415 = vrot.lane.b32.xlu0 %v2605, 95
        %v3416 = vpop.permute.xlu0 %3415
        %3417 = vrot.lane.b32.xlu0 %v2960, 95
        %v3418 = vpop.permute.xlu0 %3417
        %3419 = vrot.lane.b32.xlu0 %v3402, 95
        %v3420 = vpop.permute.xlu0 %3419
        %v3421 = vsel %vm1456, %v3404, %v3406
        %v3422 = vsel %vm1456, %v3406, %v3408
        %v3423 = vsel %vm1456, %v3408, %v3410
        %v3424 = vsel %vm1456, %v3410, %v3412
        %v3425 = vsel %vm1456, %v3412, %v3414
        %v3426 = vsel %vm1456, %v3414, %v3416
        %v3427 = vsel %vm1456, %v3416, %v3418
        %v3428 = vsel %vm1456, %v3418, %v3420
        %3438 = vst [vmem:[#allocation2 + $0x360] sm:$0xf0] %v3421
        %3439 = vst [vmem:[#allocation2 + $0x368] sm:$0xf0] %v3422
        %3440 = vst [vmem:[#allocation2 + $0x370] sm:$0xf0] %v3423
        %3441 = vst [vmem:[#allocation2 + $0x378] sm:$0xf0] %v3424
        %3442 = vst [vmem:[#allocation2 + $0x380] sm:$0xf0] %v3425
        %3443 = vst [vmem:[#allocation2 + $0x388] sm:$0xf0] %v3426
        %3444 = vst [vmem:[#allocation2 + $0x390] sm:$0xf0] %v3427
        %3445 = vst [vmem:[#allocation2 + $0x398] sm:$0xf0] %v3428
        %3446 = vst.msk [vmem:[#allocation2 + $0x3a0] sm:$0xf0] %vm2649, %v3420
        %3447 = vrot.lane.b32.xlu0 %v2568, 94
        %v3448 = vpop.permute.xlu0 %3447
        %3449 = vrot.lane.b32.xlu0 %v2569, 94
        %v3450 = vpop.permute.xlu0 %3449
        %3451 = vrot.lane.b32.xlu0 %v2570, 94
        %v3452 = vpop.permute.xlu0 %3451
        %3453 = vrot.lane.b32.xlu0 %v2571, 94
        %v3454 = vpop.permute.xlu0 %3453
        %3455 = vrot.lane.b32.xlu0 %v2572, 94
        %v3456 = vpop.permute.xlu0 %3455
        %3457 = vrot.lane.b32.xlu0 %v2573, 94
        %v3458 = vpop.permute.xlu0 %3457
        %3459 = vrot.lane.b32.xlu0 %v2574, 94
        %v3460 = vpop.permute.xlu0 %3459
        %3461 = vrot.lane.b32.xlu0 %v2575, 94
        %v3462 = vpop.permute.xlu0 %3461
        %3463 = vrot.lane.b32.xlu0 %v2576, 94
        %v3464 = vpop.permute.xlu0 %3463
        %v3465 = vsel %vm1516, %v3448, %v3450
        %v3466 = vsel %vm1516, %v3450, %v3452
        %v3467 = vsel %vm1516, %v3452, %v3454
        %v3468 = vsel %vm1516, %v3454, %v3456
        %v3469 = vsel %vm1516, %v3456, %v3458
        %v3470 = vsel %vm1516, %v3458, %v3460
        %v3471 = vsel %vm1516, %v3460, %v3462
        %v3472 = vsel %vm1516, %v3462, %v3464
        %3482 = vst [vmem:[#allocation2 + $0x3c0] sm:$0xf] %v3465
        %3483 = vst [vmem:[#allocation2 + $0x3c8] sm:$0xf] %v3466
        %3484 = vst [vmem:[#allocation2 + $0x3d0] sm:$0xf] %v3467
        %3485 = vst [vmem:[#allocation2 + $0x3d8] sm:$0xf] %v3468
        %3486 = vst [vmem:[#allocation2 + $0x3e0] sm:$0xf] %v3469
        %3487 = vst [vmem:[#allocation2 + $0x3e8] sm:$0xf] %v3470
        %3488 = vst [vmem:[#allocation2 + $0x3f0] sm:$0xf] %v3471
        %3489 = vst [vmem:[#allocation2 + $0x3f8] sm:$0xf] %v3472
        %3490 = vst.msk [vmem:[#allocation2 + $0x400] sm:$0xf] %vm2586, %v3464
        %3491 = vrot.lane.b32.xlu0 %v2599, 84
        %v3492 = vpop.permute.xlu0 %3491
        %3493 = vrot.lane.b32.xlu0 %v2600, 84
        %v3494 = vpop.permute.xlu0 %3493
        %3495 = vrot.lane.b32.xlu0 %v2601, 84
        %v3496 = vpop.permute.xlu0 %3495
        %3497 = vrot.lane.b32.xlu0 %v2602, 84
        %v3498 = vpop.permute.xlu0 %3497
        %3499 = vrot.lane.b32.xlu0 %v2603, 84
        %v3500 = vpop.permute.xlu0 %3499
        %3501 = vrot.lane.b32.xlu0 %v2604, 84
        %v3502 = vpop.permute.xlu0 %3501
        %3503 = vrot.lane.b32.xlu0 %v2605, 84
        %v3504 = vpop.permute.xlu0 %3503
        %3505 = vrot.lane.b32.xlu0 %v2960, 84
        %v3506 = vpop.permute.xlu0 %3505
        %3507 = vrot.lane.b32.xlu0 %v3402, 84
        %v3508 = vpop.permute.xlu0 %3507
        %v3509 = vsel %vm1576, %v3492, %v3494
        %v3510 = vsel %vm1576, %v3494, %v3496
        %v3511 = vsel %vm1576, %v3496, %v3498
        %v3512 = vsel %vm1576, %v3498, %v3500
        %v3513 = vsel %vm1576, %v3500, %v3502
        %v3514 = vsel %vm1576, %v3502, %v3504
        %v3515 = vsel %vm1576, %v3504, %v3506
        %v3516 = vsel %vm1576, %v3506, %v3508
        %3526 = vst [vmem:[#allocation2 + $0x3c0] sm:$0xf0] %v3509
        %3527 = vst [vmem:[#allocation2 + $0x3c8] sm:$0xf0] %v3510
        %3528 = vst [vmem:[#allocation2 + $0x3d0] sm:$0xf0] %v3511
        %3529 = vst [vmem:[#allocation2 + $0x3d8] sm:$0xf0] %v3512
        %3530 = vst [vmem:[#allocation2 + $0x3e0] sm:$0xf0] %v3513
        %3531 = vst [vmem:[#allocation2 + $0x3e8] sm:$0xf0] %v3514
        %3532 = vst [vmem:[#allocation2 + $0x3f0] sm:$0xf0] %v3515
        %3533 = vst [vmem:[#allocation2 + $0x3f8] sm:$0xf0] %v3516
        %3534 = vst.msk [vmem:[#allocation2 + $0x400] sm:$0xf0] %vm2649, %v3508
        %3535 = vrot.lane.b32.xlu0 %v2568, 83
        %v3536 = vpop.permute.xlu0 %3535
        %3537 = vrot.lane.b32.xlu0 %v2569, 83
        %v3538 = vpop.permute.xlu0 %3537
        %3539 = vrot.lane.b32.xlu0 %v2570, 83
        %v3540 = vpop.permute.xlu0 %3539
        %3541 = vrot.lane.b32.xlu0 %v2571, 83
        %v3542 = vpop.permute.xlu0 %3541
        %3543 = vrot.lane.b32.xlu0 %v2572, 83
        %v3544 = vpop.permute.xlu0 %3543
        %3545 = vrot.lane.b32.xlu0 %v2573, 83
        %v3546 = vpop.permute.xlu0 %3545
        %3547 = vrot.lane.b32.xlu0 %v2574, 83
        %v3548 = vpop.permute.xlu0 %3547
        %3549 = vrot.lane.b32.xlu0 %v2575, 83
        %v3550 = vpop.permute.xlu0 %3549
        %3551 = vrot.lane.b32.xlu0 %v2576, 83
        %v3552 = vpop.permute.xlu0 %3551
        %v3553 = vsel %vm1636, %v3536, %v3538
        %v3554 = vsel %vm1636, %v3538, %v3540
        %v3555 = vsel %vm1636, %v3540, %v3542
        %v3556 = vsel %vm1636, %v3542, %v3544
        %v3557 = vsel %vm1636, %v3544, %v3546
        %v3558 = vsel %vm1636, %v3546, %v3548
        %v3559 = vsel %vm1636, %v3548, %v3550
        %v3560 = vsel %vm1636, %v3550, %v3552
        %3570 = vst [vmem:[#allocation2 + $0x420] sm:$0xf] %v3553
        %3571 = vst [vmem:[#allocation2 + $0x428] sm:$0xf] %v3554
        %3572 = vst [vmem:[#allocation2 + $0x430] sm:$0xf] %v3555
        %3573 = vst [vmem:[#allocation2 + $0x438] sm:$0xf] %v3556
        %3574 = vst [vmem:[#allocation2 + $0x440] sm:$0xf] %v3557
        %3575 = vst [vmem:[#allocation2 + $0x448] sm:$0xf] %v3558
        %3576 = vst [vmem:[#allocation2 + $0x450] sm:$0xf] %v3559
        %3577 = vst [vmem:[#allocation2 + $0x458] sm:$0xf] %v3560
        %3578 = vst.msk [vmem:[#allocation2 + $0x460] sm:$0xf] %vm2586, %v3552
        %3579 = vrot.lane.b32.xlu0 %v2599, 82
        %v3580 = vpop.permute.xlu0 %3579
        %3581 = vrot.lane.b32.xlu0 %v2600, 82
        %v3582 = vpop.permute.xlu0 %3581
        %3583 = vrot.lane.b32.xlu0 %v2601, 82
        %v3584 = vpop.permute.xlu0 %3583
        %3585 = vrot.lane.b32.xlu0 %v2602, 82
        %v3586 = vpop.permute.xlu0 %3585
        %3587 = vrot.lane.b32.xlu0 %v2603, 82
        %v3588 = vpop.permute.xlu0 %3587
        %3589 = vrot.lane.b32.xlu0 %v2604, 82
        %v3590 = vpop.permute.xlu0 %3589
        %3591 = vrot.lane.b32.xlu0 %v2605, 82
        %v3592 = vpop.permute.xlu0 %3591
        %3593 = vrot.lane.b32.xlu0 %v2960, 82
        %v3594 = vpop.permute.xlu0 %3593
        %3595 = vrot.lane.b32.xlu0 %v3402, 82
        %v3596 = vpop.permute.xlu0 %3595
        %v3597 = vsel %vm1696, %v3580, %v3582
        %v3598 = vsel %vm1696, %v3582, %v3584
        %v3599 = vsel %vm1696, %v3584, %v3586
        %v3600 = vsel %vm1696, %v3586, %v3588
        %v3601 = vsel %vm1696, %v3588, %v3590
        %v3602 = vsel %vm1696, %v3590, %v3592
        %v3603 = vsel %vm1696, %v3592, %v3594
        %v3604 = vsel %vm1696, %v3594, %v3596
        %3614 = vst [vmem:[#allocation2 + $0x420] sm:$0xf0] %v3597
        %3615 = vst [vmem:[#allocation2 + $0x428] sm:$0xf0] %v3598
        %3616 = vst [vmem:[#allocation2 + $0x430] sm:$0xf0] %v3599
        %3617 = vst [vmem:[#allocation2 + $0x438] sm:$0xf0] %v3600
        %3618 = vst [vmem:[#allocation2 + $0x440] sm:$0xf0] %v3601
        %3619 = vst [vmem:[#allocation2 + $0x448] sm:$0xf0] %v3602
        %3620 = vst [vmem:[#allocation2 + $0x450] sm:$0xf0] %v3603
        %3621 = vst [vmem:[#allocation2 + $0x458] sm:$0xf0] %v3604
        %3622 = vst.msk [vmem:[#allocation2 + $0x460] sm:$0xf0] %vm2649, %v3596
        %3624 = vrot.lane.b32.xlu0 %v2568, 72
        %v3625 = vpop.permute.xlu0 %3624
        %3626 = vrot.lane.b32.xlu0 %v2569, 72
        %v3627 = vpop.permute.xlu0 %3626
        %3628 = vrot.lane.b32.xlu0 %v2570, 72
        %v3629 = vpop.permute.xlu0 %3628
        %3630 = vrot.lane.b32.xlu0 %v2571, 72
        %v3631 = vpop.permute.xlu0 %3630
        %3632 = vrot.lane.b32.xlu0 %v2572, 72
        %v3633 = vpop.permute.xlu0 %3632
        %3634 = vrot.lane.b32.xlu0 %v2573, 72
        %v3635 = vpop.permute.xlu0 %3634
        %3636 = vrot.lane.b32.xlu0 %v2574, 72
        %v3637 = vpop.permute.xlu0 %3636
        %3638 = vrot.lane.b32.xlu0 %v2575, 72
        %v3639 = vpop.permute.xlu0 %3638
        %3640 = vrot.lane.b32.xlu0 %v2576, 72
        %v3641 = vpop.permute.xlu0 %3640
        %3642 = vrot.lane.b32.xlu0 %v2577, 72
        %v3643 = vpop.permute.xlu0 %3642
        %v3644 = vsel %vm1756, %v3625, %v3627
        %v3645 = vsel %vm1756, %v3627, %v3629
        %v3646 = vsel %vm1756, %v3629, %v3631
        %v3647 = vsel %vm1756, %v3631, %v3633
        %v3648 = vsel %vm1756, %v3633, %v3635
        %v3649 = vsel %vm1756, %v3635, %v3637
        %v3650 = vsel %vm1756, %v3637, %v3639
        %v3651 = vsel %vm1756, %v3639, %v3641
        %v3652 = vsel %vm1756, %v3641, %v3643
        %3662 = vst [vmem:[#allocation2 + $0x480] sm:$0xf] %v3644
        %3663 = vst [vmem:[#allocation2 + $0x488] sm:$0xf] %v3645
        %3664 = vst [vmem:[#allocation2 + $0x490] sm:$0xf] %v3646
        %3665 = vst [vmem:[#allocation2 + $0x498] sm:$0xf] %v3647
        %3666 = vst [vmem:[#allocation2 + $0x4a0] sm:$0xf] %v3648
        %3667 = vst [vmem:[#allocation2 + $0x4a8] sm:$0xf] %v3649
        %3668 = vst [vmem:[#allocation2 + $0x4b0] sm:$0xf] %v3650
        %3669 = vst [vmem:[#allocation2 + $0x4b8] sm:$0xf] %v3651
        %3670 = vst.msk [vmem:[#allocation2 + $0x4c0] sm:$0xf] %vm2586, %v3652
        %v3671 = vrot.slane %v2577, 4
        %3672 = vrot.lane.b32.xlu0 %v2599, 71
        %v3673 = vpop.permute.xlu0 %3672
        %3674 = vrot.lane.b32.xlu0 %v2600, 71
        %v3675 = vpop.permute.xlu0 %3674
        %3676 = vrot.lane.b32.xlu0 %v2601, 71
        %v3677 = vpop.permute.xlu0 %3676
        %3678 = vrot.lane.b32.xlu0 %v2602, 71
        %v3679 = vpop.permute.xlu0 %3678
        %3680 = vrot.lane.b32.xlu0 %v2603, 71
        %v3681 = vpop.permute.xlu0 %3680
        %3682 = vrot.lane.b32.xlu0 %v2604, 71
        %v3683 = vpop.permute.xlu0 %3682
        %3684 = vrot.lane.b32.xlu0 %v2605, 71
        %v3685 = vpop.permute.xlu0 %3684
        %3686 = vrot.lane.b32.xlu0 %v2960, 71
        %v3687 = vpop.permute.xlu0 %3686
        %3688 = vrot.lane.b32.xlu0 %v3402, 71
        %v3689 = vpop.permute.xlu0 %3688
        %3690 = vrot.lane.b32.xlu0 %v3671, 71
        %v3691 = vpop.permute.xlu0 %3690
        %v3692 = vsel %vm1816, %v3673, %v3675
        %v3693 = vsel %vm1816, %v3675, %v3677
        %v3694 = vsel %vm1816, %v3677, %v3679
        %v3695 = vsel %vm1816, %v3679, %v3681
        %v3696 = vsel %vm1816, %v3681, %v3683
        %v3697 = vsel %vm1816, %v3683, %v3685
        %v3698 = vsel %vm1816, %v3685, %v3687
        %v3699 = vsel %vm1816, %v3687, %v3689
        %v3700 = vsel %vm1816, %v3689, %v3691
        %3710 = vst [vmem:[#allocation2 + $0x480] sm:$0xf0] %v3692
        %3711 = vst [vmem:[#allocation2 + $0x488] sm:$0xf0] %v3693
        %3712 = vst [vmem:[#allocation2 + $0x490] sm:$0xf0] %v3694
        %3713 = vst [vmem:[#allocation2 + $0x498] sm:$0xf0] %v3695
        %3714 = vst [vmem:[#allocation2 + $0x4a0] sm:$0xf0] %v3696
        %3715 = vst [vmem:[#allocation2 + $0x4a8] sm:$0xf0] %v3697
        %3716 = vst [vmem:[#allocation2 + $0x4b0] sm:$0xf0] %v3698
        %3717 = vst [vmem:[#allocation2 + $0x4b8] sm:$0xf0] %v3699
        %3718 = vst.msk [vmem:[#allocation2 + $0x4c0] sm:$0xf0] %vm2649, %v3700
        %3719 = vrot.lane.b32.xlu0 %v2568, 70
        %v3720 = vpop.permute.xlu0 %3719
        %3721 = vrot.lane.b32.xlu0 %v2569, 70
        %v3722 = vpop.permute.xlu0 %3721
        %3723 = vrot.lane.b32.xlu0 %v2570, 70
        %v3724 = vpop.permute.xlu0 %3723
        %3725 = vrot.lane.b32.xlu0 %v2571, 70
        %v3726 = vpop.permute.xlu0 %3725
        %3727 = vrot.lane.b32.xlu0 %v2572, 70
        %v3728 = vpop.permute.xlu0 %3727
        %3729 = vrot.lane.b32.xlu0 %v2573, 70
        %v3730 = vpop.permute.xlu0 %3729
        %3731 = vrot.lane.b32.xlu0 %v2574, 70
        %v3732 = vpop.permute.xlu0 %3731
        %3733 = vrot.lane.b32.xlu0 %v2575, 70
        %v3734 = vpop.permute.xlu0 %3733
        %3735 = vrot.lane.b32.xlu0 %v2576, 70
        %v3736 = vpop.permute.xlu0 %3735
        %3737 = vrot.lane.b32.xlu0 %v2577, 70
        %v3738 = vpop.permute.xlu0 %3737
        %v3739 = vsel %vm1876, %v3720, %v3722
        %v3740 = vsel %vm1876, %v3722, %v3724
        %v3741 = vsel %vm1876, %v3724, %v3726
        %v3742 = vsel %vm1876, %v3726, %v3728
        %v3743 = vsel %vm1876, %v3728, %v3730
        %v3744 = vsel %vm1876, %v3730, %v3732
        %v3745 = vsel %vm1876, %v3732, %v3734
        %v3746 = vsel %vm1876, %v3734, %v3736
        %v3747 = vsel %vm1876, %v3736, %v3738
        %3757 = vst [vmem:[#allocation2 + $0x4e0] sm:$0xf] %v3739
        %3758 = vst [vmem:[#allocation2 + $0x4e8] sm:$0xf] %v3740
        %3759 = vst [vmem:[#allocation2 + $0x4f0] sm:$0xf] %v3741
        %3760 = vst [vmem:[#allocation2 + $0x4f8] sm:$0xf] %v3742
        %3761 = vst [vmem:[#allocation2 + $0x500] sm:$0xf] %v3743
        %3762 = vst [vmem:[#allocation2 + $0x508] sm:$0xf] %v3744
        %3763 = vst [vmem:[#allocation2 + $0x510] sm:$0xf] %v3745
        %3764 = vst [vmem:[#allocation2 + $0x518] sm:$0xf] %v3746
        %3765 = vst.msk [vmem:[#allocation2 + $0x520] sm:$0xf] %vm2586, %v3747
        %v3766 = vld [vmem:[%s3] sm:$0xff]
        %v3767 = vld [vmem:[#allocation2] sm:$0xff]
        %v3768 = vld [vmem:[#allocation2 + $0x8] sm:$0xff]
        %v3769 = vld [vmem:[#allocation2 + $0x10] sm:$0xff]
        %v3770 = vld [vmem:[#allocation2 + $0x18] sm:$0xff]
        %v3771 = vld [vmem:[#allocation2 + $0x20] sm:$0xff]
        %v3772 = vld [vmem:[#allocation2 + $0x28] sm:$0xff]
        %v3773 = vld [vmem:[#allocation2 + $0x30] sm:$0xff]
        %v3774 = vld [vmem:[#allocation2 + $0x38] sm:$0xff]
        %v3775 = vld [vmem:[#allocation2 + $0x40] sm:$0xff]
        %v3776 = vld [vmem:[#allocation2 + $0x60] sm:$0xff]
        %v3777 = vld [vmem:[#allocation2 + $0x68] sm:$0xff]
        %v3778 = vld [vmem:[#allocation2 + $0x70] sm:$0xff]
        %v3779 = vld [vmem:[#allocation2 + $0x78] sm:$0xff]
        %v3780 = vld [vmem:[#allocation2 + $0x80] sm:$0xff]
        %v3781 = vld [vmem:[#allocation2 + $0x88] sm:$0xff]
        %v3782 = vld [vmem:[#allocation2 + $0x90] sm:$0xff]
        %v3783 = vld [vmem:[#allocation2 + $0x98] sm:$0xff]
        %v3784 = vld [vmem:[#allocation2 + $0xa0] sm:$0xff]
        %v3785 = vld [vmem:[#allocation2 + $0xc0] sm:$0xff]
        %v3786 = vld [vmem:[#allocation2 + $0xc8] sm:$0xff]
        %v3787 = vld [vmem:[#allocation2 + $0xd0] sm:$0xff]
        %v3788 = vld [vmem:[#allocation2 + $0xd8] sm:$0xff]
        %v3789 = vld [vmem:[#allocation2 + $0xe0] sm:$0xff]
        %v3790 = vld [vmem:[#allocation2 + $0xe8] sm:$0xff]
        %v3791 = vld [vmem:[#allocation2 + $0xf0] sm:$0xff]
        %v3792 = vld [vmem:[#allocation2 + $0xf8] sm:$0xff]
        %v3793 = vld [vmem:[#allocation2 + $0x100] sm:$0xff]
        %v3794 = vld [vmem:[#allocation2 + $0x120] sm:$0xff]
        %v3795 = vld [vmem:[#allocation2 + $0x128] sm:$0xff]
        %v3796 = vld [vmem:[#allocation2 + $0x130] sm:$0xff]
        %v3797 = vld [vmem:[#allocation2 + $0x138] sm:$0xff]
        %v3798 = vld [vmem:[#allocation2 + $0x140] sm:$0xff]
        %v3799 = vld [vmem:[#allocation2 + $0x148] sm:$0xff]
        %v3800 = vld [vmem:[#allocation2 + $0x150] sm:$0xff]
        %v3801 = vld [vmem:[#allocation2 + $0x158] sm:$0xff]
        %v3802 = vld [vmem:[#allocation2 + $0x160] sm:$0xff]
        %v3803 = vld [vmem:[#allocation2 + $0x180] sm:$0xff]
        %v3804 = vld [vmem:[#allocation2 + $0x188] sm:$0xff]
        %v3805 = vld [vmem:[#allocation2 + $0x190] sm:$0xff]
        %v3806 = vld [vmem:[#allocation2 + $0x198] sm:$0xff]
        %v3807 = vld [vmem:[#allocation2 + $0x1a0] sm:$0xff]
        %v3808 = vld [vmem:[#allocation2 + $0x1a8] sm:$0xff]
        %v3809 = vld [vmem:[#allocation2 + $0x1b0] sm:$0xff]
        %v3810 = vld [vmem:[#allocation2 + $0x1b8] sm:$0xff]
        %v3811 = vld [vmem:[#allocation2 + $0x1c0] sm:$0xff]
        %v3812 = vld [vmem:[#allocation2 + $0x1e0] sm:$0xff]
        %v3813 = vld [vmem:[#allocation2 + $0x1e8] sm:$0xff]
        %v3814 = vld [vmem:[#allocation2 + $0x1f0] sm:$0xff]
        %v3815 = vld [vmem:[#allocation2 + $0x1f8] sm:$0xff]
        %v3816 = vld [vmem:[#allocation2 + $0x200] sm:$0xff]
        %v3817 = vld [vmem:[#allocation2 + $0x208] sm:$0xff]
        %v3818 = vld [vmem:[#allocation2 + $0x210] sm:$0xff]
        %v3819 = vld [vmem:[#allocation2 + $0x218] sm:$0xff]
        %v3820 = vld [vmem:[#allocation2 + $0x220] sm:$0xff]
        %v3821 = vld [vmem:[#allocation2 + $0x240] sm:$0xff]
        %v3822 = vld [vmem:[#allocation2 + $0x248] sm:$0xff]
        %v3823 = vld [vmem:[#allocation2 + $0x250] sm:$0xff]
        %v3824 = vld [vmem:[#allocation2 + $0x258] sm:$0xff]
        %v3825 = vld [vmem:[#allocation2 + $0x260] sm:$0xff]
        %v3826 = vld [vmem:[#allocation2 + $0x268] sm:$0xff]
        %v3827 = vld [vmem:[#allocation2 + $0x270] sm:$0xff]
        %v3828 = vld [vmem:[#allocation2 + $0x278] sm:$0xff]
        %v3829 = vld [vmem:[#allocation2 + $0x280] sm:$0xff]
        %v3830 = vld [vmem:[#allocation2 + $0x2a0] sm:$0xff]
        %v3831 = vld [vmem:[#allocation2 + $0x2a8] sm:$0xff]
        %v3832 = vld [vmem:[#allocation2 + $0x2b0] sm:$0xff]
        %v3833 = vld [vmem:[#allocation2 + $0x2b8] sm:$0xff]
        %v3834 = vld [vmem:[#allocation2 + $0x2c0] sm:$0xff]
        %v3835 = vld [vmem:[#allocation2 + $0x2c8] sm:$0xff]
        %v3836 = vld [vmem:[#allocation2 + $0x2d0] sm:$0xff]
        %v3837 = vld [vmem:[#allocation2 + $0x2d8] sm:$0xff]
        %v3838 = vld [vmem:[#allocation2 + $0x2e0] sm:$0xff]
        %v3839 = vld [vmem:[#allocation2 + $0x300] sm:$0xff]
        %v3840 = vld [vmem:[#allocation2 + $0x308] sm:$0xff]
        %v3841 = vld [vmem:[#allocation2 + $0x310] sm:$0xff]
        %v3842 = vld [vmem:[#allocation2 + $0x318] sm:$0xff]
        %v3843 = vld [vmem:[#allocation2 + $0x320] sm:$0xff]
        %v3844 = vld [vmem:[#allocation2 + $0x328] sm:$0xff]
        %v3845 = vld [vmem:[#allocation2 + $0x330] sm:$0xff]
        %v3846 = vld [vmem:[#allocation2 + $0x338] sm:$0xff]
        %v3847 = vld [vmem:[#allocation2 + $0x340] sm:$0xff]
        %v3848 = vld [vmem:[#allocation2 + $0x360] sm:$0xff]
        %v3849 = vld [vmem:[#allocation2 + $0x368] sm:$0xff]
        %v3850 = vld [vmem:[#allocation2 + $0x370] sm:$0xff]
        %v3851 = vld [vmem:[#allocation2 + $0x378] sm:$0xff]
        %v3852 = vld [vmem:[#allocation2 + $0x380] sm:$0xff]
        %v3853 = vld [vmem:[#allocation2 + $0x388] sm:$0xff]
        %v3854 = vld [vmem:[#allocation2 + $0x390] sm:$0xff]
        %v3855 = vld [vmem:[#allocation2 + $0x398] sm:$0xff]
        %v3856 = vld [vmem:[#allocation2 + $0x3a0] sm:$0xff]
        %v3857 = vld [vmem:[#allocation2 + $0x3c0] sm:$0xff]
        %v3858 = vld [vmem:[#allocation2 + $0x3c8] sm:$0xff]
        %v3859 = vld [vmem:[#allocation2 + $0x3d0] sm:$0xff]
        %v3860 = vld [vmem:[#allocation2 + $0x3d8] sm:$0xff]
        %v3861 = vld [vmem:[#allocation2 + $0x3e0] sm:$0xff]
        %v3862 = vld [vmem:[#allocation2 + $0x3e8] sm:$0xff]
        %v3863 = vld [vmem:[#allocation2 + $0x3f0] sm:$0xff]
        %v3864 = vld [vmem:[#allocation2 + $0x3f8] sm:$0xff]
        %v3865 = vld [vmem:[#allocation2 + $0x400] sm:$0xff]
        %v3866 = vld [vmem:[#allocation2 + $0x420] sm:$0xff]
        %v3867 = vld [vmem:[#allocation2 + $0x428] sm:$0xff]
        %v3868 = vld [vmem:[#allocation2 + $0x430] sm:$0xff]
        %v3869 = vld [vmem:[#allocation2 + $0x438] sm:$0xff]
        %v3870 = vld [vmem:[#allocation2 + $0x440] sm:$0xff]
        %v3871 = vld [vmem:[#allocation2 + $0x448] sm:$0xff]
        %v3872 = vld [vmem:[#allocation2 + $0x450] sm:$0xff]
        %v3873 = vld [vmem:[#allocation2 + $0x458] sm:$0xff]
        %v3874 = vld [vmem:[#allocation2 + $0x460] sm:$0xff]
        %v3875 = vld [vmem:[#allocation2 + $0x480] sm:$0xff]
        %v3876 = vld [vmem:[#allocation2 + $0x488] sm:$0xff]
        %v3877 = vld [vmem:[#allocation2 + $0x490] sm:$0xff]
        %v3878 = vld [vmem:[#allocation2 + $0x498] sm:$0xff]
        %v3879 = vld [vmem:[#allocation2 + $0x4a0] sm:$0xff]
        %v3880 = vld [vmem:[#allocation2 + $0x4a8] sm:$0xff]
        %v3881 = vld [vmem:[#allocation2 + $0x4b0] sm:$0xff]
        %v3882 = vld [vmem:[#allocation2 + $0x4b8] sm:$0xff]
        %v3883 = vld [vmem:[#allocation2 + $0x4c0] sm:$0xff]
        %v3884 = vld [vmem:[#allocation2 + $0x4e0] sm:$0xf]
        %v3885 = vld [vmem:[#allocation2 + $0x4e8] sm:$0xf]
        %v3886 = vld [vmem:[#allocation2 + $0x4f0] sm:$0xf]
        %v3887 = vld [vmem:[#allocation2 + $0x4f8] sm:$0xf]
        %v3888 = vld [vmem:[#allocation2 + $0x500] sm:$0xf]
        %v3889 = vld [vmem:[#allocation2 + $0x508] sm:$0xf]
        %v3890 = vld [vmem:[#allocation2 + $0x510] sm:$0xf]
        %v3891 = vld [vmem:[#allocation2 + $0x518] sm:$0xf]
        %v3892 = vld [vmem:[#allocation2 + $0x520] sm:$0xf]
        %v3893 = vld [vmem:[%s4] sm:$0xff]
        %3895 = vset.pattern.permute.xlu0 0
        %3896 = vperm.xlu0 %3895, %v3893
        %v3897 = vpop.permute.xlu0 %3896
        %v3900 = vsel %vm2087, %v3766, 0
        %v3903 = vsel %vm2091, %v3884, 0
        %v3906 = vsel %vm2091, %v3885, 0
        %v3909 = vsel %vm2091, %v3886, 0
        %v3912 = vsel %vm2091, %v3887, 0
        %v3915 = vsel %vm2091, %v3888, 0
        %v3918 = vsel %vm2091, %v3889, 0
        %v3921 = vsel %vm2091, %v3890, 0
        %v3924 = vsel %vm2091, %v3891, 0
        %v3927 = vsel %vm2091, %v3892, 0
        %3929 = vmatprep.subr.mxu0 0.0
        %3930 = vmatpush1.msra.mxu0 0.0
        %3931 = vmatprep.subr.mxu0 0.0
        %3932 = vmatpush1.msra.mxu0 0.0
        %3933 = vmatprep.subr.mxu0 %v3906
        %3934 = vmatpush1.msra.mxu0 %v3903
        %3935 = vmatprep.subr.mxu0 %v3876
        %3936 = vmatpush1.msra.mxu0 %v3875
        %3937 = vmatprep.subr.mxu0 %v3867
        %3938 = vmatpush1.msra.mxu0 %v3866
        %3939 = vmatprep.subr.mxu0 %v3858
        %3940 = vmatpush1.msra.mxu0 %v3857
        %3941 = vmatprep.subr.mxu0 %v3849
        %3942 = vmatpush1.msra.mxu0 %v3848
        %3943 = vmatprep.subr.mxu0 %v3840
        %3944 = vmatpush1.msra.mxu0 %v3839
        %3945 = vmatprep.subr.mxu0 %v3831
        %3946 = vmatpush1.msra.mxu0 %v3830
        %3947 = vmatprep.subr.mxu0 %v3822
        %3948 = vmatpush1.msra.mxu0 %v3821
        %3949 = vmatprep.subr.mxu0 %v3813
        %3950 = vmatpush1.msra.mxu0 %v3812
        %3951 = vmatprep.subr.mxu0 %v3804
        %3952 = vmatpush1.msra.mxu0 %v3803
        %3953 = vmatprep.subr.mxu0 %v3795
        %3954 = vmatpush1.msra.mxu0 %v3794
        %3955 = vmatprep.subr.mxu0 %v3786
        %3956 = vmatpush1.msra.mxu0 %v3785
        %3957 = vmatprep.subr.mxu0 %v3777
        %3958 = vmatpush1.msra.mxu0 %v3776
        %3959 = vmatprep.subr.mxu0 %v3768
        %3960 = vmatpush1.msra.mxu0 %v3767
        %3961 = vmatprep.subr.mxu0 0.0
        %3962 = vmatpush2.msra.mxu0 0.0
        %3963 = vmatprep.subr.mxu0 0.0
        %3964 = vmatpush2.msra.mxu0 0.0
        %3965 = vmatprep.subr.mxu0 0.0
        %3966 = vmatpush2.msra.mxu0 0.0
        %3967 = vmatprep.subr.mxu0 0.0
        %3968 = vmatpush2.msra.mxu0 0.0
        %3969 = vmatprep.subr.mxu0 0.0
        %3970 = vmatpush2.msra.mxu0 0.0
        %3971 = vmatprep.subr.mxu0 0.0
        %3972 = vmatpush2.msra.mxu0 0.0
        %3973 = vmatprep.subr.mxu0 0.0
        %3974 = vmatpush2.msra.mxu0 0.0
        %3975 = vmatprep.subr.mxu0 0.0
        %3976 = vmatpush2.msra.mxu0 0.0
        %3977 = vmatprep.subr.mxu0 0.0
        %3978 = vmatpush2.msra.mxu0 0.0
        %3979 = vmatprep.subr.mxu0 0.0
        %3980 = vmatpush2.msra.mxu0 0.0
        %3981 = vmatprep.subr.mxu0 0.0
        %3982 = vmatpush2.msra.mxu0 0.0
        %3983 = vmatprep.subr.mxu0 0.0
        %3984 = vmatpush2.msra.mxu0 0.0
        %3985 = vmatprep.subr.mxu0 0.0
        %3986 = vmatpush2.msra.mxu0 0.0
        %3987 = vmatprep.subr.mxu0 0.0
        %3988 = vmatpush2.msra.mxu0 0.0
        %3989 = vmatprep.subr.mxu0 0.0
        %3990 = vmatpush2.msra.mxu0 0.0
        %3991 = vmatprep.subr.mxu0 0.0
        %3992 = vmatpush2.msra.mxu0 0.0
        %3993 = vmatprep.mubr.f32.mxu0 0.0
        %3994 = vmatmul.mubr.f32.gmra.mxu0 %v3900
        %v3995 = vpop.f32.mrf.mxu0
        %v3996 = vadd.f32 %v3897, %v3995
        %v3997 = vpop.f32.mrf.mxu0
        %v3998 = vadd.f32 %v3897, %v3997
        %3999 = vdwg.mxu0
        %4000 = vmatprep.subr.mxu0 0.0
        %4001 = vmatpush1.msra.mxu0 0.0
        %4002 = vmatprep.subr.mxu0 0.0
        %4003 = vmatpush1.msra.mxu0 0.0
        %4004 = vmatprep.subr.mxu0 %v3912
        %4005 = vmatpush1.msra.mxu0 %v3909
        %4006 = vmatprep.subr.mxu0 %v3878
        %4007 = vmatpush1.msra.mxu0 %v3877
        %4008 = vmatprep.subr.mxu0 %v3869
        %4009 = vmatpush1.msra.mxu0 %v3868
        %4010 = vmatprep.subr.mxu0 %v3860
        %4011 = vmatpush1.msra.mxu0 %v3859
        %4012 = vmatprep.subr.mxu0 %v3851
        %4013 = vmatpush1.msra.mxu0 %v3850
        %4014 = vmatprep.subr.mxu0 %v3842
        %4015 = vmatpush1.msra.mxu0 %v3841
        %4016 = vmatprep.subr.mxu0 %v3833
        %4017 = vmatpush1.msra.mxu0 %v3832
        %4018 = vmatprep.subr.mxu0 %v3824
        %4019 = vmatpush1.msra.mxu0 %v3823
        %4020 = vmatprep.subr.mxu0 %v3815
        %4021 = vmatpush1.msra.mxu0 %v3814
        %4022 = vmatprep.subr.mxu0 %v3806
        %4023 = vmatpush1.msra.mxu0 %v3805
        %4024 = vmatprep.subr.mxu0 %v3797
        %4025 = vmatpush1.msra.mxu0 %v3796
        %4026 = vmatprep.subr.mxu0 %v3788
        %4027 = vmatpush1.msra.mxu0 %v3787
        %4028 = vmatprep.subr.mxu0 %v3779
        %4029 = vmatpush1.msra.mxu0 %v3778
        %4030 = vmatprep.subr.mxu0 %v3770
        %4031 = vmatpush1.msra.mxu0 %v3769
        %4032 = vmatprep.subr.mxu0 0.0
        %4033 = vmatpush2.msra.mxu0 0.0
        %4034 = vmatprep.subr.mxu0 0.0
        %4035 = vmatpush2.msra.mxu0 0.0
        %4036 = vmatprep.subr.mxu0 0.0
        %4037 = vmatpush2.msra.mxu0 0.0
        %4038 = vmatprep.subr.mxu0 0.0
        %4039 = vmatpush2.msra.mxu0 0.0
        %4040 = vmatprep.subr.mxu0 0.0
        %4041 = vmatpush2.msra.mxu0 0.0
        %4042 = vmatprep.subr.mxu0 0.0
        %4043 = vmatpush2.msra.mxu0 0.0
        %4044 = vmatprep.subr.mxu0 0.0
        %4045 = vmatpush2.msra.mxu0 0.0
        %4046 = vmatprep.subr.mxu0 0.0
        %4047 = vmatpush2.msra.mxu0 0.0
        %4048 = vmatprep.subr.mxu0 0.0
        %4049 = vmatpush2.msra.mxu0 0.0
        %4050 = vmatprep.subr.mxu0 0.0
        %4051 = vmatpush2.msra.mxu0 0.0
        %4052 = vmatprep.subr.mxu0 0.0
        %4053 = vmatpush2.msra.mxu0 0.0
        %4054 = vmatprep.subr.mxu0 0.0
        %4055 = vmatpush2.msra.mxu0 0.0
        %4056 = vmatprep.subr.mxu0 0.0
        %4057 = vmatpush2.msra.mxu0 0.0
        %4058 = vmatprep.subr.mxu0 0.0
        %4059 = vmatpush2.msra.mxu0 0.0
        %4060 = vmatprep.subr.mxu0 0.0
        %4061 = vmatpush2.msra.mxu0 0.0
        %4062 = vmatprep.subr.mxu0 0.0
        %4063 = vmatpush2.msra.mxu0 0.0
        %4064 = vmatprep.mubr.f32.mxu0 0.0
        %4065 = vmatmul.mubr.f32.gmra.mxu0 %v3900
        %v4066 = vpop.f32.mrf.mxu0
        %v4067 = vadd.f32 %v3897, %v4066
        %v4068 = vpop.f32.mrf.mxu0
        %v4069 = vadd.f32 %v3897, %v4068
        %4070 = vdwg.mxu0
        %4071 = vmatprep.subr.mxu0 0.0
        %4072 = vmatpush1.msra.mxu0 0.0
        %4073 = vmatprep.subr.mxu0 0.0
        %4074 = vmatpush1.msra.mxu0 0.0
        %4075 = vmatprep.subr.mxu0 %v3918
        %4076 = vmatpush1.msra.mxu0 %v3915
        %4077 = vmatprep.subr.mxu0 %v3880
        %4078 = vmatpush1.msra.mxu0 %v3879
        %4079 = vmatprep.subr.mxu0 %v3871
        %4080 = vmatpush1.msra.mxu0 %v3870
        %4081 = vmatprep.subr.mxu0 %v3862
        %4082 = vmatpush1.msra.mxu0 %v3861
        %4083 = vmatprep.subr.mxu0 %v3853
        %4084 = vmatpush1.msra.mxu0 %v3852
        %4085 = vmatprep.subr.mxu0 %v3844
        %4086 = vmatpush1.msra.mxu0 %v3843
        %4087 = vmatprep.subr.mxu0 %v3835
        %4088 = vmatpush1.msra.mxu0 %v3834
        %4089 = vmatprep.subr.mxu0 %v3826
        %4090 = vmatpush1.msra.mxu0 %v3825
        %4091 = vmatprep.subr.mxu0 %v3817
        %4092 = vmatpush1.msra.mxu0 %v3816
        %4093 = vmatprep.subr.mxu0 %v3808
        %4094 = vmatpush1.msra.mxu0 %v3807
        %4095 = vmatprep.subr.mxu0 %v3799
        %4096 = vmatpush1.msra.mxu0 %v3798
        %4097 = vmatprep.subr.mxu0 %v3790
        %4098 = vmatpush1.msra.mxu0 %v3789
        %4099 = vmatprep.subr.mxu0 %v3781
        %4100 = vmatpush1.msra.mxu0 %v3780
        %4101 = vmatprep.subr.mxu0 %v3772
        %4102 = vmatpush1.msra.mxu0 %v3771
        %4103 = vmatprep.subr.mxu0 0.0
        %4104 = vmatpush2.msra.mxu0 0.0
        %4105 = vmatprep.subr.mxu0 0.0
        %4106 = vmatpush2.msra.mxu0 0.0
        %4107 = vmatprep.subr.mxu0 0.0
        %4108 = vmatpush2.msra.mxu0 0.0
        %4109 = vmatprep.subr.mxu0 0.0
        %4110 = vmatpush2.msra.mxu0 0.0
        %4111 = vmatprep.subr.mxu0 0.0
        %4112 = vmatpush2.msra.mxu0 0.0
        %4113 = vmatprep.subr.mxu0 0.0
        %4114 = vmatpush2.msra.mxu0 0.0
        %4115 = vmatprep.subr.mxu0 0.0
        %4116 = vmatpush2.msra.mxu0 0.0
        %4117 = vmatprep.subr.mxu0 0.0
        %4118 = vmatpush2.msra.mxu0 0.0
        %4119 = vmatprep.subr.mxu0 0.0
        %4120 = vmatpush2.msra.mxu0 0.0
        %4121 = vmatprep.subr.mxu0 0.0
        %4122 = vmatpush2.msra.mxu0 0.0
        %4123 = vmatprep.subr.mxu0 0.0
        %4124 = vmatpush2.msra.mxu0 0.0
        %4125 = vmatprep.subr.mxu0 0.0
        %4126 = vmatpush2.msra.mxu0 0.0
        %4127 = vmatprep.subr.mxu0 0.0
        %4128 = vmatpush2.msra.mxu0 0.0
        %4129 = vmatprep.subr.mxu0 0.0
        %4130 = vmatpush2.msra.mxu0 0.0
        %4131 = vmatprep.subr.mxu0 0.0
        %4132 = vmatpush2.msra.mxu0 0.0
        %4133 = vmatprep.subr.mxu0 0.0
        %4134 = vmatpush2.msra.mxu0 0.0
        %4135 = vmatprep.mubr.f32.mxu0 0.0
        %4136 = vmatmul.mubr.f32.gmra.mxu0 %v3900
        %v4137 = vpop.f32.mrf.mxu0
        %v4138 = vadd.f32 %v3897, %v4137
        %v4139 = vpop.f32.mrf.mxu0
        %v4140 = vadd.f32 %v3897, %v4139
        %4141 = vdwg.mxu0
        %4142 = vmatprep.subr.mxu0 0.0
        %4143 = vmatpush1.msra.mxu0 0.0
        %4144 = vmatprep.subr.mxu0 0.0
        %4145 = vmatpush1.msra.mxu0 0.0
        %4146 = vmatprep.subr.mxu0 %v3924
        %4147 = vmatpush1.msra.mxu0 %v3921
        %4148 = vmatprep.subr.mxu0 %v3882
        %4149 = vmatpush1.msra.mxu0 %v3881
        %4150 = vmatprep.subr.mxu0 %v3873
        %4151 = vmatpush1.msra.mxu0 %v3872
        %4152 = vmatprep.subr.mxu0 %v3864
        %4153 = vmatpush1.msra.mxu0 %v3863
        %4154 = vmatprep.subr.mxu0 %v3855
        %4155 = vmatpush1.msra.mxu0 %v3854
        %4156 = vmatprep.subr.mxu0 %v3846
        %4157 = vmatpush1.msra.mxu0 %v3845
        %4158 = vmatprep.subr.mxu0 %v3837
        %4159 = vmatpush1.msra.mxu0 %v3836
        %4160 = vmatprep.subr.mxu0 %v3828
        %4161 = vmatpush1.msra.mxu0 %v3827
        %4162 = vmatprep.subr.mxu0 %v3819
        %4163 = vmatpush1.msra.mxu0 %v3818
        %4164 = vmatprep.subr.mxu0 %v3810
        %4165 = vmatpush1.msra.mxu0 %v3809
        %4166 = vmatprep.subr.mxu0 %v3801
        %4167 = vmatpush1.msra.mxu0 %v3800
        %4168 = vmatprep.subr.mxu0 %v3792
        %4169 = vmatpush1.msra.mxu0 %v3791
        %4170 = vmatprep.subr.mxu0 %v3783
        %4171 = vmatpush1.msra.mxu0 %v3782
        %4172 = vmatprep.subr.mxu0 %v3774
        %4173 = vmatpush1.msra.mxu0 %v3773
        %4174 = vmatprep.subr.mxu0 0.0
        %4175 = vmatpush2.msra.mxu0 0.0
        %4176 = vmatprep.subr.mxu0 0.0
        %4177 = vmatpush2.msra.mxu0 0.0
        %4178 = vmatprep.subr.mxu0 0.0
        %4179 = vmatpush2.msra.mxu0 0.0
        %4180 = vmatprep.subr.mxu0 0.0
        %4181 = vmatpush2.msra.mxu0 0.0
        %4182 = vmatprep.subr.mxu0 0.0
        %4183 = vmatpush2.msra.mxu0 0.0
        %4184 = vmatprep.subr.mxu0 0.0
        %4185 = vmatpush2.msra.mxu0 0.0
        %4186 = vmatprep.subr.mxu0 0.0
        %4187 = vmatpush2.msra.mxu0 0.0
        %4188 = vmatprep.subr.mxu0 0.0
        %4189 = vmatpush2.msra.mxu0 0.0
        %4190 = vmatprep.subr.mxu0 0.0
        %4191 = vmatpush2.msra.mxu0 0.0
        %4192 = vmatprep.subr.mxu0 0.0
        %4193 = vmatpush2.msra.mxu0 0.0
        %4194 = vmatprep.subr.mxu0 0.0
        %4195 = vmatpush2.msra.mxu0 0.0
        %4196 = vmatprep.subr.mxu0 0.0
        %4197 = vmatpush2.msra.mxu0 0.0
        %4198 = vmatprep.subr.mxu0 0.0
        %4199 = vmatpush2.msra.mxu0 0.0
        %4200 = vmatprep.subr.mxu0 0.0
        %4201 = vmatpush2.msra.mxu0 0.0
        %4202 = vmatprep.subr.mxu0 0.0
        %4203 = vmatpush2.msra.mxu0 0.0
        %4204 = vmatprep.subr.mxu0 0.0
        %4205 = vmatpush2.msra.mxu0 0.0
        %4206 = vmatprep.mubr.f32.mxu0 0.0
        %4207 = vmatmul.mubr.f32.gmra.mxu0 %v3900
        %v4208 = vpop.f32.mrf.mxu0
        %v4209 = vadd.f32 %v3897, %v4208
        %v4210 = vpop.f32.mrf.mxu0
        %v4211 = vadd.f32 %v3897, %v4210
        %4212 = vdwg.mxu0
        %4213 = vmatprep.subr.mxu0 0.0
        %4214 = vmatpush1.msra.mxu0 0.0
        %4215 = vmatprep.subr.mxu0 0.0
        %4216 = vmatpush1.msra.mxu0 0.0
        %4217 = vmatprep.subr.mxu0 0.0
        %4218 = vmatpush1.msra.mxu0 %v3927
        %4219 = vmatprep.subr.mxu0 0.0
        %4220 = vmatpush1.msra.mxu0 %v3883
        %4221 = vmatprep.subr.mxu0 0.0
        %4222 = vmatpush1.msra.mxu0 %v3874
        %4223 = vmatprep.subr.mxu0 0.0
        %4224 = vmatpush1.msra.mxu0 %v3865
        %4225 = vmatprep.subr.mxu0 0.0
        %4226 = vmatpush1.msra.mxu0 %v3856
        %4227 = vmatprep.subr.mxu0 0.0
        %4228 = vmatpush1.msra.mxu0 %v3847
        %4229 = vmatprep.subr.mxu0 0.0
        %4230 = vmatpush1.msra.mxu0 %v3838
        %4231 = vmatprep.subr.mxu0 0.0
        %4232 = vmatpush1.msra.mxu0 %v3829
        %4233 = vmatprep.subr.mxu0 0.0
        %4234 = vmatpush1.msra.mxu0 %v3820
        %4235 = vmatprep.subr.mxu0 0.0
        %4236 = vmatpush1.msra.mxu0 %v3811
        %4237 = vmatprep.subr.mxu0 0.0
        %4238 = vmatpush1.msra.mxu0 %v3802
        %4239 = vmatprep.subr.mxu0 0.0
        %4240 = vmatpush1.msra.mxu0 %v3793
        %4241 = vmatprep.subr.mxu0 0.0
        %4242 = vmatpush1.msra.mxu0 %v3784
        %4243 = vmatprep.subr.mxu0 0.0
        %4244 = vmatpush1.msra.mxu0 %v3775
        %4245 = vmatprep.subr.mxu0 0.0
        %4246 = vmatpush2.msra.mxu0 0.0
        %4247 = vmatprep.subr.mxu0 0.0
        %4248 = vmatpush2.msra.mxu0 0.0
        %4249 = vmatprep.subr.mxu0 0.0
        %4250 = vmatpush2.msra.mxu0 0.0
        %4251 = vmatprep.subr.mxu0 0.0
        %4252 = vmatpush2.msra.mxu0 0.0
        %4253 = vmatprep.subr.mxu0 0.0
        %4254 = vmatpush2.msra.mxu0 0.0
        %4255 = vmatprep.subr.mxu0 0.0
        %4256 = vmatpush2.msra.mxu0 0.0
        %4257 = vmatprep.subr.mxu0 0.0
        %4258 = vmatpush2.msra.mxu0 0.0
        %4259 = vmatprep.subr.mxu0 0.0
        %4260 = vmatpush2.msra.mxu0 0.0
        %4261 = vmatprep.subr.mxu0 0.0
        %4262 = vmatpush2.msra.mxu0 0.0
        %4263 = vmatprep.subr.mxu0 0.0
        %4264 = vmatpush2.msra.mxu0 0.0
        %4265 = vmatprep.subr.mxu0 0.0
        %4266 = vmatpush2.msra.mxu0 0.0
        %4267 = vmatprep.subr.mxu0 0.0
        %4268 = vmatpush2.msra.mxu0 0.0
        %4269 = vmatprep.subr.mxu0 0.0
        %4270 = vmatpush2.msra.mxu0 0.0
        %4271 = vmatprep.subr.mxu0 0.0
        %4272 = vmatpush2.msra.mxu0 0.0
        %4273 = vmatprep.subr.mxu0 0.0
        %4274 = vmatpush2.msra.mxu0 0.0
        %4275 = vmatprep.subr.mxu0 0.0
        %4276 = vmatpush2.msra.mxu0 0.0
        %4277 = vmatprep.mubr.f32.mxu0 0.0
        %4278 = vmatmul.mubr.f32.gmra.mxu0 %v3900
        %v4279 = vpop.f32.mrf.mxu0
        %v4280 = vadd.f32 %v3897, %v4279
        %v4281 = vpop.f32.mrf.mxu0
        %4282 = vdwg.mxu0
        %v4283 = vmul.f32 %v3996, 0.2
        %v4284 = vmul.f32 %v3998, 0.2
        %v4285 = vmul.f32 %v4067, 0.2
        %v4286 = vmul.f32 %v4069, 0.2
        %v4287 = vmul.f32 %v4138, 0.2
        %v4288 = vmul.f32 %v4140, 0.2
        %v4289 = vmul.f32 %v4209, 0.2
        %v4290 = vmul.f32 %v4211, 0.2
        %v4291 = vmul.f32 %v4280, 0.2
        %v4292 = vmax.f32 %v3996, %v4283
        %v4293 = vmax.f32 %v3998, %v4284
        %v4294 = vmax.f32 %v4067, %v4285
        %v4295 = vmax.f32 %v4069, %v4286
        %v4296 = vmax.f32 %v4138, %v4287
        %v4297 = vmax.f32 %v4140, %v4288
        %v4298 = vmax.f32 %v4209, %v4289
        %v4299 = vmax.f32 %v4211, %v4290
        %v4300 = vmax.f32 %v4280, %v4291
        %v4301 = vld [vmem:[%s5] sm:$0xff]
        %v4302 = vld [vmem:[%s6] sm:$0xff]
        %4304 = vset.pattern.permute.xlu0 0
        %4305 = vperm.xlu0 %4304, %v4302
        %v4306 = vpop.permute.xlu0 %4305
        %vm4308 = vcmask 31744
        %v4310 = vsel %vm4308, %v4301, 0
        %v4312 = vsel %vm2091, %v1877, 0
        %v4314 = vsel %vm2091, %v1878, 0
        %v4316 = vsel %vm2091, %v1879, 0
        %v4318 = vsel %vm2091, %v1880, 0
        %v4320 = vsel %vm2091, %v1881, 0
        %v4322 = vsel %vm2091, %v1882, 0
        %v4324 = vsel %vm2091, %v1883, 0
        %v4326 = vsel %vm2091, %v1884, 0
        %v4328 = vsel %vm2091, %v1885, 0
        %4330 = vmatprep.subr.mxu0 0.0
        %4331 = vmatpush1.msra.mxu0 0.0
        %4332 = vmatprep.subr.mxu0 0.0
        %4333 = vmatpush1.msra.mxu0 0.0
        %4334 = vmatprep.subr.mxu0 0.0
        %4335 = vmatpush1.msra.mxu0 0.0
        %4336 = vmatprep.subr.mxu0 0.0
        %4337 = vmatpush1.msra.mxu0 0.0
        %4338 = vmatprep.subr.mxu0 0.0
        %4339 = vmatpush1.msra.mxu0 0.0
        %4340 = vmatprep.subr.mxu0 0.0
        %4341 = vmatpush1.msra.mxu0 0.0
        %4342 = vmatprep.subr.mxu0 0.0
        %4343 = vmatpush1.msra.mxu0 0.0
        %4344 = vmatprep.subr.mxu0 0.0
        %4345 = vmatpush1.msra.mxu0 0.0
        %4346 = vmatprep.subr.mxu0 0.0
        %4347 = vmatpush1.msra.mxu0 0.0
        %4348 = vmatprep.subr.mxu0 0.0
        %4349 = vmatpush1.msra.mxu0 0.0
        %4350 = vmatprep.subr.mxu0 0.0
        %4351 = vmatpush1.msra.mxu0 0.0
        %4352 = vmatprep.subr.mxu0 0.0
        %4353 = vmatpush1.msra.mxu0 0.0
        %4354 = vmatprep.subr.mxu0 0.0
        %4355 = vmatpush1.msra.mxu0 0.0
        %4356 = vmatprep.subr.mxu0 0.0
        %4357 = vmatpush1.msra.mxu0 0.0
        %4358 = vmatprep.subr.mxu0 0.0
        %4359 = vmatpush1.msra.mxu0 0.0
        %4360 = vmatprep.subr.mxu0 %v4314
        %4361 = vmatpush1.msra.mxu0 %v4312
        %4362 = vmatprep.subr.mxu0 0.0
        %4363 = vmatpush2.msra.mxu0 0.0
        %4364 = vmatprep.subr.mxu0 0.0
        %4365 = vmatpush2.msra.mxu0 0.0
        %4366 = vmatprep.subr.mxu0 0.0
        %4367 = vmatpush2.msra.mxu0 0.0
        %4368 = vmatprep.subr.mxu0 0.0
        %4369 = vmatpush2.msra.mxu0 0.0
        %4370 = vmatprep.subr.mxu0 0.0
        %4371 = vmatpush2.msra.mxu0 0.0
        %4372 = vmatprep.subr.mxu0 0.0
        %4373 = vmatpush2.msra.mxu0 0.0
        %4374 = vmatprep.subr.mxu0 0.0
        %4375 = vmatpush2.msra.mxu0 0.0
        %4376 = vmatprep.subr.mxu0 0.0
        %4377 = vmatpush2.msra.mxu0 0.0
        %4378 = vmatprep.subr.mxu0 0.0
        %4379 = vmatpush2.msra.mxu0 0.0
        %4380 = vmatprep.subr.mxu0 0.0
        %4381 = vmatpush2.msra.mxu0 0.0
        %4382 = vmatprep.subr.mxu0 0.0
        %4383 = vmatpush2.msra.mxu0 0.0
        %4384 = vmatprep.subr.mxu0 0.0
        %4385 = vmatpush2.msra.mxu0 0.0
        %4386 = vmatprep.subr.mxu0 0.0
        %4387 = vmatpush2.msra.mxu0 0.0
        %4388 = vmatprep.subr.mxu0 0.0
        %4389 = vmatpush2.msra.mxu0 0.0
        %4390 = vmatprep.subr.mxu0 0.0
        %4391 = vmatpush2.msra.mxu0 0.0
        %4392 = vmatprep.subr.mxu0 0.0
        %4393 = vmatpush2.msra.mxu0 0.0
        %4394 = vmatprep.mubr.f32.mxu0 0.0
        %4395 = vmatmul.mubr.f32.gmra.mxu0 %v4310
        %v4396 = vpop.f32.mrf.mxu0
        %v4397 = vadd.f32 %v4306, %v4396
        %v4398 = vpop.f32.mrf.mxu0
        %v4399 = vadd.f32 %v4306, %v4398
        %4400 = vdwg.mxu0
        %4401 = vmatprep.subr.mxu0 0.0
        %4402 = vmatpush1.msra.mxu0 0.0
        %4403 = vmatprep.subr.mxu0 0.0
        %4404 = vmatpush1.msra.mxu0 0.0
        %4405 = vmatprep.subr.mxu0 0.0
        %4406 = vmatpush1.msra.mxu0 0.0
        %4407 = vmatprep.subr.mxu0 0.0
        %4408 = vmatpush1.msra.mxu0 0.0
        %4409 = vmatprep.subr.mxu0 0.0
        %4410 = vmatpush1.msra.mxu0 0.0
        %4411 = vmatprep.subr.mxu0 0.0
        %4412 = vmatpush1.msra.mxu0 0.0
        %4413 = vmatprep.subr.mxu0 0.0
        %4414 = vmatpush1.msra.mxu0 0.0
        %4415 = vmatprep.subr.mxu0 0.0
        %4416 = vmatpush1.msra.mxu0 0.0
        %4417 = vmatprep.subr.mxu0 0.0
        %4418 = vmatpush1.msra.mxu0 0.0
        %4419 = vmatprep.subr.mxu0 0.0
        %4420 = vmatpush1.msra.mxu0 0.0
        %4421 = vmatprep.subr.mxu0 0.0
        %4422 = vmatpush1.msra.mxu0 0.0
        %4423 = vmatprep.subr.mxu0 0.0
        %4424 = vmatpush1.msra.mxu0 0.0
        %4425 = vmatprep.subr.mxu0 0.0
        %4426 = vmatpush1.msra.mxu0 0.0
        %4427 = vmatprep.subr.mxu0 0.0
        %4428 = vmatpush1.msra.mxu0 0.0
        %4429 = vmatprep.subr.mxu0 0.0
        %4430 = vmatpush1.msra.mxu0 0.0
        %4431 = vmatprep.subr.mxu0 %v4318
        %4432 = vmatpush1.msra.mxu0 %v4316
        %4433 = vmatprep.subr.mxu0 0.0
        %4434 = vmatpush2.msra.mxu0 0.0
        %4435 = vmatprep.subr.mxu0 0.0
        %4436 = vmatpush2.msra.mxu0 0.0
        %4437 = vmatprep.subr.mxu0 0.0
        %4438 = vmatpush2.msra.mxu0 0.0
        %4439 = vmatprep.subr.mxu0 0.0
        %4440 = vmatpush2.msra.mxu0 0.0
        %4441 = vmatprep.subr.mxu0 0.0
        %4442 = vmatpush2.msra.mxu0 0.0
        %4443 = vmatprep.subr.mxu0 0.0
        %4444 = vmatpush2.msra.mxu0 0.0
        %4445 = vmatprep.subr.mxu0 0.0
        %4446 = vmatpush2.msra.mxu0 0.0
        %4447 = vmatprep.subr.mxu0 0.0
        %4448 = vmatpush2.msra.mxu0 0.0
        %4449 = vmatprep.subr.mxu0 0.0
        %4450 = vmatpush2.msra.mxu0 0.0
        %4451 = vmatprep.subr.mxu0 0.0
        %4452 = vmatpush2.msra.mxu0 0.0
        %4453 = vmatprep.subr.mxu0 0.0
        %4454 = vmatpush2.msra.mxu0 0.0
        %4455 = vmatprep.subr.mxu0 0.0
        %4456 = vmatpush2.msra.mxu0 0.0
        %4457 = vmatprep.subr.mxu0 0.0
        %4458 = vmatpush2.msra.mxu0 0.0
        %4459 = vmatprep.subr.mxu0 0.0
        %4460 = vmatpush2.msra.mxu0 0.0
        %4461 = vmatprep.subr.mxu0 0.0
        %4462 = vmatpush2.msra.mxu0 0.0
        %4463 = vmatprep.subr.mxu0 0.0
        %4464 = vmatpush2.msra.mxu0 0.0
        %4465 = vmatprep.mubr.f32.mxu0 0.0
        %4466 = vmatmul.mubr.f32.gmra.mxu0 %v4310
        %v4467 = vpop.f32.mrf.mxu0
        %v4468 = vadd.f32 %v4306, %v4467
        %v4469 = vpop.f32.mrf.mxu0
        %v4470 = vadd.f32 %v4306, %v4469
        %4471 = vdwg.mxu0
        %4472 = vmatprep.subr.mxu0 0.0
        %4473 = vmatpush1.msra.mxu0 0.0
        %4474 = vmatprep.subr.mxu0 0.0
        %4475 = vmatpush1.msra.mxu0 0.0
        %4476 = vmatprep.subr.mxu0 0.0
        %4477 = vmatpush1.msra.mxu0 0.0
        %4478 = vmatprep.subr.mxu0 0.0
        %4479 = vmatpush1.msra.mxu0 0.0
        %4480 = vmatprep.subr.mxu0 0.0
        %4481 = vmatpush1.msra.mxu0 0.0
        %4482 = vmatprep.subr.mxu0 0.0
        %4483 = vmatpush1.msra.mxu0 0.0
        %4484 = vmatprep.subr.mxu0 0.0
        %4485 = vmatpush1.msra.mxu0 0.0
        %4486 = vmatprep.subr.mxu0 0.0
        %4487 = vmatpush1.msra.mxu0 0.0
        %4488 = vmatprep.subr.mxu0 0.0
        %4489 = vmatpush1.msra.mxu0 0.0
        %4490 = vmatprep.subr.mxu0 0.0
        %4491 = vmatpush1.msra.mxu0 0.0
        %4492 = vmatprep.subr.mxu0 0.0
        %4493 = vmatpush1.msra.mxu0 0.0
        %4494 = vmatprep.subr.mxu0 0.0
        %4495 = vmatpush1.msra.mxu0 0.0
        %4496 = vmatprep.subr.mxu0 0.0
        %4497 = vmatpush1.msra.mxu0 0.0
        %4498 = vmatprep.subr.mxu0 0.0
        %4499 = vmatpush1.msra.mxu0 0.0
        %4500 = vmatprep.subr.mxu0 0.0
        %4501 = vmatpush1.msra.mxu0 0.0
        %4502 = vmatprep.subr.mxu0 %v4322
        %4503 = vmatpush1.msra.mxu0 %v4320
        %4504 = vmatprep.subr.mxu0 0.0
        %4505 = vmatpush2.msra.mxu0 0.0
        %4506 = vmatprep.subr.mxu0 0.0
        %4507 = vmatpush2.msra.mxu0 0.0
        %4508 = vmatprep.subr.mxu0 0.0
        %4509 = vmatpush2.msra.mxu0 0.0
        %4510 = vmatprep.subr.mxu0 0.0
        %4511 = vmatpush2.msra.mxu0 0.0
        %4512 = vmatprep.subr.mxu0 0.0
        %4513 = vmatpush2.msra.mxu0 0.0
        %4514 = vmatprep.subr.mxu0 0.0
        %4515 = vmatpush2.msra.mxu0 0.0
        %4516 = vmatprep.subr.mxu0 0.0
        %4517 = vmatpush2.msra.mxu0 0.0
        %4518 = vmatprep.subr.mxu0 0.0
        %4519 = vmatpush2.msra.mxu0 0.0
        %4520 = vmatprep.subr.mxu0 0.0
        %4521 = vmatpush2.msra.mxu0 0.0
        %4522 = vmatprep.subr.mxu0 0.0
        %4523 = vmatpush2.msra.mxu0 0.0
        %4524 = vmatprep.subr.mxu0 0.0
        %4525 = vmatpush2.msra.mxu0 0.0
        %4526 = vmatprep.subr.mxu0 0.0
        %4527 = vmatpush2.msra.mxu0 0.0
        %4528 = vmatprep.subr.mxu0 0.0
        %4529 = vmatpush2.msra.mxu0 0.0
        %4530 = vmatprep.subr.mxu0 0.0
        %4531 = vmatpush2.msra.mxu0 0.0
        %4532 = vmatprep.subr.mxu0 0.0
        %4533 = vmatpush2.msra.mxu0 0.0
        %4534 = vmatprep.subr.mxu0 0.0
        %4535 = vmatpush2.msra.mxu0 0.0
        %4536 = vmatprep.mubr.f32.mxu0 0.0
        %4537 = vmatmul.mubr.f32.gmra.mxu0 %v4310
        %v4538 = vpop.f32.mrf.mxu0
        %v4539 = vadd.f32 %v4306, %v4538
        %v4540 = vpop.f32.mrf.mxu0
        %v4541 = vadd.f32 %v4306, %v4540
        %4542 = vdwg.mxu0
        %4543 = vmatprep.subr.mxu0 0.0
        %4544 = vmatpush1.msra.mxu0 0.0
        %4545 = vmatprep.subr.mxu0 0.0
        %4546 = vmatpush1.msra.mxu0 0.0
        %4547 = vmatprep.subr.mxu0 0.0
        %4548 = vmatpush1.msra.mxu0 0.0
        %4549 = vmatprep.subr.mxu0 0.0
        %4550 = vmatpush1.msra.mxu0 0.0
        %4551 = vmatprep.subr.mxu0 0.0
        %4552 = vmatpush1.msra.mxu0 0.0
        %4553 = vmatprep.subr.mxu0 0.0
        %4554 = vmatpush1.msra.mxu0 0.0
        %4555 = vmatprep.subr.mxu0 0.0
        %4556 = vmatpush1.msra.mxu0 0.0
        %4557 = vmatprep.subr.mxu0 0.0
        %4558 = vmatpush1.msra.mxu0 0.0
        %4559 = vmatprep.subr.mxu0 0.0
        %4560 = vmatpush1.msra.mxu0 0.0
        %4561 = vmatprep.subr.mxu0 0.0
        %4562 = vmatpush1.msra.mxu0 0.0
        %4563 = vmatprep.subr.mxu0 0.0
        %4564 = vmatpush1.msra.mxu0 0.0
        %4565 = vmatprep.subr.mxu0 0.0
        %4566 = vmatpush1.msra.mxu0 0.0
        %4567 = vmatprep.subr.mxu0 0.0
        %4568 = vmatpush1.msra.mxu0 0.0
        %4569 = vmatprep.subr.mxu0 0.0
        %4570 = vmatpush1.msra.mxu0 0.0
        %4571 = vmatprep.subr.mxu0 0.0
        %4572 = vmatpush1.msra.mxu0 0.0
        %4573 = vmatprep.subr.mxu0 %v4326
        %4574 = vmatpush1.msra.mxu0 %v4324
        %4575 = vmatprep.subr.mxu0 0.0
        %4576 = vmatpush2.msra.mxu0 0.0
        %4577 = vmatprep.subr.mxu0 0.0
        %4578 = vmatpush2.msra.mxu0 0.0
        %4579 = vmatprep.subr.mxu0 0.0
        %4580 = vmatpush2.msra.mxu0 0.0
        %4581 = vmatprep.subr.mxu0 0.0
        %4582 = vmatpush2.msra.mxu0 0.0
        %4583 = vmatprep.subr.mxu0 0.0
        %4584 = vmatpush2.msra.mxu0 0.0
        %4585 = vmatprep.subr.mxu0 0.0
        %4586 = vmatpush2.msra.mxu0 0.0
        %4587 = vmatprep.subr.mxu0 0.0
        %4588 = vmatpush2.msra.mxu0 0.0
        %4589 = vmatprep.subr.mxu0 0.0
        %4590 = vmatpush2.msra.mxu0 0.0
        %4591 = vmatprep.subr.mxu0 0.0
        %4592 = vmatpush2.msra.mxu0 0.0
        %4593 = vmatprep.subr.mxu0 0.0
        %4594 = vmatpush2.msra.mxu0 0.0
        %4595 = vmatprep.subr.mxu0 0.0
        %4596 = vmatpush2.msra.mxu0 0.0
        %4597 = vmatprep.subr.mxu0 0.0
        %4598 = vmatpush2.msra.mxu0 0.0
        %4599 = vmatprep.subr.mxu0 0.0
        %4600 = vmatpush2.msra.mxu0 0.0
        %4601 = vmatprep.subr.mxu0 0.0
        %4602 = vmatpush2.msra.mxu0 0.0
        %4603 = vmatprep.subr.mxu0 0.0
        %4604 = vmatpush2.msra.mxu0 0.0
        %4605 = vmatprep.subr.mxu0 0.0
        %4606 = vmatpush2.msra.mxu0 0.0
        %4607 = vmatprep.mubr.f32.mxu0 0.0
        %4608 = vmatmul.mubr.f32.gmra.mxu0 %v4310
        %v4609 = vpop.f32.mrf.mxu0
        %v4610 = vadd.f32 %v4306, %v4609
        %v4611 = vpop.f32.mrf.mxu0
        %v4612 = vadd.f32 %v4306, %v4611
        %4613 = vdwg.mxu0
        %4614 = vmatprep.subr.mxu0 0.0
        %4615 = vmatpush1.msra.mxu0 0.0
        %4616 = vmatprep.subr.mxu0 0.0
        %4617 = vmatpush1.msra.mxu0 0.0
        %4618 = vmatprep.subr.mxu0 0.0
        %4619 = vmatpush1.msra.mxu0 0.0
        %4620 = vmatprep.subr.mxu0 0.0
        %4621 = vmatpush1.msra.mxu0 0.0
        %4622 = vmatprep.subr.mxu0 0.0
        %4623 = vmatpush1.msra.mxu0 0.0
        %4624 = vmatprep.subr.mxu0 0.0
        %4625 = vmatpush1.msra.mxu0 0.0
        %4626 = vmatprep.subr.mxu0 0.0
        %4627 = vmatpush1.msra.mxu0 0.0
        %4628 = vmatprep.subr.mxu0 0.0
        %4629 = vmatpush1.msra.mxu0 0.0
        %4630 = vmatprep.subr.mxu0 0.0
        %4631 = vmatpush1.msra.mxu0 0.0
        %4632 = vmatprep.subr.mxu0 0.0
        %4633 = vmatpush1.msra.mxu0 0.0
        %4634 = vmatprep.subr.mxu0 0.0
        %4635 = vmatpush1.msra.mxu0 0.0
        %4636 = vmatprep.subr.mxu0 0.0
        %4637 = vmatpush1.msra.mxu0 0.0
        %4638 = vmatprep.subr.mxu0 0.0
        %4639 = vmatpush1.msra.mxu0 0.0
        %4640 = vmatprep.subr.mxu0 0.0
        %4641 = vmatpush1.msra.mxu0 0.0
        %4642 = vmatprep.subr.mxu0 0.0
        %4643 = vmatpush1.msra.mxu0 0.0
        %4644 = vmatprep.subr.mxu0 0.0
        %4645 = vmatpush1.msra.mxu0 %v4328
        %4646 = vmatprep.subr.mxu0 0.0
        %4647 = vmatpush2.msra.mxu0 0.0
        %4648 = vmatprep.subr.mxu0 0.0
        %4649 = vmatpush2.msra.mxu0 0.0
        %4650 = vmatprep.subr.mxu0 0.0
        %4651 = vmatpush2.msra.mxu0 0.0
        %4652 = vmatprep.subr.mxu0 0.0
        %4653 = vmatpush2.msra.mxu0 0.0
        %4654 = vmatprep.subr.mxu0 0.0
        %4655 = vmatpush2.msra.mxu0 0.0
        %4656 = vmatprep.subr.mxu0 0.0
        %4657 = vmatpush2.msra.mxu0 0.0
        %4658 = vmatprep.subr.mxu0 0.0
        %4659 = vmatpush2.msra.mxu0 0.0
        %4660 = vmatprep.subr.mxu0 0.0
        %4661 = vmatpush2.msra.mxu0 0.0
        %4662 = vmatprep.subr.mxu0 0.0
        %4663 = vmatpush2.msra.mxu0 0.0
        %4664 = vmatprep.subr.mxu0 0.0
        %4665 = vmatpush2.msra.mxu0 0.0
        %4666 = vmatprep.subr.mxu0 0.0
        %4667 = vmatpush2.msra.mxu0 0.0
        %4668 = vmatprep.subr.mxu0 0.0
        %4669 = vmatpush2.msra.mxu0 0.0
        %4670 = vmatprep.subr.mxu0 0.0
        %4671 = vmatpush2.msra.mxu0 0.0
        %4672 = vmatprep.subr.mxu0 0.0
        %4673 = vmatpush2.msra.mxu0 0.0
        %4674 = vmatprep.subr.mxu0 0.0
        %4675 = vmatpush2.msra.mxu0 0.0
        %4676 = vmatprep.subr.mxu0 0.0
        %4677 = vmatpush2.msra.mxu0 0.0
        %4678 = vmatprep.mubr.f32.mxu0 0.0
        %4679 = vmatmul.mubr.f32.gmra.mxu0 %v4310
        %v4680 = vpop.f32.mrf.mxu0
        %v4681 = vadd.f32 %v4306, %v4680
        %v4682 = vpop.f32.mrf.mxu0
        %4683 = vdwg.mxu0
        %v4684 = vadd.f32 %v4292, %v4397
        %v4685 = vadd.f32 %v4293, %v4399
        %v4686 = vadd.f32 %v4294, %v4468
        %v4687 = vadd.f32 %v4295, %v4470
        %v4688 = vadd.f32 %v4296, %v4539
        %v4689 = vadd.f32 %v4297, %v4541
        %v4690 = vadd.f32 %v4298, %v4610
        %v4691 = vadd.f32 %v4299, %v4612
        %v4692 = vadd.f32 %v4300, %v4681
        %4693 = vst [vmem:[#allocation3] sm:$0xff] %v4684
        %4694 = vst [vmem:[#allocation3 + $0x8] sm:$0xff] %v4685
        %4695 = vst [vmem:[#allocation3 + $0x10] sm:$0xff] %v4686
        %4696 = vst [vmem:[#allocation3 + $0x18] sm:$0xff] %v4687
        %4697 = vst [vmem:[#allocation3 + $0x20] sm:$0xff] %v4688
        %4698 = vst [vmem:[#allocation3 + $0x28] sm:$0xff] %v4689
        %4699 = vst [vmem:[#allocation3 + $0x30] sm:$0xff] %v4690
        %4700 = vst [vmem:[#allocation3 + $0x38] sm:$0xff] %v4691
        %vm4701 = vcmask 621568
        %4702 = vst.msk [vmem:[#allocation3 + $0x40] sm:$0xff] %vm4701, %v4692
        %vm4703 = vcmask 1048160
        %4704 = vst.msk [vmem:[#allocation3 + $0x40] sm:$0xff] %vm4703, 0.0
        %v4705 = vld [vmem:[%s7] sm:$0xff]
        %v4706 = vld [vmem:[%s7 + $0x8] sm:$0xff]
        %v4707 = vld [vmem:[%s7 + $0x10] sm:$0xff]
        %v4708 = vld [vmem:[%s7 + $0x18] sm:$0xff]
        %v4709 = vld [vmem:[%s7 + $0x20] sm:$0xff]
        %v4710 = vld [vmem:[%s7 + $0x28] sm:$0xff]
        %v4711 = vld [vmem:[%s7 + $0x30] sm:$0xff]
        %v4712 = vld [vmem:[%s7 + $0x38] sm:$0xff]
        %v4713 = vld [vmem:[%s7 + $0x40] sm:$0xff]
        %v4714 = vld [vmem:[%s7 + $0x48] sm:$0xff]
        %v4715 = vld [vmem:[%s7 + $0x50] sm:$0xff]
        %v4716 = vld [vmem:[%s7 + $0x58] sm:$0xff]
        %v4717 = vld [vmem:[%s7 + $0x60] sm:$0xff]
        %v4718 = vld [vmem:[%s7 + $0x68] sm:$0xff]
        %v4719 = vld [vmem:[%s7 + $0x70] sm:$0xff]
        %v4720 = vld [vmem:[%s7 + $0x78] sm:$0xff]
        %v4721 = vld [vmem:[%s7 + $0x80] sm:$0xff]
        %v4722 = vld [vmem:[%s7 + $0x88] sm:$0xff]
        %v4723 = vld [vmem:[#allocation3] sm:$0xff]
        %v4724 = vld [vmem:[#allocation3 + $0x8] sm:$0xff]
        %v4725 = vld [vmem:[#allocation3 + $0x10] sm:$0xff]
        %4728 = vrot.lane.b32.xlu0 %v4724, 112
        %v4729 = vpop.permute.xlu0 %4728
        %4730 = vrot.lane.b32.xlu0 %v4725, 112
        %v4731 = vpop.permute.xlu0 %4730
        %v4732 = vsel %vm855, %v4729, %v4731
        %v4735 = vadd.f32 %v4723, %v4732
        %v4736 = vadd.f32 %v4724, %v4731
        %vm4737 = vcmask 130048
        %v4739 = vsel %vm4737, %v4736, 0
        %4741 = vmatprep.subr.mxu0 0.0
        %4742 = vmatpush1.msra.mxu0 %v4720
        %4743 = vmatprep.subr.mxu0 0.0
        %4744 = vmatpush1.msra.mxu0 %v4719
        %4745 = vmatprep.subr.mxu0 0.0
        %4746 = vmatpush1.msra.mxu0 %v4718
        %4747 = vmatprep.subr.mxu0 0.0
        %4748 = vmatpush1.msra.mxu0 %v4717
        %4749 = vmatprep.subr.mxu0 0.0
        %4750 = vmatpush1.msra.mxu0 %v4716
        %4751 = vmatprep.subr.mxu0 0.0
        %4752 = vmatpush1.msra.mxu0 %v4715
        %4753 = vmatprep.subr.mxu0 0.0
        %4754 = vmatpush1.msra.mxu0 %v4714
        %4755 = vmatprep.subr.mxu0 0.0
        %4756 = vmatpush1.msra.mxu0 %v4713
        %4757 = vmatprep.subr.mxu0 0.0
        %4758 = vmatpush1.msra.mxu0 %v4712
        %4759 = vmatprep.subr.mxu0 0.0
        %4760 = vmatpush1.msra.mxu0 %v4711
        %4761 = vmatprep.subr.mxu0 0.0
        %4762 = vmatpush1.msra.mxu0 %v4710
        %4763 = vmatprep.subr.mxu0 0.0
        %4764 = vmatpush1.msra.mxu0 %v4709
        %4765 = vmatprep.subr.mxu0 0.0
        %4766 = vmatpush1.msra.mxu0 %v4708
        %4767 = vmatprep.subr.mxu0 0.0
        %4768 = vmatpush1.msra.mxu0 %v4707
        %4769 = vmatprep.subr.mxu0 0.0
        %4770 = vmatpush1.msra.mxu0 %v4706
        %4771 = vmatprep.subr.mxu0 0.0
        %4772 = vmatpush1.msra.mxu0 %v4705
        %4773 = vmatprep.subr.mxu0 0.0
        %4774 = vmatpush2.msra.mxu0 0.0
        %4775 = vmatprep.subr.mxu0 0.0
        %4776 = vmatpush2.msra.mxu0 0.0
        %4777 = vmatprep.subr.mxu0 0.0
        %4778 = vmatpush2.msra.mxu0 0.0
        %4779 = vmatprep.subr.mxu0 0.0
        %4780 = vmatpush2.msra.mxu0 0.0
        %4781 = vmatprep.subr.mxu0 0.0
        %4782 = vmatpush2.msra.mxu0 0.0
        %4783 = vmatprep.subr.mxu0 0.0
        %4784 = vmatpush2.msra.mxu0 0.0
        %4785 = vmatprep.subr.mxu0 0.0
        %4786 = vmatpush2.msra.mxu0 0.0
        %4787 = vmatprep.subr.mxu0 0.0
        %4788 = vmatpush2.msra.mxu0 0.0
        %4789 = vmatprep.subr.mxu0 0.0
        %4790 = vmatpush2.msra.mxu0 0.0
        %4791 = vmatprep.subr.mxu0 0.0
        %4792 = vmatpush2.msra.mxu0 0.0
        %4793 = vmatprep.subr.mxu0 0.0
        %4794 = vmatpush2.msra.mxu0 0.0
        %4795 = vmatprep.subr.mxu0 0.0
        %4796 = vmatpush2.msra.mxu0 0.0
        %4797 = vmatprep.subr.mxu0 0.0
        %4798 = vmatpush2.msra.mxu0 0.0
        %4799 = vmatprep.subr.mxu0 0.0
        %4800 = vmatpush2.msra.mxu0 0.0
        %4801 = vmatprep.subr.mxu0 0.0
        %4802 = vmatpush2.msra.mxu0 %v4722
        %4803 = vmatprep.subr.mxu0 0.0
        %4804 = vmatpush2.msra.mxu0 %v4721
        %4805 = vmatprep.mubr.f32.mxu0 %v4739
        %4806 = vmatmul.mubr.f32.gmra.mxu0 %v4735
        %v4807 = vpop.f32.mrf.mxu0
        %v4808 = vadd.f32 0.0, %v4807
        %v4809 = vpop.f32.mrf.mxu0
        %4810 = vdwg.mxu0
        %4811 = vst.msk [vmem:[%s298] sm:$0xff] %vm4737, %v4808
        %v4812 = vld [vmem:[#allocation3 + $0x10] sm:$0xff]
        %v4813 = vld [vmem:[#allocation3 + $0x18] sm:$0xff]
        %v4814 = vld [vmem:[#allocation3 + $0x20] sm:$0xff]
        %4817 = vrot.lane.b32.xlu0 %v4813, 112
        %v4818 = vpop.permute.xlu0 %4817
        %4819 = vrot.lane.b32.xlu0 %v4814, 112
        %v4820 = vpop.permute.xlu0 %4819
        %v4821 = vsel %vm855, %v4818, %v4820
        %v4824 = vadd.f32 %v4812, %v4821
        %v4825 = vadd.f32 %v4813, %v4820
        %4828 = vrot.lane.b32.xlu0 %v4824, 96
        %v4829 = vpop.permute.xlu0 %4828
        %4830 = vrot.lane.b32.xlu0 %v4825, 96
        %v4831 = vpop.permute.xlu0 %4830
        %v4832 = vsel %vm1396, %v4829, %v4831
        %v4834 = vsel %vm4737, %v4831, 0
        %4836 = vmatprep.subr.mxu0 0.0
        %4837 = vmatpush1.msra.mxu0 %v4720
        %4838 = vmatprep.subr.mxu0 0.0
        %4839 = vmatpush1.msra.mxu0 %v4719
        %4840 = vmatprep.subr.mxu0 0.0
        %4841 = vmatpush1.msra.mxu0 %v4718
        %4842 = vmatprep.subr.mxu0 0.0
        %4843 = vmatpush1.msra.mxu0 %v4717
        %4844 = vmatprep.subr.mxu0 0.0
        %4845 = vmatpush1.msra.mxu0 %v4716
        %4846 = vmatprep.subr.mxu0 0.0
        %4847 = vmatpush1.msra.mxu0 %v4715
        %4848 = vmatprep.subr.mxu0 0.0
        %4849 = vmatpush1.msra.mxu0 %v4714
        %4850 = vmatprep.subr.mxu0 0.0
        %4851 = vmatpush1.msra.mxu0 %v4713
        %4852 = vmatprep.subr.mxu0 0.0
        %4853 = vmatpush1.msra.mxu0 %v4712
        %4854 = vmatprep.subr.mxu0 0.0
        %4855 = vmatpush1.msra.mxu0 %v4711
        %4856 = vmatprep.subr.mxu0 0.0
        %4857 = vmatpush1.msra.mxu0 %v4710
        %4858 = vmatprep.subr.mxu0 0.0
        %4859 = vmatpush1.msra.mxu0 %v4709
        %4860 = vmatprep.subr.mxu0 0.0
        %4861 = vmatpush1.msra.mxu0 %v4708
        %4862 = vmatprep.subr.mxu0 0.0
        %4863 = vmatpush1.msra.mxu0 %v4707
        %4864 = vmatprep.subr.mxu0 0.0
        %4865 = vmatpush1.msra.mxu0 %v4706
        %4866 = vmatprep.subr.mxu0 0.0
        %4867 = vmatpush1.msra.mxu0 %v4705
        %4868 = vmatprep.subr.mxu0 0.0
        %4869 = vmatpush2.msra.mxu0 0.0
        %4870 = vmatprep.subr.mxu0 0.0
        %4871 = vmatpush2.msra.mxu0 0.0
        %4872 = vmatprep.subr.mxu0 0.0
        %4873 = vmatpush2.msra.mxu0 0.0
        %4874 = vmatprep.subr.mxu0 0.0
        %4875 = vmatpush2.msra.mxu0 0.0
        %4876 = vmatprep.subr.mxu0 0.0
        %4877 = vmatpush2.msra.mxu0 0.0
        %4878 = vmatprep.subr.mxu0 0.0
        %4879 = vmatpush2.msra.mxu0 0.0
        %4880 = vmatprep.subr.mxu0 0.0
        %4881 = vmatpush2.msra.mxu0 0.0
        %4882 = vmatprep.subr.mxu0 0.0
        %4883 = vmatpush2.msra.mxu0 0.0
        %4884 = vmatprep.subr.mxu0 0.0
        %4885 = vmatpush2.msra.mxu0 0.0
        %4886 = vmatprep.subr.mxu0 0.0
        %4887 = vmatpush2.msra.mxu0 0.0
        %4888 = vmatprep.subr.mxu0 0.0
        %4889 = vmatpush2.msra.mxu0 0.0
        %4890 = vmatprep.subr.mxu0 0.0
        %4891 = vmatpush2.msra.mxu0 0.0
        %4892 = vmatprep.subr.mxu0 0.0
        %4893 = vmatpush2.msra.mxu0 0.0
        %4894 = vmatprep.subr.mxu0 0.0
        %4895 = vmatpush2.msra.mxu0 0.0
        %4896 = vmatprep.subr.mxu0 0.0
        %4897 = vmatpush2.msra.mxu0 %v4722
        %4898 = vmatprep.subr.mxu0 0.0
        %4899 = vmatpush2.msra.mxu0 %v4721
        %4900 = vmatprep.mubr.f32.mxu0 %v4834
        %4901 = vmatmul.mubr.f32.gmra.mxu0 %v4832
        %v4902 = vpop.f32.mrf.mxu0
        %v4903 = vadd.f32 0.0, %v4902
        %v4904 = vpop.f32.mrf.mxu0
        %4905 = vdwg.mxu0
        %4907 = vrot.lane.b32.xlu0 %v4903, 16
        %v4908 = vpop.permute.xlu0 %4907
        %vm4910 = vcmask 261248
        %4911 = vst.msk [vmem:[%s298] sm:$0xff] %vm4910, %v4908
        %v4912 = vld [vmem:[#allocation3 + $0x20] sm:$0xff]
        %v4913 = vld [vmem:[#allocation3 + $0x28] sm:$0xff]
        %v4914 = vld [vmem:[#allocation3 + $0x30] sm:$0xff]
        %4917 = vrot.lane.b32.xlu0 %v4913, 112
        %v4918 = vpop.permute.xlu0 %4917
        %4919 = vrot.lane.b32.xlu0 %v4914, 112
        %v4920 = vpop.permute.xlu0 %4919
        %v4921 = vsel %vm855, %v4918, %v4920
        %v4924 = vadd.f32 %v4912, %v4921
        %v4925 = vadd.f32 %v4913, %v4920
        %4928 = vrot.lane.b32.xlu0 %v4924, 64
        %v4929 = vpop.permute.xlu0 %4928
        %4930 = vrot.lane.b32.xlu0 %v4925, 64
        %v4931 = vpop.permute.xlu0 %4930
        %vm4932 = vcmask 523264
        %v4933 = vsel %vm4932, %v4929, %v4931
        %v4935 = vsel %vm4737, %v4931, 0
        %4937 = vmatprep.subr.mxu0 0.0
        %4938 = vmatpush1.msra.mxu0 %v4720
        %4939 = vmatprep.subr.mxu0 0.0
        %4940 = vmatpush1.msra.mxu0 %v4719
        %4941 = vmatprep.subr.mxu0 0.0
        %4942 = vmatpush1.msra.mxu0 %v4718
        %4943 = vmatprep.subr.mxu0 0.0
        %4944 = vmatpush1.msra.mxu0 %v4717
        %4945 = vmatprep.subr.mxu0 0.0
        %4946 = vmatpush1.msra.mxu0 %v4716
        %4947 = vmatprep.subr.mxu0 0.0
        %4948 = vmatpush1.msra.mxu0 %v4715
        %4949 = vmatprep.subr.mxu0 0.0
        %4950 = vmatpush1.msra.mxu0 %v4714
        %4951 = vmatprep.subr.mxu0 0.0
        %4952 = vmatpush1.msra.mxu0 %v4713
        %4953 = vmatprep.subr.mxu0 0.0
        %4954 = vmatpush1.msra.mxu0 %v4712
        %4955 = vmatprep.subr.mxu0 0.0
        %4956 = vmatpush1.msra.mxu0 %v4711
        %4957 = vmatprep.subr.mxu0 0.0
        %4958 = vmatpush1.msra.mxu0 %v4710
        %4959 = vmatprep.subr.mxu0 0.0
        %4960 = vmatpush1.msra.mxu0 %v4709
        %4961 = vmatprep.subr.mxu0 0.0
        %4962 = vmatpush1.msra.mxu0 %v4708
        %4963 = vmatprep.subr.mxu0 0.0
        %4964 = vmatpush1.msra.mxu0 %v4707
        %4965 = vmatprep.subr.mxu0 0.0
        %4966 = vmatpush1.msra.mxu0 %v4706
        %4967 = vmatprep.subr.mxu0 0.0
        %4968 = vmatpush1.msra.mxu0 %v4705
        %4969 = vmatprep.subr.mxu0 0.0
        %4970 = vmatpush2.msra.mxu0 0.0
        %4971 = vmatprep.subr.mxu0 0.0
        %4972 = vmatpush2.msra.mxu0 0.0
        %4973 = vmatprep.subr.mxu0 0.0
        %4974 = vmatpush2.msra.mxu0 0.0
        %4975 = vmatprep.subr.mxu0 0.0
        %4976 = vmatpush2.msra.mxu0 0.0
        %4977 = vmatprep.subr.mxu0 0.0
        %4978 = vmatpush2.msra.mxu0 0.0
        %4979 = vmatprep.subr.mxu0 0.0
        %4980 = vmatpush2.msra.mxu0 0.0
        %4981 = vmatprep.subr.mxu0 0.0
        %4982 = vmatpush2.msra.mxu0 0.0
        %4983 = vmatprep.subr.mxu0 0.0
        %4984 = vmatpush2.msra.mxu0 0.0
        %4985 = vmatprep.subr.mxu0 0.0
        %4986 = vmatpush2.msra.mxu0 0.0
        %4987 = vmatprep.subr.mxu0 0.0
        %4988 = vmatpush2.msra.mxu0 0.0
        %4989 = vmatprep.subr.mxu0 0.0
        %4990 = vmatpush2.msra.mxu0 0.0
        %4991 = vmatprep.subr.mxu0 0.0
        %4992 = vmatpush2.msra.mxu0 0.0
        %4993 = vmatprep.subr.mxu0 0.0
        %4994 = vmatpush2.msra.mxu0 0.0
        %4995 = vmatprep.subr.mxu0 0.0
        %4996 = vmatpush2.msra.mxu0 0.0
        %4997 = vmatprep.subr.mxu0 0.0
        %4998 = vmatpush2.msra.mxu0 %v4722
        %4999 = vmatprep.subr.mxu0 0.0
        %5000 = vmatpush2.msra.mxu0 %v4721
        %5001 = vmatprep.mubr.f32.mxu0 %v4935
        %5002 = vmatmul.mubr.f32.gmra.mxu0 %v4933
        %v5003 = vpop.f32.mrf.mxu0
        %v5004 = vadd.f32 0.0, %v5003
        %v5005 = vpop.f32.mrf.mxu0
        %5006 = vdwg.mxu0
        %5008 = vrot.lane.b32.xlu0 %v5004, 32
        %v5009 = vpop.permute.xlu0 %5008
        %vm5011 = vcmask 392448
        %5012 = vst.msk [vmem:[%s298] sm:$0xff] %vm5011, %v5009
        %v5013 = vld [vmem:[#allocation3 + $0x30] sm:$0xff]
        %v5014 = vld [vmem:[#allocation3 + $0x38] sm:$0xff]
        %v5015 = vld [vmem:[#allocation3 + $0x38] sm:$0xff]
        %v5016 = vld [vmem:[#allocation3 + $0x40] sm:$0xff]
        %5019 = vrot.lane.b32.xlu0 %v5015, 112
        %v5020 = vpop.permute.xlu0 %5019
        %5021 = vrot.lane.b32.xlu0 %v5016, 112
        %v5022 = vpop.permute.xlu0 %5021
        %v5023 = vsel %vm855, %v5020, %v5022
        %v5026 = vadd.f32 %v5013, %v5023
        %v5027 = vadd.f32 %v5014, %v5022
        %5030 = vrot.lane.b32.xlu0 %v5026, 32
        %v5031 = vpop.permute.xlu0 %5030
        %5032 = vrot.lane.b32.xlu0 %v5027, 32
        %v5033 = vpop.permute.xlu0 %5032
        %vm5034 = vcmask 261120
        %v5035 = vsel %vm5034, %v5031, %v5033
        %v5037 = vsel %vm4737, %v5033, 0
        %5039 = vmatprep.subr.mxu0 0.0
        %5040 = vmatpush1.msra.mxu0 %v4720
        %5041 = vmatprep.subr.mxu0 0.0
        %5042 = vmatpush1.msra.mxu0 %v4719
        %5043 = vmatprep.subr.mxu0 0.0
        %5044 = vmatpush1.msra.mxu0 %v4718
        %5045 = vmatprep.subr.mxu0 0.0
        %5046 = vmatpush1.msra.mxu0 %v4717
        %5047 = vmatprep.subr.mxu0 0.0
        %5048 = vmatpush1.msra.mxu0 %v4716
        %5049 = vmatprep.subr.mxu0 0.0
        %5050 = vmatpush1.msra.mxu0 %v4715
        %5051 = vmatprep.subr.mxu0 0.0
        %5052 = vmatpush1.msra.mxu0 %v4714
        %5053 = vmatprep.subr.mxu0 0.0
        %5054 = vmatpush1.msra.mxu0 %v4713
        %5055 = vmatprep.subr.mxu0 0.0
        %5056 = vmatpush1.msra.mxu0 %v4712
        %5057 = vmatprep.subr.mxu0 0.0
        %5058 = vmatpush1.msra.mxu0 %v4711
        %5059 = vmatprep.subr.mxu0 0.0
        %5060 = vmatpush1.msra.mxu0 %v4710
        %5061 = vmatprep.subr.mxu0 0.0
        %5062 = vmatpush1.msra.mxu0 %v4709
        %5063 = vmatprep.subr.mxu0 0.0
        %5064 = vmatpush1.msra.mxu0 %v4708
        %5065 = vmatprep.subr.mxu0 0.0
        %5066 = vmatpush1.msra.mxu0 %v4707
        %5067 = vmatprep.subr.mxu0 0.0
        %5068 = vmatpush1.msra.mxu0 %v4706
        %5069 = vmatprep.subr.mxu0 0.0
        %5070 = vmatpush1.msra.mxu0 %v4705
        %5071 = vmatprep.subr.mxu0 0.0
        %5072 = vmatpush2.msra.mxu0 0.0
        %5073 = vmatprep.subr.mxu0 0.0
        %5074 = vmatpush2.msra.mxu0 0.0
        %5075 = vmatprep.subr.mxu0 0.0
        %5076 = vmatpush2.msra.mxu0 0.0
        %5077 = vmatprep.subr.mxu0 0.0
        %5078 = vmatpush2.msra.mxu0 0.0
        %5079 = vmatprep.subr.mxu0 0.0
        %5080 = vmatpush2.msra.mxu0 0.0
        %5081 = vmatprep.subr.mxu0 0.0
        %5082 = vmatpush2.msra.mxu0 0.0
        %5083 = vmatprep.subr.mxu0 0.0
        %5084 = vmatpush2.msra.mxu0 0.0
        %5085 = vmatprep.subr.mxu0 0.0
        %5086 = vmatpush2.msra.mxu0 0.0
        %5087 = vmatprep.subr.mxu0 0.0
        %5088 = vmatpush2.msra.mxu0 0.0
        %5089 = vmatprep.subr.mxu0 0.0
        %5090 = vmatpush2.msra.mxu0 0.0
        %5091 = vmatprep.subr.mxu0 0.0
        %5092 = vmatpush2.msra.mxu0 0.0
        %5093 = vmatprep.subr.mxu0 0.0
        %5094 = vmatpush2.msra.mxu0 0.0
        %5095 = vmatprep.subr.mxu0 0.0
        %5096 = vmatpush2.msra.mxu0 0.0
        %5097 = vmatprep.subr.mxu0 0.0
        %5098 = vmatpush2.msra.mxu0 0.0
        %5099 = vmatprep.subr.mxu0 0.0
        %5100 = vmatpush2.msra.mxu0 %v4722
        %5101 = vmatprep.subr.mxu0 0.0
        %5102 = vmatpush2.msra.mxu0 %v4721
        %5103 = vmatprep.mubr.f32.mxu0 %v5037
        %5104 = vmatmul.mubr.f32.gmra.mxu0 %v5035
        %v5105 = vpop.f32.mrf.mxu0
        %v5106 = vadd.f32 0.0, %v5105
        %v5107 = vpop.f32.mrf.mxu0
        %5108 = vdwg.mxu0
        %5110 = vrot.lane.b32.xlu0 %v5106, 48
        %v5111 = vpop.permute.xlu0 %5110
        %vm5113 = vcmask 523648
        %5114 = vst.msk [vmem:[%s298] sm:$0xff] %vm5113, %v5111
        %s5115 = sand.u32 %s203, 1
        %s5116 = scalar_lea.sflag [#allocation5], %s5115
        %s5117 = sand.u32 %s203, 1
        %s5118 = smul.addr %s5117, 8
        %s5119 = scalar_lea.vmem [#allocation4], %s5118
        // Predicated region
        $region53: #{tpu_custom_call.1} parent=51 // pred_check
          %p5120 = pneg %p213
        $region54: #{tpu_custom_call.1} parent=51 // pred_check_branch
          %5122 = sbr.rel (%p5120) target = $region56
        $region55: #{tpu_custom_call.1} parent=51 // pred_region
          %s5124 = ssub.s32 128, 128
          %5125 = vsyncadd %s5116, %s5124
          %s5126 = smul.addr %s22, 128
          %s5127 = scalar_lea.hbm %s8, %s5126
          %s5129 = sshll.u32 %s5119, 4
          %s5130 = int_to_ptr.vmem [resolvable:$true] %s5129
          %5132 = dma.vmem_to_hbm [thread:$0]  %s5130, 128, %s5127, %s5116
        $region56: #{tpu_custom_call.1} parent=51 // pred_fallthru
          _
      $region52: #{tpu_custom_call.1} parent=5 // pred_fallthru
        _
      %p5133 = scmp.le.s32.totalorder 2, %s17
      // Predicated region
      $region57: #{tpu_custom_call.1} parent=5 // pred_check
        %p5134 = pneg %p5133
      $region58: #{tpu_custom_call.1} parent=5 // pred_check_branch
        %5136 = sbr.rel (%p5134) target = $region60
      $region59: #{tpu_custom_call.1} parent=5 // pred_region
        %s5137 = ssub.s32 %s17, 2
        // Predicated region
        $region61: #{tpu_custom_call.1} parent=59 // pred_check
          %p5138 = pneg %p219
        $region62: #{tpu_custom_call.1} parent=59 // pred_check_branch
          %5140 = sbr.rel (%p5138) target = $region64
        $region63: #{tpu_custom_call.1} parent=59 // pred_region
          %s5141 = sand.u32 %s204, 1
          %s5142 = scalar_lea.sflag [#allocation5], %s5141
          %s5143 = sand.u32 %s204, 1
          %s5144 = smul.addr %s5143, 8
          %s5145 = scalar_lea.vmem [#allocation4], %s5144
          %5146 = dma.done %s5142, 128
        $region64: #{tpu_custom_call.1} parent=59 // pred_fallthru
          _
      $region60: #{tpu_custom_call.1} parent=5 // pred_fallthru
        _
    $region6: #{tpu_custom_call.1} parent=1 // loop_footer
      %s21 = sadd.s32 1, %s17
    $region7: #{tpu_custom_call.1} parent=1 // loop_footer_branch
      %16 = sbr.rel target = $region3
    $region8: #{tpu_custom_call.1} parent=1 // loop_exit
      _
    %5147 = vsyncpa [#allocation5], 1
    %s5148 = scalar_lea.sflag [#allocation5], 1
    %5149 = vsyncpa %s5148, 1

</llo_original>
